<compile_context>
chip_gen: v6e
topology: v6e:2x2x1
jax: 0.10.0
libtpu: 0.0.40
codegen_flags: <defaults>
</compile_context>

<pallas_src>
import functools

import jax
import jax.numpy as jnp
import numpy as np
from jax import lax
from jax.experimental import pallas as pl
from jax.experimental.pallas import tpu as pltpu


# ---- module constants (from the PyTorch spec) ------------------------------
# TODO(synk): the original module's weight (21, 6, 5, 5, 3) is incompatible
# with its 9-channel input (and uses the invalid kwarg `out_padding`); we use
# in_channels=9 so conv_transpose3d is well-defined and interpret out_padding
# as output_padding=1.
KD, KH, KW = 5, 5, 3
CIN, COUT = 9, 6
STRIDE, PADDING, OUTPUT_PADDING = 2, 4, 1
KTAP = CIN * KH * KW                      # 135: contraction size per D-tap
KTAP_PAD = ((KTAP + 15) // 16) * 16       # 144: bf16 sublane-tile aligned K
COUT_PAD = 8                              # f32 sublane-tile aligned output rows


# ---- Pallas kernel: 5 tap-matmuls + fused hard-swish epilogue ---------------
def _convt_hswish_kernel(slab_ref, w_ref, o_ref, *, kd, od_step):
    # slab_ref: (1, dp, KTAP_PAD, S)          bf16  -- whole slab, VMEM-resident
    # w_ref   : (kd, COUT_PAD, KTAP_PAD)      bf16  -- per-D-tap weights
    # o_ref   : (1, od_step, COUT_PAD, S)     f32   -- lane-dense output slice
    d0 = pl.program_id(1) * od_step
    for di in range(od_step):                      # static unroll (tiny)
        acc = jnp.dot(w_ref[0], slab_ref[0, d0 + di],
                      preferred_element_type=jnp.float32)
        for a in range(1, kd):                     # static unroll over D taps
            acc = acc + jnp.dot(w_ref[a], slab_ref[0, d0 + di + a],
                                preferred_element_type=jnp.float32)
        # hard-swish-style epilogue in f32 on the (8, S) accumulator
        v4 = jnp.clip(acc + 3.0, 0.0, 6.0)
        o_ref[0, di] = acc * v4 * (1.0 / 6.0)      # multiply, not divide


# ---- weight transform (hoisted: call once per weight) -----------------------
def prepare_weight(w):
    """torch conv_transpose3d weight (CIN, COUT, KD, KH, KW) ->
    per-D-tap matmul LHS (KD, COUT_PAD, KTAP_PAD) bf16, cin-major K order."""
    assert w.shape == (CIN, COUT, KD, KH, KW)
    wf = jnp.flip(w, axis=(2, 3, 4))              # flipped taps (forward conv)
    wt = jnp.transpose(wf, (2, 1, 0, 3, 4))       # (KD, COUT, CIN, KH, KW)
    wt = wt.reshape(KD, COUT, KTAP)               # K index = cin*15 + kh*3 + kw
    wt = jnp.pad(wt, ((0, 0), (0, COUT_PAD - COUT), (0, KTAP_PAD - KTAP)))
    return wt.astype(jnp.bfloat16)


# ---- forward pass ------------------------------------------------------------
@jax.jit
def model_forward(x, wmat):
    n, cin, d, h, wd = x.shape
    assert cin == CIN

    def out_size(i, k):
        return (i - 1) * STRIDE - 2 * PADDING + (k - 1) + OUTPUT_PADDING + 1

    od, oh, ow = out_size(d, KD), out_size(h, KH), out_size(wd, KW)
    dp = od + KD - 1
    S = ((oh * ow + 127) // 128) * 128            # lane-dense spatial width

    # ---- small XLA glue, all in bf16: zero-upsample/crop + H/W tap unroll ---
    x_t = jnp.transpose(x, (0, 2, 1, 3, 4)).astype(jnp.bfloat16)   # (n,d,cin,h,w)

    def cfg(k):
        lo = (k - 1) - PADDING
        return (lo, lo + OUTPUT_PADDING, STRIDE - 1)   # (low, high, interior)

    yp = lax.pad(x_t, jnp.array(0, jnp.bfloat16),
                 ((0, 0, 0), cfg(KD), (0, 0, 0), cfg(KH), cfg(KW)))
    assert yp.shape == (n, dp, CIN, oh + KH - 1, ow + KW - 1)

    taps = [yp[:, :, :, b:b + oh, c:c + ow]
            for b in range(KH) for c in range(KW)]
    slab = jnp.stack(taps, axis=3)                 # (n, dp, cin, KH*KW, oh, ow)
    slab = slab.reshape(n, dp, KTAP, oh * ow)      # K order = (cin, kh, kw)
    slab = jnp.pad(slab, ((0, 0), (0, 0),
                          (0, KTAP_PAD - KTAP), (0, S - oh * ow)))

    G = 2 if od % 2 == 0 else 1                    # coarse split: feeds both v7x TCs
    od_step = od // G
    kernel = functools.partial(_convt_hswish_kernel, kd=KD, od_step=od_step)

    out4 = pl.pallas_call(
        kernel,
        out_shape=jax.ShapeDtypeStruct((n, od, COUT_PAD, S), jnp.float32),
        grid=(n, G),
        in_specs=[
            # slab: constant block index along the od axis -> stays resident
            pl.BlockSpec((1, dp, KTAP_PAD, S), lambda i, j: (i, 0, 0, 0)),
            pl.BlockSpec((KD, COUT_PAD, KTAP_PAD), lambda i, j: (0, 0, 0)),
        ],
        out_specs=pl.BlockSpec((1, od_step, COUT_PAD, S),
                               lambda i, j: (i, j, 0, 0)),
        compiler_params=pltpu.CompilerParams(
            dimension_semantics=("parallel", "parallel")),
    )(slab, wmat)

    # layout plumbing back to NCDHW (drops zero lane/row padding); channels
    # are already a leading-ish dim so this is tiny.
    out = out4[:, :, :COUT, :oh * ow].reshape(n, od, COUT, oh, ow)
    return jnp.transpose(out, (0, 2, 1, 3, 4))


# ---- pure-JAX/XLA reference -------------------------------------------------
def reference(x, w):
    w_fwd = jnp.transpose(jnp.flip(w, (2, 3, 4)), (1, 0, 2, 3, 4))  # OIDHW
    pads = [((k - 1) - PADDING, (k - 1) - PADDING + OUTPUT_PADDING)
            for k in (KD, KH, KW)]
    v1 = lax.conv_general_dilated(
        x, w_fwd, window_strides=(1, 1, 1), padding=pads,
        lhs_dilation=(STRIDE,) * 3, rhs_dilation=(1, 1, 1),
        dimension_numbers=("NCDHW", "OIDHW", "NCDHW"),
        precision=lax.Precision.HIGHEST)
    v4 = jnp.clip(v1 + 3.0, 0.0, 6.0)
    return v1 * v4 / 6.0


if __name__ == "__main__":
    key = jax.random.PRNGKey(0)
    kx, kw = jax.random.split(key)

    x = jax.random.normal(kx, (1, 9, 8, 8, 8), dtype=jnp.float32)     # NCDHW
    w = jax.random.normal(kw, (9, 6, 5, 5, 3), dtype=jnp.float32)     # (Cin, Cout, kD, kH, kW)

    wmat = prepare_weight(w)                     # hoisted weight transform
    out = jax.block_until_ready(model_forward(x, wmat))
    ref = jax.block_until_ready(reference(x, w))

    assert out.shape == ref.shape == (1, 6, 12, 12, 10), out.shape
    out_np, ref_np = np.asarray(out), np.asarray(ref)
    diff = np.max(np.abs(out_np - ref_np))
    # Tolerance sized for the deliberate bf16 MXU operands (f32 accumulation)
    # over an effective K=675 reduction; reference uses f32 Precision.HIGHEST.
    if not np.allclose(out_np, ref_np, rtol=5e-2, atol=1e-1):
        raise AssertionError(f"mismatch vs XLA reference, max abs diff = {diff}")
    print("KERNEL_OK")
</pallas_src>

<mosaic_0001>
module attributes {stable_mosaic.version = 11 : i64} {
  func.func @_convt_hswish_kernel(%arg0: i32, %arg1: i32, %arg2: memref<1x16x144x128xbf16, #tpu.memory_space<vmem>>, %arg3: memref<5x8x144xbf16, #tpu.memory_space<vmem>>, %arg4: memref<1x6x8x128xf32, #tpu.memory_space<vmem>>) attributes {dimension_semantics = [#tpu.dimension_semantics<parallel>, #tpu.dimension_semantics<parallel>], iteration_bounds = array<i64: 1, 2>, scalar_prefetch = 0 : i64, scratch_operands = 0 : i64, tpu.core_type = #tpu.core_type<tc>, window_params = [{transform_indices = @transform_0, window_bounds = array<i64: 1, 16, 144, 128>}, {pipeline_mode = #tpu.pipeline_mode<synchronous>, transform_indices = @transform_1, window_bounds = array<i64: 5, 8, 144>}, {transform_indices = @transform_2, window_bounds = array<i64: 1, 6, 8, 128>}]} {
    %c6_i32 = arith.constant 6 : i32
    %0 = arith.muli %arg1, %c6_i32 : i32
    %c0 = arith.constant 0 : index
    %c0_0 = arith.constant 0 : index
    %c0_1 = arith.constant 0 : index
    %1 = vector.load %arg3[%c0, %c0_0, %c0_1] : memref<5x8x144xbf16, #tpu.memory_space<vmem>>, vector<1x8x144xbf16>
    %2 = vector.shape_cast %1 : vector<1x8x144xbf16> to vector<8x144xbf16>
    %c0_i32 = arith.constant 0 : i32
    %3 = arith.addi %0, %c0_i32 : i32
    %c0_2 = arith.constant 0 : index
    %4 = arith.index_cast %3 : i32 to index
    %c0_3 = arith.constant 0 : index
    %c0_4 = arith.constant 0 : index
    %5 = vector.load %arg2[%c0_2, %4, %c0_3, %c0_4] : memref<1x16x144x128xbf16, #tpu.memory_space<vmem>>, vector<1x1x144x128xbf16>
    %6 = vector.shape_cast %5 : vector<1x1x144x128xbf16> to vector<144x128xbf16>
    %cst = arith.constant dense<0.000000e+00> : vector<8x128xf32>
    %7 = tpu.matmul %2, %6, %cst {dimension_numbers = #tpu.dot_dimension_numbers<[1], [0], [0], [1], [0, 0, 1, 1], [], []>} : vector<8x144xbf16>, vector<144x128xbf16>, vector<8x128xf32> -> vector<8x128xf32>
    %c1 = arith.constant 1 : index
    %c0_5 = arith.constant 0 : index
    %c0_6 = arith.constant 0 : index
    %8 = vector.load %arg3[%c1, %c0_5, %c0_6] : memref<5x8x144xbf16, #tpu.memory_space<vmem>>, vector<1x8x144xbf16>
    %9 = vector.shape_cast %8 : vector<1x8x144xbf16> to vector<8x144xbf16>
    %c0_i32_7 = arith.constant 0 : i32
    %10 = arith.addi %0, %c0_i32_7 : i32
    %c1_i32 = arith.constant 1 : i32
    %11 = arith.addi %10, %c1_i32 : i32
    %c0_8 = arith.constant 0 : index
    %12 = arith.index_cast %11 : i32 to index
    %c0_9 = arith.constant 0 : index
    %c0_10 = arith.constant 0 : index
    %13 = vector.load %arg2[%c0_8, %12, %c0_9, %c0_10] : memref<1x16x144x128xbf16, #tpu.memory_space<vmem>>, vector<1x1x144x128xbf16>
    %14 = vector.shape_cast %13 : vector<1x1x144x128xbf16> to vector<144x128xbf16>
    %cst_11 = arith.constant dense<0.000000e+00> : vector<8x128xf32>
    %15 = tpu.matmul %9, %14, %cst_11 {dimension_numbers = #tpu.dot_dimension_numbers<[1], [0], [0], [1], [0, 0, 1, 1], [], []>} : vector<8x144xbf16>, vector<144x128xbf16>, vector<8x128xf32> -> vector<8x128xf32>
    %16 = arith.addf %7, %15 : vector<8x128xf32>
    %c2 = arith.constant 2 : index
    %c0_12 = arith.constant 0 : index
    %c0_13 = arith.constant 0 : index
    %17 = vector.load %arg3[%c2, %c0_12, %c0_13] : memref<5x8x144xbf16, #tpu.memory_space<vmem>>, vector<1x8x144xbf16>
    %18 = vector.shape_cast %17 : vector<1x8x144xbf16> to vector<8x144xbf16>
    %c0_i32_14 = arith.constant 0 : i32
    %19 = arith.addi %0, %c0_i32_14 : i32
    %c2_i32 = arith.constant 2 : i32
    %20 = arith.addi %19, %c2_i32 : i32
    %c0_15 = arith.constant 0 : index
    %21 = arith.index_cast %20 : i32 to index
    %c0_16 = arith.constant 0 : index
    %c0_17 = arith.constant 0 : index
    %22 = vector.load %arg2[%c0_15, %21, %c0_16, %c0_17] : memref<1x16x144x128xbf16, #tpu.memory_space<vmem>>, vector<1x1x144x128xbf16>
    %23 = vector.shape_cast %22 : vector<1x1x144x128xbf16> to vector<144x128xbf16>
    %cst_18 = arith.constant dense<0.000000e+00> : vector<8x128xf32>
    %24 = tpu.matmul %18, %23, %cst_18 {dimension_numbers = #tpu.dot_dimension_numbers<[1], [0], [0], [1], [0, 0, 1, 1], [], []>} : vector<8x144xbf16>, vector<144x128xbf16>, vector<8x128xf32> -> vector<8x128xf32>
    %25 = arith.addf %16, %24 : vector<8x128xf32>
    %c3 = arith.constant 3 : index
    %c0_19 = arith.constant 0 : index
    %c0_20 = arith.constant 0 : index
    %26 = vector.load %arg3[%c3, %c0_19, %c0_20] : memref<5x8x144xbf16, #tpu.memory_space<vmem>>, vector<1x8x144xbf16>
    %27 = vector.shape_cast %26 : vector<1x8x144xbf16> to vector<8x144xbf16>
    %c0_i32_21 = arith.constant 0 : i32
    %28 = arith.addi %0, %c0_i32_21 : i32
    %c3_i32 = arith.constant 3 : i32
    %29 = arith.addi %28, %c3_i32 : i32
    %c0_22 = arith.constant 0 : index
    %30 = arith.index_cast %29 : i32 to index
    %c0_23 = arith.constant 0 : index
    %c0_24 = arith.constant 0 : index
    %31 = vector.load %arg2[%c0_22, %30, %c0_23, %c0_24] : memref<1x16x144x128xbf16, #tpu.memory_space<vmem>>, vector<1x1x144x128xbf16>
    %32 = vector.shape_cast %31 : vector<1x1x144x128xbf16> to vector<144x128xbf16>
    %cst_25 = arith.constant dense<0.000000e+00> : vector<8x128xf32>
    %33 = tpu.matmul %27, %32, %cst_25 {dimension_numbers = #tpu.dot_dimension_numbers<[1], [0], [0], [1], [0, 0, 1, 1], [], []>} : vector<8x144xbf16>, vector<144x128xbf16>, vector<8x128xf32> -> vector<8x128xf32>
    %34 = arith.addf %25, %33 : vector<8x128xf32>
    %c4 = arith.constant 4 : index
    %c0_26 = arith.constant 0 : index
    %c0_27 = arith.constant 0 : index
    %35 = vector.load %arg3[%c4, %c0_26, %c0_27] : memref<5x8x144xbf16, #tpu.memory_space<vmem>>, vector<1x8x144xbf16>
    %36 = vector.shape_cast %35 : vector<1x8x144xbf16> to vector<8x144xbf16>
    %c0_i32_28 = arith.constant 0 : i32
    %37 = arith.addi %0, %c0_i32_28 : i32
    %c4_i32 = arith.constant 4 : i32
    %38 = arith.addi %37, %c4_i32 : i32
    %c0_29 = arith.constant 0 : index
    %39 = arith.index_cast %38 : i32 to index
    %c0_30 = arith.constant 0 : index
    %c0_31 = arith.constant 0 : index
    %40 = vector.load %arg2[%c0_29, %39, %c0_30, %c0_31] : memref<1x16x144x128xbf16, #tpu.memory_space<vmem>>, vector<1x1x144x128xbf16>
    %41 = vector.shape_cast %40 : vector<1x1x144x128xbf16> to vector<144x128xbf16>
    %cst_32 = arith.constant dense<0.000000e+00> : vector<8x128xf32>
    %42 = tpu.matmul %36, %41, %cst_32 {dimension_numbers = #tpu.dot_dimension_numbers<[1], [0], [0], [1], [0, 0, 1, 1], [], []>} : vector<8x144xbf16>, vector<144x128xbf16>, vector<8x128xf32> -> vector<8x128xf32>
    %43 = arith.addf %34, %42 : vector<8x128xf32>
    %cst_33 = arith.constant 3.000000e+00 : f32
    %44 = vector.broadcast %cst_33 : f32 to vector<8x128xf32>
    %45 = arith.addf %43, %44 : vector<8x128xf32>
    %cst_34 = arith.constant 0.000000e+00 : f32
    %cst_35 = arith.constant 6.000000e+00 : f32
    %46 = vector.broadcast %cst_34 : f32 to vector<8x128xf32>
    %47 = arith.maximumf %46, %45 : vector<8x128xf32>
    %48 = vector.broadcast %cst_35 : f32 to vector<8x128xf32>
    %49 = arith.minimumf %48, %47 : vector<8x128xf32>
    %50 = arith.mulf %43, %49 : vector<8x128xf32>
    %cst_36 = arith.constant 0.166666672 : f32
    %51 = vector.broadcast %cst_36 : f32 to vector<8x128xf32>
    %52 = arith.mulf %50, %51 : vector<8x128xf32>
    %c0_37 = arith.constant 0 : index
    %c0_38 = arith.constant 0 : index
    %c0_39 = arith.constant 0 : index
    %c0_40 = arith.constant 0 : index
    %53 = vector.load %arg4[%c0_37, %c0_38, %c0_39, %c0_40] : memref<1x6x8x128xf32, #tpu.memory_space<vmem>>, vector<1x1x8x128xf32>
    %54 = vector.shape_cast %53 : vector<1x1x8x128xf32> to vector<8x128xf32>
    %55 = vector.shape_cast %52 : vector<8x128xf32> to vector<1x1x8x128xf32>
    tpu.vector_store %arg4[%c0_37, %c0_38, %c0_39, %c0_40], %55 {strides = array<i32>} : memref<1x6x8x128xf32, #tpu.memory_space<vmem>>, vector<1x1x8x128xf32>,
    %c0_41 = arith.constant 0 : index
    %c0_42 = arith.constant 0 : index
    %c0_43 = arith.constant 0 : index
    %56 = vector.load %arg3[%c0_41, %c0_42, %c0_43] : memref<5x8x144xbf16, #tpu.memory_space<vmem>>, vector<1x8x144xbf16>
    %57 = vector.shape_cast %56 : vector<1x8x144xbf16> to vector<8x144xbf16>
    %c1_i32_44 = arith.constant 1 : i32
    %58 = arith.addi %0, %c1_i32_44 : i32
    %c0_45 = arith.constant 0 : index
    %59 = arith.index_cast %58 : i32 to index
    %c0_46 = arith.constant 0 : index
    %c0_47 = arith.constant 0 : index
    %60 = vector.load %arg2[%c0_45, %59, %c0_46, %c0_47] : memref<1x16x144x128xbf16, #tpu.memory_space<vmem>>, vector<1x1x144x128xbf16>
    %61 = vector.shape_cast %60 : vector<1x1x144x128xbf16> to vector<144x128xbf16>
    %cst_48 = arith.constant dense<0.000000e+00> : vector<8x128xf32>
    %62 = tpu.matmul %57, %61, %cst_48 {dimension_numbers = #tpu.dot_dimension_numbers<[1], [0], [0], [1], [0, 0, 1, 1], [], []>} : vector<8x144xbf16>, vector<144x128xbf16>, vector<8x128xf32> -> vector<8x128xf32>
    %c1_49 = arith.constant 1 : index
    %c0_50 = arith.constant 0 : index
    %c0_51 = arith.constant 0 : index
    %63 = vector.load %arg3[%c1_49, %c0_50, %c0_51] : memref<5x8x144xbf16, #tpu.memory_space<vmem>>, vector<1x8x144xbf16>
    %64 = vector.shape_cast %63 : vector<1x8x144xbf16> to vector<8x144xbf16>
    %c1_i32_52 = arith.constant 1 : i32
    %65 = arith.addi %0, %c1_i32_52 : i32
    %c1_i32_53 = arith.constant 1 : i32
    %66 = arith.addi %65, %c1_i32_53 : i32
    %c0_54 = arith.constant 0 : index
    %67 = arith.index_cast %66 : i32 to index
    %c0_55 = arith.constant 0 : index
    %c0_56 = arith.constant 0 : index
    %68 = vector.load %arg2[%c0_54, %67, %c0_55, %c0_56] : memref<1x16x144x128xbf16, #tpu.memory_space<vmem>>, vector<1x1x144x128xbf16>
    %69 = vector.shape_cast %68 : vector<1x1x144x128xbf16> to vector<144x128xbf16>
    %cst_57 = arith.constant dense<0.000000e+00> : vector<8x128xf32>
    %70 = tpu.matmul %64, %69, %cst_57 {dimension_numbers = #tpu.dot_dimension_numbers<[1], [0], [0], [1], [0, 0, 1, 1], [], []>} : vector<8x144xbf16>, vector<144x128xbf16>, vector<8x128xf32> -> vector<8x128xf32>
    %71 = arith.addf %62, %70 : vector<8x128xf32>
    %c2_58 = arith.constant 2 : index
    %c0_59 = arith.constant 0 : index
    %c0_60 = arith.constant 0 : index
    %72 = vector.load %arg3[%c2_58, %c0_59, %c0_60] : memref<5x8x144xbf16, #tpu.memory_space<vmem>>, vector<1x8x144xbf16>
    %73 = vector.shape_cast %72 : vector<1x8x144xbf16> to vector<8x144xbf16>
    %c1_i32_61 = arith.constant 1 : i32
    %74 = arith.addi %0, %c1_i32_61 : i32
    %c2_i32_62 = arith.constant 2 : i32
    %75 = arith.addi %74, %c2_i32_62 : i32
    %c0_63 = arith.constant 0 : index
    %76 = arith.index_cast %75 : i32 to index
    %c0_64 = arith.constant 0 : index
    %c0_65 = arith.constant 0 : index
    %77 = vector.load %arg2[%c0_63, %76, %c0_64, %c0_65] : memref<1x16x144x128xbf16, #tpu.memory_space<vmem>>, vector<1x1x144x128xbf16>
    %78 = vector.shape_cast %77 : vector<1x1x144x128xbf16> to vector<144x128xbf16>
    %cst_66 = arith.constant dense<0.000000e+00> : vector<8x128xf32>
    %79 = tpu.matmul %73, %78, %cst_66 {dimension_numbers = #tpu.dot_dimension_numbers<[1], [0], [0], [1], [0, 0, 1, 1], [], []>} : vector<8x144xbf16>, vector<144x128xbf16>, vector<8x128xf32> -> vector<8x128xf32>
    %80 = arith.addf %71, %79 : vector<8x128xf32>
    %c3_67 = arith.constant 3 : index
    %c0_68 = arith.constant 0 : index
    %c0_69 = arith.constant 0 : index
    %81 = vector.load %arg3[%c3_67, %c0_68, %c0_69] : memref<5x8x144xbf16, #tpu.memory_space<vmem>>, vector<1x8x144xbf16>
    %82 = vector.shape_cast %81 : vector<1x8x144xbf16> to vector<8x144xbf16>
    %c1_i32_70 = arith.constant 1 : i32
    %83 = arith.addi %0, %c1_i32_70 : i32
    %c3_i32_71 = arith.constant 3 : i32
    %84 = arith.addi %83, %c3_i32_71 : i32
    %c0_72 = arith.constant 0 : index
    %85 = arith.index_cast %84 : i32 to index
    %c0_73 = arith.constant 0 : index
    %c0_74 = arith.constant 0 : index
    %86 = vector.load %arg2[%c0_72, %85, %c0_73, %c0_74] : memref<1x16x144x128xbf16, #tpu.memory_space<vmem>>, vector<1x1x144x128xbf16>
    %87 = vector.shape_cast %86 : vector<1x1x144x128xbf16> to vector<144x128xbf16>
    %cst_75 = arith.constant dense<0.000000e+00> : vector<8x128xf32>
    %88 = tpu.matmul %82, %87, %cst_75 {dimension_numbers = #tpu.dot_dimension_numbers<[1], [0], [0], [1], [0, 0, 1, 1], [], []>} : vector<8x144xbf16>, vector<144x128xbf16>, vector<8x128xf32> -> vector<8x128xf32>
    %89 = arith.addf %80, %88 : vector<8x128xf32>
    %c4_76 = arith.constant 4 : index
    %c0_77 = arith.constant 0 : index
    %c0_78 = arith.constant 0 : index
    %90 = vector.load %arg3[%c4_76, %c0_77, %c0_78] : memref<5x8x144xbf16, #tpu.memory_space<vmem>>, vector<1x8x144xbf16>
    %91 = vector.shape_cast %90 : vector<1x8x144xbf16> to vector<8x144xbf16>
    %c1_i32_79 = arith.constant 1 : i32
    %92 = arith.addi %0, %c1_i32_79 : i32
    %c4_i32_80 = arith.constant 4 : i32
    %93 = arith.addi %92, %c4_i32_80 : i32
    %c0_81 = arith.constant 0 : index
    %94 = arith.index_cast %93 : i32 to index
    %c0_82 = arith.constant 0 : index
    %c0_83 = arith.constant 0 : index
    %95 = vector.load %arg2[%c0_81, %94, %c0_82, %c0_83] : memref<1x16x144x128xbf16, #tpu.memory_space<vmem>>, vector<1x1x144x128xbf16>
    %96 = vector.shape_cast %95 : vector<1x1x144x128xbf16> to vector<144x128xbf16>
    %cst_84 = arith.constant dense<0.000000e+00> : vector<8x128xf32>
    %97 = tpu.matmul %91, %96, %cst_84 {dimension_numbers = #tpu.dot_dimension_numbers<[1], [0], [0], [1], [0, 0, 1, 1], [], []>} : vector<8x144xbf16>, vector<144x128xbf16>, vector<8x128xf32> -> vector<8x128xf32>
    %98 = arith.addf %89, %97 : vector<8x128xf32>
    %cst_85 = arith.constant 3.000000e+00 : f32
    %99 = vector.broadcast %cst_85 : f32 to vector<8x128xf32>
    %100 = arith.addf %98, %99 : vector<8x128xf32>
    %cst_86 = arith.constant 0.000000e+00 : f32
    %cst_87 = arith.constant 6.000000e+00 : f32
    %101 = vector.broadcast %cst_86 : f32 to vector<8x128xf32>
    %102 = arith.maximumf %101, %100 : vector<8x128xf32>
    %103 = vector.broadcast %cst_87 : f32 to vector<8x128xf32>
    %104 = arith.minimumf %103, %102 : vector<8x128xf32>
    %105 = arith.mulf %98, %104 : vector<8x128xf32>
    %cst_88 = arith.constant 0.166666672 : f32
    %106 = vector.broadcast %cst_88 : f32 to vector<8x128xf32>
    %107 = arith.mulf %105, %106 : vector<8x128xf32>
    %c0_89 = arith.constant 0 : index
    %c1_90 = arith.constant 1 : index
    %c0_91 = arith.constant 0 : index
    %c0_92 = arith.constant 0 : index
    %108 = vector.load %arg4[%c0_89, %c1_90, %c0_91, %c0_92] : memref<1x6x8x128xf32, #tpu.memory_space<vmem>>, vector<1x1x8x128xf32>
    %109 = vector.shape_cast %108 : vector<1x1x8x128xf32> to vector<8x128xf32>
    %110 = vector.shape_cast %107 : vector<8x128xf32> to vector<1x1x8x128xf32>
    tpu.vector_store %arg4[%c0_89, %c1_90, %c0_91, %c0_92], %110 {strides = array<i32>} : memref<1x6x8x128xf32, #tpu.memory_space<vmem>>, vector<1x1x8x128xf32>,
    %c0_93 = arith.constant 0 : index
    %c0_94 = arith.constant 0 : index
    %c0_95 = arith.constant 0 : index
    %111 = vector.load %arg3[%c0_93, %c0_94, %c0_95] : memref<5x8x144xbf16, #tpu.memory_space<vmem>>, vector<1x8x144xbf16>
    %112 = vector.shape_cast %111 : vector<1x8x144xbf16> to vector<8x144xbf16>
    %c2_i32_96 = arith.constant 2 : i32
    %113 = arith.addi %0, %c2_i32_96 : i32
    %c0_97 = arith.constant 0 : index
    %114 = arith.index_cast %113 : i32 to index
    %c0_98 = arith.constant 0 : index
    %c0_99 = arith.constant 0 : index
    %115 = vector.load %arg2[%c0_97, %114, %c0_98, %c0_99] : memref<1x16x144x128xbf16, #tpu.memory_space<vmem>>, vector<1x1x144x128xbf16>
    %116 = vector.shape_cast %115 : vector<1x1x144x128xbf16> to vector<144x128xbf16>
    %cst_100 = arith.constant dense<0.000000e+00> : vector<8x128xf32>
    %117 = tpu.matmul %112, %116, %cst_100 {dimension_numbers = #tpu.dot_dimension_numbers<[1], [0], [0], [1], [0, 0, 1, 1], [], []>} : vector<8x144xbf16>, vector<144x128xbf16>, vector<8x128xf32> -> vector<8x128xf32>
    %c1_101 = arith.constant 1 : index
    %c0_102 = arith.constant 0 : index
    %c0_103 = arith.constant 0 : index
    %118 = vector.load %arg3[%c1_101, %c0_102, %c0_103] : memref<5x8x144xbf16, #tpu.memory_space<vmem>>, vector<1x8x144xbf16>
    %119 = vector.shape_cast %118 : vector<1x8x144xbf16> to vector<8x144xbf16>
    %c2_i32_104 = arith.constant 2 : i32
    %120 = arith.addi %0, %c2_i32_104 : i32
    %c1_i32_105 = arith.constant 1 : i32
    %121 = arith.addi %120, %c1_i32_105 : i32
    %c0_106 = arith.constant 0 : index
    %122 = arith.index_cast %121 : i32 to index
    %c0_107 = arith.constant 0 : index
    %c0_108 = arith.constant 0 : index
    %123 = vector.load %arg2[%c0_106, %122, %c0_107, %c0_108] : memref<1x16x144x128xbf16, #tpu.memory_space<vmem>>, vector<1x1x144x128xbf16>
    %124 = vector.shape_cast %123 : vector<1x1x144x128xbf16> to vector<144x128xbf16>
    %cst_109 = arith.constant dense<0.000000e+00> : vector<8x128xf32>
    %125 = tpu.matmul %119, %124, %cst_109 {dimension_numbers = #tpu.dot_dimension_numbers<[1], [0], [0], [1], [0, 0, 1, 1], [], []>} : vector<8x144xbf16>, vector<144x128xbf16>, vector<8x128xf32> -> vector<8x128xf32>
    %126 = arith.addf %117, %125 : vector<8x128xf32>
    %c2_110 = arith.constant 2 : index
    %c0_111 = arith.constant 0 : index
    %c0_112 = arith.constant 0 : index
    %127 = vector.load %arg3[%c2_110, %c0_111, %c0_112] : memref<5x8x144xbf16, #tpu.memory_space<vmem>>, vector<1x8x144xbf16>
    %128 = vector.shape_cast %127 : vector<1x8x144xbf16> to vector<8x144xbf16>
    %c2_i32_113 = arith.constant 2 : i32
    %129 = arith.addi %0, %c2_i32_113 : i32
    %c2_i32_114 = arith.constant 2 : i32
    %130 = arith.addi %129, %c2_i32_114 : i32
    %c0_115 = arith.constant 0 : index
    %131 = arith.index_cast %130 : i32 to index
    %c0_116 = arith.constant 0 : index
    %c0_117 = arith.constant 0 : index
    %132 = vector.load %arg2[%c0_115, %131, %c0_116, %c0_117] : memref<1x16x144x128xbf16, #tpu.memory_space<vmem>>, vector<1x1x144x128xbf16>
    %133 = vector.shape_cast %132 : vector<1x1x144x128xbf16> to vector<144x128xbf16>
    %cst_118 = arith.constant dense<0.000000e+00> : vector<8x128xf32>
    %134 = tpu.matmul %128, %133, %cst_118 {dimension_numbers = #tpu.dot_dimension_numbers<[1], [0], [0], [1], [0, 0, 1, 1], [], []>} : vector<8x144xbf16>, vector<144x128xbf16>, vector<8x128xf32> -> vector<8x128xf32>
    %135 = arith.addf %126, %134 : vector<8x128xf32>
    %c3_119 = arith.constant 3 : index
    %c0_120 = arith.constant 0 : index
    %c0_121 = arith.constant 0 : index
    %136 = vector.load %arg3[%c3_119, %c0_120, %c0_121] : memref<5x8x144xbf16, #tpu.memory_space<vmem>>, vector<1x8x144xbf16>
    %137 = vector.shape_cast %136 : vector<1x8x144xbf16> to vector<8x144xbf16>
    %c2_i32_122 = arith.constant 2 : i32
    %138 = arith.addi %0, %c2_i32_122 : i32
    %c3_i32_123 = arith.constant 3 : i32
    %139 = arith.addi %138, %c3_i32_123 : i32
    %c0_124 = arith.constant 0 : index
    %140 = arith.index_cast %139 : i32 to index
    %c0_125 = arith.constant 0 : index
    %c0_126 = arith.constant 0 : index
    %141 = vector.load %arg2[%c0_124, %140, %c0_125, %c0_126] : memref<1x16x144x128xbf16, #tpu.memory_space<vmem>>, vector<1x1x144x128xbf16>
    %142 = vector.shape_cast %141 : vector<1x1x144x128xbf16> to vector<144x128xbf16>
    %cst_127 = arith.constant dense<0.000000e+00> : vector<8x128xf32>
    %143 = tpu.matmul %137, %142, %cst_127 {dimension_numbers = #tpu.dot_dimension_numbers<[1], [0], [0], [1], [0, 0, 1, 1], [], []>} : vector<8x144xbf16>, vector<144x128xbf16>, vector<8x128xf32> -> vector<8x128xf32>
    %144 = arith.addf %135, %143 : vector<8x128xf32>
    %c4_128 = arith.constant 4 : index
    %c0_129 = arith.constant 0 : index
    %c0_130 = arith.constant 0 : index
    %145 = vector.load %arg3[%c4_128, %c0_129, %c0_130] : memref<5x8x144xbf16, #tpu.memory_space<vmem>>, vector<1x8x144xbf16>
    %146 = vector.shape_cast %145 : vector<1x8x144xbf16> to vector<8x144xbf16>
    %c2_i32_131 = arith.constant 2 : i32
    %147 = arith.addi %0, %c2_i32_131 : i32
    %c4_i32_132 = arith.constant 4 : i32
    %148 = arith.addi %147, %c4_i32_132 : i32
    %c0_133 = arith.constant 0 : index
    %149 = arith.index_cast %148 : i32 to index
    %c0_134 = arith.constant 0 : index
    %c0_135 = arith.constant 0 : index
    %150 = vector.load %arg2[%c0_133, %149, %c0_134, %c0_135] : memref<1x16x144x128xbf16, #tpu.memory_space<vmem>>, vector<1x1x144x128xbf16>
    %151 = vector.shape_cast %150 : vector<1x1x144x128xbf16> to vector<144x128xbf16>
    %cst_136 = arith.constant dense<0.000000e+00> : vector<8x128xf32>
    %152 = tpu.matmul %146, %151, %cst_136 {dimension_numbers = #tpu.dot_dimension_numbers<[1], [0], [0], [1], [0, 0, 1, 1], [], []>} : vector<8x144xbf16>, vector<144x128xbf16>, vector<8x128xf32> -> vector<8x128xf32>
    %153 = arith.addf %144, %152 : vector<8x128xf32>
    %cst_137 = arith.constant 3.000000e+00 : f32
    %154 = vector.broadcast %cst_137 : f32 to vector<8x128xf32>
    %155 = arith.addf %153, %154 : vector<8x128xf32>
    %cst_138 = arith.constant 0.000000e+00 : f32
    %cst_139 = arith.constant 6.000000e+00 : f32
    %156 = vector.broadcast %cst_138 : f32 to vector<8x128xf32>
    %157 = arith.maximumf %156, %155 : vector<8x128xf32>
    %158 = vector.broadcast %cst_139 : f32 to vector<8x128xf32>
    %159 = arith.minimumf %158, %157 : vector<8x128xf32>
    %160 = arith.mulf %153, %159 : vector<8x128xf32>
    %cst_140 = arith.constant 0.166666672 : f32
    %161 = vector.broadcast %cst_140 : f32 to vector<8x128xf32>
    %162 = arith.mulf %160, %161 : vector<8x128xf32>
    %c0_141 = arith.constant 0 : index
    %c2_142 = arith.constant 2 : index
    %c0_143 = arith.constant 0 : index
    %c0_144 = arith.constant 0 : index
    %163 = vector.load %arg4[%c0_141, %c2_142, %c0_143, %c0_144] : memref<1x6x8x128xf32, #tpu.memory_space<vmem>>, vector<1x1x8x128xf32>
    %164 = vector.shape_cast %163 : vector<1x1x8x128xf32> to vector<8x128xf32>
    %165 = vector.shape_cast %162 : vector<8x128xf32> to vector<1x1x8x128xf32>
    tpu.vector_store %arg4[%c0_141, %c2_142, %c0_143, %c0_144], %165 {strides = array<i32>} : memref<1x6x8x128xf32, #tpu.memory_space<vmem>>, vector<1x1x8x128xf32>,
    %c0_145 = arith.constant 0 : index
    %c0_146 = arith.constant 0 : index
    %c0_147 = arith.constant 0 : index
    %166 = vector.load %arg3[%c0_145, %c0_146, %c0_147] : memref<5x8x144xbf16, #tpu.memory_space<vmem>>, vector<1x8x144xbf16>
    %167 = vector.shape_cast %166 : vector<1x8x144xbf16> to vector<8x144xbf16>
    %c3_i32_148 = arith.constant 3 : i32
    %168 = arith.addi %0, %c3_i32_148 : i32
    %c0_149 = arith.constant 0 : index
    %169 = arith.index_cast %168 : i32 to index
    %c0_150 = arith.constant 0 : index
    %c0_151 = arith.constant 0 : index
    %170 = vector.load %arg2[%c0_149, %169, %c0_150, %c0_151] : memref<1x16x144x128xbf16, #tpu.memory_space<vmem>>, vector<1x1x144x128xbf16>
    %171 = vector.shape_cast %170 : vector<1x1x144x128xbf16> to vector<144x128xbf16>
    %cst_152 = arith.constant dense<0.000000e+00> : vector<8x128xf32>
    %172 = tpu.matmul %167, %171, %cst_152 {dimension_numbers = #tpu.dot_dimension_numbers<[1], [0], [0], [1], [0, 0, 1, 1], [], []>} : vector<8x144xbf16>, vector<144x128xbf16>, vector<8x128xf32> -> vector<8x128xf32>
    %c1_153 = arith.constant 1 : index
    %c0_154 = arith.constant 0 : index
    %c0_155 = arith.constant 0 : index
    %173 = vector.load %arg3[%c1_153, %c0_154, %c0_155] : memref<5x8x144xbf16, #tpu.memory_space<vmem>>, vector<1x8x144xbf16>
    %174 = vector.shape_cast %173 : vector<1x8x144xbf16> to vector<8x144xbf16>
    %c3_i32_156 = arith.constant 3 : i32
    %175 = arith.addi %0, %c3_i32_156 : i32
    %c1_i32_157 = arith.constant 1 : i32
    %176 = arith.addi %175, %c1_i32_157 : i32
    %c0_158 = arith.constant 0 : index
    %177 = arith.index_cast %176 : i32 to index
    %c0_159 = arith.constant 0 : index
    %c0_160 = arith.constant 0 : index
    %178 = vector.load %arg2[%c0_158, %177, %c0_159, %c0_160] : memref<1x16x144x128xbf16, #tpu.memory_space<vmem>>, vector<1x1x144x128xbf16>
    %179 = vector.shape_cast %178 : vector<1x1x144x128xbf16> to vector<144x128xbf16>
    %cst_161 = arith.constant dense<0.000000e+00> : vector<8x128xf32>
    %180 = tpu.matmul %174, %179, %cst_161 {dimension_numbers = #tpu.dot_dimension_numbers<[1], [0], [0], [1], [0, 0, 1, 1], [], []>} : vector<8x144xbf16>, vector<144x128xbf16>, vector<8x128xf32> -> vector<8x128xf32>
    %181 = arith.addf %172, %180 : vector<8x128xf32>
    %c2_162 = arith.constant 2 : index
    %c0_163 = arith.constant 0 : index
    %c0_164 = arith.constant 0 : index
    %182 = vector.load %arg3[%c2_162, %c0_163, %c0_164] : memref<5x8x144xbf16, #tpu.memory_space<vmem>>, vector<1x8x144xbf16>
    %183 = vector.shape_cast %182 : vector<1x8x144xbf16> to vector<8x144xbf16>
    %c3_i32_165 = arith.constant 3 : i32
    %184 = arith.addi %0, %c3_i32_165 : i32
    %c2_i32_166 = arith.constant 2 : i32
    %185 = arith.addi %184, %c2_i32_166 : i32
    %c0_167 = arith.constant 0 : index
    %186 = arith.index_cast %185 : i32 to index
    %c0_168 = arith.constant 0 : index
    %c0_169 = arith.constant 0 : index
    %187 = vector.load %arg2[%c0_167, %186, %c0_168, %c0_169] : memref<1x16x144x128xbf16, #tpu.memory_space<vmem>>, vector<1x1x144x128xbf16>
    %188 = vector.shape_cast %187 : vector<1x1x144x128xbf16> to vector<144x128xbf16>
    %cst_170 = arith.constant dense<0.000000e+00> : vector<8x128xf32>
    %189 = tpu.matmul %183, %188, %cst_170 {dimension_numbers = #tpu.dot_dimension_numbers<[1], [0], [0], [1], [0, 0, 1, 1], [], []>} : vector<8x144xbf16>, vector<144x128xbf16>, vector<8x128xf32> -> vector<8x128xf32>
    %190 = arith.addf %181, %189 : vector<8x128xf32>
    %c3_171 = arith.constant 3 : index
    %c0_172 = arith.constant 0 : index
    %c0_173 = arith.constant 0 : index
    %191 = vector.load %arg3[%c3_171, %c0_172, %c0_173] : memref<5x8x144xbf16, #tpu.memory_space<vmem>>, vector<1x8x144xbf16>
    %192 = vector.shape_cast %191 : vector<1x8x144xbf16> to vector<8x144xbf16>
    %c3_i32_174 = arith.constant 3 : i32
    %193 = arith.addi %0, %c3_i32_174 : i32
    %c3_i32_175 = arith.constant 3 : i32
    %194 = arith.addi %193, %c3_i32_175 : i32
    %c0_176 = arith.constant 0 : index
    %195 = arith.index_cast %194 : i32 to index
    %c0_177 = arith.constant 0 : index
    %c0_178 = arith.constant 0 : index
    %196 = vector.load %arg2[%c0_176, %195, %c0_177, %c0_178] : memref<1x16x144x128xbf16, #tpu.memory_space<vmem>>, vector<1x1x144x128xbf16>
    %197 = vector.shape_cast %196 : vector<1x1x144x128xbf16> to vector<144x128xbf16>
    %cst_179 = arith.constant dense<0.000000e+00> : vector<8x128xf32>
    %198 = tpu.matmul %192, %197, %cst_179 {dimension_numbers = #tpu.dot_dimension_numbers<[1], [0], [0], [1], [0, 0, 1, 1], [], []>} : vector<8x144xbf16>, vector<144x128xbf16>, vector<8x128xf32> -> vector<8x128xf32>
    %199 = arith.addf %190, %198 : vector<8x128xf32>
    %c4_180 = arith.constant 4 : index
    %c0_181 = arith.constant 0 : index
    %c0_182 = arith.constant 0 : index
    %200 = vector.load %arg3[%c4_180, %c0_181, %c0_182] : memref<5x8x144xbf16, #tpu.memory_space<vmem>>, vector<1x8x144xbf16>
    %201 = vector.shape_cast %200 : vector<1x8x144xbf16> to vector<8x144xbf16>
    %c3_i32_183 = arith.constant 3 : i32
    %202 = arith.addi %0, %c3_i32_183 : i32
    %c4_i32_184 = arith.constant 4 : i32
    %203 = arith.addi %202, %c4_i32_184 : i32
    %c0_185 = arith.constant 0 : index
    %204 = arith.index_cast %203 : i32 to index
    %c0_186 = arith.constant 0 : index
    %c0_187 = arith.constant 0 : index
    %205 = vector.load %arg2[%c0_185, %204, %c0_186, %c0_187] : memref<1x16x144x128xbf16, #tpu.memory_space<vmem>>, vector<1x1x144x128xbf16>
    %206 = vector.shape_cast %205 : vector<1x1x144x128xbf16> to vector<144x128xbf16>
    %cst_188 = arith.constant dense<0.000000e+00> : vector<8x128xf32>
    %207 = tpu.matmul %201, %206, %cst_188 {dimension_numbers = #tpu.dot_dimension_numbers<[1], [0], [0], [1], [0, 0, 1, 1], [], []>} : vector<8x144xbf16>, vector<144x128xbf16>, vector<8x128xf32> -> vector<8x128xf32>
    %208 = arith.addf %199, %207 : vector<8x128xf32>
    %cst_189 = arith.constant 3.000000e+00 : f32
    %209 = vector.broadcast %cst_189 : f32 to vector<8x128xf32>
    %210 = arith.addf %208, %209 : vector<8x128xf32>
    %cst_190 = arith.constant 0.000000e+00 : f32
    %cst_191 = arith.constant 6.000000e+00 : f32
    %211 = vector.broadcast %cst_190 : f32 to vector<8x128xf32>
    %212 = arith.maximumf %211, %210 : vector<8x128xf32>
    %213 = vector.broadcast %cst_191 : f32 to vector<8x128xf32>
    %214 = arith.minimumf %213, %212 : vector<8x128xf32>
    %215 = arith.mulf %208, %214 : vector<8x128xf32>
    %cst_192 = arith.constant 0.166666672 : f32
    %216 = vector.broadcast %cst_192 : f32 to vector<8x128xf32>
    %217 = arith.mulf %215, %216 : vector<8x128xf32>
    %c0_193 = arith.constant 0 : index
    %c3_194 = arith.constant 3 : index
    %c0_195 = arith.constant 0 : index
    %c0_196 = arith.constant 0 : index
    %218 = vector.load %arg4[%c0_193, %c3_194, %c0_195, %c0_196] : memref<1x6x8x128xf32, #tpu.memory_space<vmem>>, vector<1x1x8x128xf32>
    %219 = vector.shape_cast %218 : vector<1x1x8x128xf32> to vector<8x128xf32>
    %220 = vector.shape_cast %217 : vector<8x128xf32> to vector<1x1x8x128xf32>
    tpu.vector_store %arg4[%c0_193, %c3_194, %c0_195, %c0_196], %220 {strides = array<i32>} : memref<1x6x8x128xf32, #tpu.memory_space<vmem>>, vector<1x1x8x128xf32>,
    %c0_197 = arith.constant 0 : index
    %c0_198 = arith.constant 0 : index
    %c0_199 = arith.constant 0 : index
    %221 = vector.load %arg3[%c0_197, %c0_198, %c0_199] : memref<5x8x144xbf16, #tpu.memory_space<vmem>>, vector<1x8x144xbf16>
    %222 = vector.shape_cast %221 : vector<1x8x144xbf16> to vector<8x144xbf16>
    %c4_i32_200 = arith.constant 4 : i32
    %223 = arith.addi %0, %c4_i32_200 : i32
    %c0_201 = arith.constant 0 : index
    %224 = arith.index_cast %223 : i32 to index
    %c0_202 = arith.constant 0 : index
    %c0_203 = arith.constant 0 : index
    %225 = vector.load %arg2[%c0_201, %224, %c0_202, %c0_203] : memref<1x16x144x128xbf16, #tpu.memory_space<vmem>>, vector<1x1x144x128xbf16>
    %226 = vector.shape_cast %225 : vector<1x1x144x128xbf16> to vector<144x128xbf16>
    %cst_204 = arith.constant dense<0.000000e+00> : vector<8x128xf32>
    %227 = tpu.matmul %222, %226, %cst_204 {dimension_numbers = #tpu.dot_dimension_numbers<[1], [0], [0], [1], [0, 0, 1, 1], [], []>} : vector<8x144xbf16>, vector<144x128xbf16>, vector<8x128xf32> -> vector<8x128xf32>
    %c1_205 = arith.constant 1 : index
    %c0_206 = arith.constant 0 : index
    %c0_207 = arith.constant 0 : index
    %228 = vector.load %arg3[%c1_205, %c0_206, %c0_207] : memref<5x8x144xbf16, #tpu.memory_space<vmem>>, vector<1x8x144xbf16>
    %229 = vector.shape_cast %228 : vector<1x8x144xbf16> to vector<8x144xbf16>
    %c4_i32_208 = arith.constant 4 : i32
    %230 = arith.addi %0, %c4_i32_208 : i32
    %c1_i32_209 = arith.constant 1 : i32
    %231 = arith.addi %230, %c1_i32_209 : i32
    %c0_210 = arith.constant 0 : index
    %232 = arith.index_cast %231 : i32 to index
    %c0_211 = arith.constant 0 : index
    %c0_212 = arith.constant 0 : index
    %233 = vector.load %arg2[%c0_210, %232, %c0_211, %c0_212] : memref<1x16x144x128xbf16, #tpu.memory_space<vmem>>, vector<1x1x144x128xbf16>
    %234 = vector.shape_cast %233 : vector<1x1x144x128xbf16> to vector<144x128xbf16>
    %cst_213 = arith.constant dense<0.000000e+00> : vector<8x128xf32>
    %235 = tpu.matmul %229, %234, %cst_213 {dimension_numbers = #tpu.dot_dimension_numbers<[1], [0], [0], [1], [0, 0, 1, 1], [], []>} : vector<8x144xbf16>, vector<144x128xbf16>, vector<8x128xf32> -> vector<8x128xf32>
    %236 = arith.addf %227, %235 : vector<8x128xf32>
    %c2_214 = arith.constant 2 : index
    %c0_215 = arith.constant 0 : index
    %c0_216 = arith.constant 0 : index
    %237 = vector.load %arg3[%c2_214, %c0_215, %c0_216] : memref<5x8x144xbf16, #tpu.memory_space<vmem>>, vector<1x8x144xbf16>
    %238 = vector.shape_cast %237 : vector<1x8x144xbf16> to vector<8x144xbf16>
    %c4_i32_217 = arith.constant 4 : i32
    %239 = arith.addi %0, %c4_i32_217 : i32
    %c2_i32_218 = arith.constant 2 : i32
    %240 = arith.addi %239, %c2_i32_218 : i32
    %c0_219 = arith.constant 0 : index
    %241 = arith.index_cast %240 : i32 to index
    %c0_220 = arith.constant 0 : index
    %c0_221 = arith.constant 0 : index
    %242 = vector.load %arg2[%c0_219, %241, %c0_220, %c0_221] : memref<1x16x144x128xbf16, #tpu.memory_space<vmem>>, vector<1x1x144x128xbf16>
    %243 = vector.shape_cast %242 : vector<1x1x144x128xbf16> to vector<144x128xbf16>
    %cst_222 = arith.constant dense<0.000000e+00> : vector<8x128xf32>
    %244 = tpu.matmul %238, %243, %cst_222 {dimension_numbers = #tpu.dot_dimension_numbers<[1], [0], [0], [1], [0, 0, 1, 1], [], []>} : vector<8x144xbf16>, vector<144x128xbf16>, vector<8x128xf32> -> vector<8x128xf32>
    %245 = arith.addf %236, %244 : vector<8x128xf32>
    %c3_223 = arith.constant 3 : index
    %c0_224 = arith.constant 0 : index
    %c0_225 = arith.constant 0 : index
    %246 = vector.load %arg3[%c3_223, %c0_224, %c0_225] : memref<5x8x144xbf16, #tpu.memory_space<vmem>>, vector<1x8x144xbf16>
    %247 = vector.shape_cast %246 : vector<1x8x144xbf16> to vector<8x144xbf16>
    %c4_i32_226 = arith.constant 4 : i32
    %248 = arith.addi %0, %c4_i32_226 : i32
    %c3_i32_227 = arith.constant 3 : i32
    %249 = arith.addi %248, %c3_i32_227 : i32
    %c0_228 = arith.constant 0 : index
    %250 = arith.index_cast %249 : i32 to index
    %c0_229 = arith.constant 0 : index
    %c0_230 = arith.constant 0 : index
    %251 = vector.load %arg2[%c0_228, %250, %c0_229, %c0_230] : memref<1x16x144x128xbf16, #tpu.memory_space<vmem>>, vector<1x1x144x128xbf16>
    %252 = vector.shape_cast %251 : vector<1x1x144x128xbf16> to vector<144x128xbf16>
    %cst_231 = arith.constant dense<0.000000e+00> : vector<8x128xf32>
    %253 = tpu.matmul %247, %252, %cst_231 {dimension_numbers = #tpu.dot_dimension_numbers<[1], [0], [0], [1], [0, 0, 1, 1], [], []>} : vector<8x144xbf16>, vector<144x128xbf16>, vector<8x128xf32> -> vector<8x128xf32>
    %254 = arith.addf %245, %253 : vector<8x128xf32>
    %c4_232 = arith.constant 4 : index
    %c0_233 = arith.constant 0 : index
    %c0_234 = arith.constant 0 : index
    %255 = vector.load %arg3[%c4_232, %c0_233, %c0_234] : memref<5x8x144xbf16, #tpu.memory_space<vmem>>, vector<1x8x144xbf16>
    %256 = vector.shape_cast %255 : vector<1x8x144xbf16> to vector<8x144xbf16>
    %c4_i32_235 = arith.constant 4 : i32
    %257 = arith.addi %0, %c4_i32_235 : i32
    %c4_i32_236 = arith.constant 4 : i32
    %258 = arith.addi %257, %c4_i32_236 : i32
    %c0_237 = arith.constant 0 : index
    %259 = arith.index_cast %258 : i32 to index
    %c0_238 = arith.constant 0 : index
    %c0_239 = arith.constant 0 : index
    %260 = vector.load %arg2[%c0_237, %259, %c0_238, %c0_239] : memref<1x16x144x128xbf16, #tpu.memory_space<vmem>>, vector<1x1x144x128xbf16>
    %261 = vector.shape_cast %260 : vector<1x1x144x128xbf16> to vector<144x128xbf16>
    %cst_240 = arith.constant dense<0.000000e+00> : vector<8x128xf32>
    %262 = tpu.matmul %256, %261, %cst_240 {dimension_numbers = #tpu.dot_dimension_numbers<[1], [0], [0], [1], [0, 0, 1, 1], [], []>} : vector<8x144xbf16>, vector<144x128xbf16>, vector<8x128xf32> -> vector<8x128xf32>
    %263 = arith.addf %254, %262 : vector<8x128xf32>
    %cst_241 = arith.constant 3.000000e+00 : f32
    %264 = vector.broadcast %cst_241 : f32 to vector<8x128xf32>
    %265 = arith.addf %263, %264 : vector<8x128xf32>
    %cst_242 = arith.constant 0.000000e+00 : f32
    %cst_243 = arith.constant 6.000000e+00 : f32
    %266 = vector.broadcast %cst_242 : f32 to vector<8x128xf32>
    %267 = arith.maximumf %266, %265 : vector<8x128xf32>
    %268 = vector.broadcast %cst_243 : f32 to vector<8x128xf32>
    %269 = arith.minimumf %268, %267 : vector<8x128xf32>
    %270 = arith.mulf %263, %269 : vector<8x128xf32>
    %cst_244 = arith.constant 0.166666672 : f32
    %271 = vector.broadcast %cst_244 : f32 to vector<8x128xf32>
    %272 = arith.mulf %270, %271 : vector<8x128xf32>
    %c0_245 = arith.constant 0 : index
    %c4_246 = arith.constant 4 : index
    %c0_247 = arith.constant 0 : index
    %c0_248 = arith.constant 0 : index
    %273 = vector.load %arg4[%c0_245, %c4_246, %c0_247, %c0_248] : memref<1x6x8x128xf32, #tpu.memory_space<vmem>>, vector<1x1x8x128xf32>
    %274 = vector.shape_cast %273 : vector<1x1x8x128xf32> to vector<8x128xf32>
    %275 = vector.shape_cast %272 : vector<8x128xf32> to vector<1x1x8x128xf32>
    tpu.vector_store %arg4[%c0_245, %c4_246, %c0_247, %c0_248], %275 {strides = array<i32>} : memref<1x6x8x128xf32, #tpu.memory_space<vmem>>, vector<1x1x8x128xf32>,
    %c0_249 = arith.constant 0 : index
    %c0_250 = arith.constant 0 : index
    %c0_251 = arith.constant 0 : index
    %276 = vector.load %arg3[%c0_249, %c0_250, %c0_251] : memref<5x8x144xbf16, #tpu.memory_space<vmem>>, vector<1x8x144xbf16>
    %277 = vector.shape_cast %276 : vector<1x8x144xbf16> to vector<8x144xbf16>
    %c5_i32 = arith.constant 5 : i32
    %278 = arith.addi %0, %c5_i32 : i32
    %c0_252 = arith.constant 0 : index
    %279 = arith.index_cast %278 : i32 to index
    %c0_253 = arith.constant 0 : index
    %c0_254 = arith.constant 0 : index
    %280 = vector.load %arg2[%c0_252, %279, %c0_253, %c0_254] : memref<1x16x144x128xbf16, #tpu.memory_space<vmem>>, vector<1x1x144x128xbf16>
    %281 = vector.shape_cast %280 : vector<1x1x144x128xbf16> to vector<144x128xbf16>
    %cst_255 = arith.constant dense<0.000000e+00> : vector<8x128xf32>
    %282 = tpu.matmul %277, %281, %cst_255 {dimension_numbers = #tpu.dot_dimension_numbers<[1], [0], [0], [1], [0, 0, 1, 1], [], []>} : vector<8x144xbf16>, vector<144x128xbf16>, vector<8x128xf32> -> vector<8x128xf32>
    %c1_256 = arith.constant 1 : index
    %c0_257 = arith.constant 0 : index
    %c0_258 = arith.constant 0 : index
    %283 = vector.load %arg3[%c1_256, %c0_257, %c0_258] : memref<5x8x144xbf16, #tpu.memory_space<vmem>>, vector<1x8x144xbf16>
    %284 = vector.shape_cast %283 : vector<1x8x144xbf16> to vector<8x144xbf16>
    %c5_i32_259 = arith.constant 5 : i32
    %285 = arith.addi %0, %c5_i32_259 : i32
    %c1_i32_260 = arith.constant 1 : i32
    %286 = arith.addi %285, %c1_i32_260 : i32
    %c0_261 = arith.constant 0 : index
    %287 = arith.index_cast %286 : i32 to index
    %c0_262 = arith.constant 0 : index
    %c0_263 = arith.constant 0 : index
    %288 = vector.load %arg2[%c0_261, %287, %c0_262, %c0_263] : memref<1x16x144x128xbf16, #tpu.memory_space<vmem>>, vector<1x1x144x128xbf16>
    %289 = vector.shape_cast %288 : vector<1x1x144x128xbf16> to vector<144x128xbf16>
    %cst_264 = arith.constant dense<0.000000e+00> : vector<8x128xf32>
    %290 = tpu.matmul %284, %289, %cst_264 {dimension_numbers = #tpu.dot_dimension_numbers<[1], [0], [0], [1], [0, 0, 1, 1], [], []>} : vector<8x144xbf16>, vector<144x128xbf16>, vector<8x128xf32> -> vector<8x128xf32>
    %291 = arith.addf %282, %290 : vector<8x128xf32>
    %c2_265 = arith.constant 2 : index
    %c0_266 = arith.constant 0 : index
    %c0_267 = arith.constant 0 : index
    %292 = vector.load %arg3[%c2_265, %c0_266, %c0_267] : memref<5x8x144xbf16, #tpu.memory_space<vmem>>, vector<1x8x144xbf16>
    %293 = vector.shape_cast %292 : vector<1x8x144xbf16> to vector<8x144xbf16>
    %c5_i32_268 = arith.constant 5 : i32
    %294 = arith.addi %0, %c5_i32_268 : i32
    %c2_i32_269 = arith.constant 2 : i32
    %295 = arith.addi %294, %c2_i32_269 : i32
    %c0_270 = arith.constant 0 : index
    %296 = arith.index_cast %295 : i32 to index
    %c0_271 = arith.constant 0 : index
    %c0_272 = arith.constant 0 : index
    %297 = vector.load %arg2[%c0_270, %296, %c0_271, %c0_272] : memref<1x16x144x128xbf16, #tpu.memory_space<vmem>>, vector<1x1x144x128xbf16>
    %298 = vector.shape_cast %297 : vector<1x1x144x128xbf16> to vector<144x128xbf16>
    %cst_273 = arith.constant dense<0.000000e+00> : vector<8x128xf32>
    %299 = tpu.matmul %293, %298, %cst_273 {dimension_numbers = #tpu.dot_dimension_numbers<[1], [0], [0], [1], [0, 0, 1, 1], [], []>} : vector<8x144xbf16>, vector<144x128xbf16>, vector<8x128xf32> -> vector<8x128xf32>
    %300 = arith.addf %291, %299 : vector<8x128xf32>
    %c3_274 = arith.constant 3 : index
    %c0_275 = arith.constant 0 : index
    %c0_276 = arith.constant 0 : index
    %301 = vector.load %arg3[%c3_274, %c0_275, %c0_276] : memref<5x8x144xbf16, #tpu.memory_space<vmem>>, vector<1x8x144xbf16>
    %302 = vector.shape_cast %301 : vector<1x8x144xbf16> to vector<8x144xbf16>
    %c5_i32_277 = arith.constant 5 : i32
    %303 = arith.addi %0, %c5_i32_277 : i32
    %c3_i32_278 = arith.constant 3 : i32
    %304 = arith.addi %303, %c3_i32_278 : i32
    %c0_279 = arith.constant 0 : index
    %305 = arith.index_cast %304 : i32 to index
    %c0_280 = arith.constant 0 : index
    %c0_281 = arith.constant 0 : index
    %306 = vector.load %arg2[%c0_279, %305, %c0_280, %c0_281] : memref<1x16x144x128xbf16, #tpu.memory_space<vmem>>, vector<1x1x144x128xbf16>
    %307 = vector.shape_cast %306 : vector<1x1x144x128xbf16> to vector<144x128xbf16>
    %cst_282 = arith.constant dense<0.000000e+00> : vector<8x128xf32>
    %308 = tpu.matmul %302, %307, %cst_282 {dimension_numbers = #tpu.dot_dimension_numbers<[1], [0], [0], [1], [0, 0, 1, 1], [], []>} : vector<8x144xbf16>, vector<144x128xbf16>, vector<8x128xf32> -> vector<8x128xf32>
    %309 = arith.addf %300, %308 : vector<8x128xf32>
    %c4_283 = arith.constant 4 : index
    %c0_284 = arith.constant 0 : index
    %c0_285 = arith.constant 0 : index
    %310 = vector.load %arg3[%c4_283, %c0_284, %c0_285] : memref<5x8x144xbf16, #tpu.memory_space<vmem>>, vector<1x8x144xbf16>
    %311 = vector.shape_cast %310 : vector<1x8x144xbf16> to vector<8x144xbf16>
    %c5_i32_286 = arith.constant 5 : i32
    %312 = arith.addi %0, %c5_i32_286 : i32
    %c4_i32_287 = arith.constant 4 : i32
    %313 = arith.addi %312, %c4_i32_287 : i32
    %c0_288 = arith.constant 0 : index
    %314 = arith.index_cast %313 : i32 to index
    %c0_289 = arith.constant 0 : index
    %c0_290 = arith.constant 0 : index
    %315 = vector.load %arg2[%c0_288, %314, %c0_289, %c0_290] : memref<1x16x144x128xbf16, #tpu.memory_space<vmem>>, vector<1x1x144x128xbf16>
    %316 = vector.shape_cast %315 : vector<1x1x144x128xbf16> to vector<144x128xbf16>
    %cst_291 = arith.constant dense<0.000000e+00> : vector<8x128xf32>
    %317 = tpu.matmul %311, %316, %cst_291 {dimension_numbers = #tpu.dot_dimension_numbers<[1], [0], [0], [1], [0, 0, 1, 1], [], []>} : vector<8x144xbf16>, vector<144x128xbf16>, vector<8x128xf32> -> vector<8x128xf32>
    %318 = arith.addf %309, %317 : vector<8x128xf32>
    %cst_292 = arith.constant 3.000000e+00 : f32
    %319 = vector.broadcast %cst_292 : f32 to vector<8x128xf32>
    %320 = arith.addf %318, %319 : vector<8x128xf32>
    %cst_293 = arith.constant 0.000000e+00 : f32
    %cst_294 = arith.constant 6.000000e+00 : f32
    %321 = vector.broadcast %cst_293 : f32 to vector<8x128xf32>
    %322 = arith.maximumf %321, %320 : vector<8x128xf32>
    %323 = vector.broadcast %cst_294 : f32 to vector<8x128xf32>
    %324 = arith.minimumf %323, %322 : vector<8x128xf32>
    %325 = arith.mulf %318, %324 : vector<8x128xf32>
    %cst_295 = arith.constant 0.166666672 : f32
    %326 = vector.broadcast %cst_295 : f32 to vector<8x128xf32>
    %327 = arith.mulf %325, %326 : vector<8x128xf32>
    %c0_296 = arith.constant 0 : index
    %c5 = arith.constant 5 : index
    %c0_297 = arith.constant 0 : index
    %c0_298 = arith.constant 0 : index
    %328 = vector.load %arg4[%c0_296, %c5, %c0_297, %c0_298] : memref<1x6x8x128xf32, #tpu.memory_space<vmem>>, vector<1x1x8x128xf32>
    %329 = vector.shape_cast %328 : vector<1x1x8x128xf32> to vector<8x128xf32>
    %330 = vector.shape_cast %327 : vector<8x128xf32> to vector<1x1x8x128xf32>
    tpu.vector_store %arg4[%c0_296, %c5, %c0_297, %c0_298], %330 {strides = array<i32>} : memref<1x6x8x128xf32, #tpu.memory_space<vmem>>, vector<1x1x8x128xf32>,
    return
  }
  func.func @transform_0(%arg0: i32, %arg1: i32) -> (i32, i32, i32, i32) {
    %c0_i32 = arith.constant 0 : i32
    %c0_i32_0 = arith.constant 0 : i32
    %c0_i32_1 = arith.constant 0 : i32
    %c0_i32_2 = arith.constant 0 : i32
    return %arg0, %c0_i32, %c0_i32_0, %c0_i32_1 : i32, i32, i32, i32
  }
  func.func @transform_1(%arg0: i32, %arg1: i32) -> (i32, i32, i32) {
    %c0_i32 = arith.constant 0 : i32
    %c0_i32_0 = arith.constant 0 : i32
    %c0_i32_1 = arith.constant 0 : i32
    %c0_i32_2 = arith.constant 0 : i32
    return %c0_i32, %c0_i32_0, %c0_i32_1 : i32, i32, i32
  }
  func.func @transform_2(%arg0: i32, %arg1: i32) -> (i32, i32, i32, i32) {
    %c0_i32 = arith.constant 0 : i32
    %c0_i32_0 = arith.constant 0 : i32
    %c0_i32_1 = arith.constant 0 : i32
    return %arg0, %arg1, %c0_i32, %c0_i32_0 : i32, i32, i32, i32
  }
}

</mosaic_0001>

<llo_original>
// kernel: model_forward.1
$region0: #{model_forward.1}
  #allocation0 [shape = 'u32[]', space=smem, size = 0x4, offset = 0x4, fixed_abs, tag = 'smem constant byte address 0x4 - core index']
  #allocation1 [shape = 'u32[144,128]{1,0:T(1,128)}', space=vmem, size = 0x12000, scoped, tag = 'internal scratch']
  %s0 = inlined_call_operand.vmem [shape: bf16[1,16,144,128], index: 0, kind: input, shape index: {}]
  %s1 = inlined_call_operand.vmem [shape: bf16[5,8,144], index: 1, kind: input, shape index: {}]
  %s2 = inlined_call_operand.vmem [shape: f32[1,12,8,128], index: 2, kind: output, shape index: {}]
  %s3 = sld [smem:[#allocation0]]
  $region41: #{model_forward.1} parent=0
    _
  %s5 = ssub.s32 1, %s3
  %s6 = scalar_select 0, %s5, %s3
  loop: start=0, step=1, limit=4
  $region2: #{model_forward.1} parent=0 // loop_pre_header
    _
  $region3: #{model_forward.1} parent=0 // loop_header
    %s8 = sphi 0, %s12
    %p9 = scmp.ge.s32.totalorder %s8, 4
    %s15 = sphi 0, %s27
    %s16 = sphi 0, %s23
    %s17 = sphi 0, %s15
    %s18 = sphi 0, %s16
    %s19 = sphi 0, %s17
    %s20 = sphi 0, %s18
    %s30 = sphi 0, %s32
    %s33 = sphi 0, %s30
    %s34 = sphi 0, %s33
    %s50 = sphi 0, %s34
    %s54 = sphi 0, %s54
    %s56 = sphi 0, %s54
    %s57 = sphi 0, %s56
    %s71 = sphi 0, %s57
    %s79 = sphi 0, %s81
    %s82 = sphi 0, %s79
    %s83 = sphi 0, %s82
    %s99 = sphi 0, %s83
  $region4: #{model_forward.1} parent=0 // loop_header_branch
    %11 = sbr.rel (%p9) target = $region8
  $region5: #{model_forward.1} parent=0 // loop_body
    %s13 = ssub.s32 %s8, 1
    %s14 = ssub.s32 %s8, 2
    %s21 = sadd.s32 1, %s16
    %p22 = scmp.ge.s32.totalorder %s21, 2
    %s23 = scalar_select %p22, 0, %s21
    %s24 = sadd.s32 1, %s15
    %s25 = scalar_select %p22, %s24, %s15
    %p26 = scmp.ge.s32.totalorder %s25, 1
    %s27 = scalar_select %p26, 0, %s25
    %s28 = ssub.s32 %s15, %s27
    %p29 = scmp.eq.s32.totalorder %s28, 0
    %s31 = sadd.s32 %s30, 1
    %s32 = scalar_select %p29, %s30, %s31
    %p35 = pneg %p29
    %p36 = scmp.eq.s32.totalorder %s8, 1
    %p37 = por %p35, %p36
    %p38 = scmp.ne.s32.totalorder %s30, %s33
    %p39 = scmp.eq.s32.totalorder %s8, 0
    %p40 = por %p38, %p39
    %p41 = scmp.ne.s32.totalorder %s30, %s33
    %p42 = scmp.eq.s32.totalorder %s13, 1
    %p43 = por %p41, %p42
    %p44 = scmp.ne.s32.totalorder %s33, %s34
    %p45 = scmp.eq.s32.totalorder %s13, 0
    %p46 = por %p44, %p45
    %p47 = scmp.ne.s32.totalorder %s33, %s34
    %p48 = scmp.eq.s32.totalorder %s14, 1
    %p49 = por %p47, %p48
    %p51 = scmp.ne.s32.totalorder %s34, %s50
    %p52 = scmp.eq.s32.totalorder %s14, 0
    %p53 = por %p51, %p52
    %s55 = sadd.s32 %s54, 1
    %p58 = scmp.eq.s32.totalorder %s8, 1
    %p59 = scmp.ne.s32.totalorder %s54, %s56
    %p60 = scmp.eq.s32.totalorder %s8, 0
    %p61 = por %p59, %p60
    %p62 = scmp.ne.s32.totalorder %s54, %s56
    %p63 = scmp.eq.s32.totalorder %s13, 1
    %p64 = por %p62, %p63
    %p65 = scmp.ne.s32.totalorder %s56, %s57
    %p66 = scmp.eq.s32.totalorder %s13, 0
    %p67 = por %p65, %p66
    %p68 = scmp.ne.s32.totalorder %s56, %s57
    %p69 = scmp.eq.s32.totalorder %s14, 1
    %p70 = por %p68, %p69
    %p72 = scmp.ne.s32.totalorder %s57, %s71
    %p73 = scmp.eq.s32.totalorder %s14, 0
    %p74 = por %p72, %p73
    %s75 = ssub.s32 %s15, %s27
    %s76 = ssub.s32 %s16, %s23
    %s77 = sor.u32 %s75, %s76
    %p78 = scmp.eq.s32.totalorder %s77, 0
    %s80 = sadd.s32 %s79, 1
    %s81 = scalar_select %p78, %s79, %s80
    %p84 = pneg %p78
    %p85 = scmp.eq.s32.totalorder %s8, 1
    %p86 = por %p84, %p85
    %p87 = scmp.ne.s32.totalorder %s79, %s82
    %p88 = scmp.eq.s32.totalorder %s8, 0
    %p89 = por %p87, %p88
    %p90 = scmp.ne.s32.totalorder %s79, %s82
    %p91 = scmp.eq.s32.totalorder %s13, 1
    %p92 = por %p90, %p91
    %p93 = scmp.ne.s32.totalorder %s82, %s83
    %p94 = scmp.eq.s32.totalorder %s13, 0
    %p95 = por %p93, %p94
    %p96 = scmp.ne.s32.totalorder %s82, %s83
    %p97 = scmp.eq.s32.totalorder %s14, 1
    %p98 = por %p96, %p97
    %p100 = scmp.ne.s32.totalorder %s83, %s99
    %p101 = scmp.eq.s32.totalorder %s14, 0
    %p102 = por %p100, %p101
    %p103 = scmp.le.s32.totalorder 1, %s8
    %p104 = scmp.lt.s32.totalorder %s8, 3
    %p105 = pnand %p103, %p104
    %p106 = pneg %p105
    // Predicated region
    $region9: #{model_forward.1} parent=5 // pred_check
      _
    $region10: #{model_forward.1} parent=5 // pred_check_branch
      %108 = sbr.rel (%p105) target = $region12
    $region11: #{model_forward.1} parent=5 // pred_region
      %s109 = ssub.s32 %s8, 1
      // Predicated region
      $region13: #{model_forward.1} parent=11 // pred_check
        %p110 = pneg %p46
      $region14: #{model_forward.1} parent=11 // pred_check_branch
        %112 = sbr.rel (%p110) target = $region16
      $region15: #{model_forward.1} parent=11 // pred_region
        %p113 = scmp.lt.s32.totalorder %s17, 0
        %s114 = scalar_select %p113, %s17, 0
        %s115 = smul.addr %s114, 288
        %s116 = smul.addr %s115, 4
        %s117 = scalar_lea.vmem %s0, %s116
      $region16: #{model_forward.1} parent=11 // pred_fallthru
        _
      // Predicated region
      $region17: #{model_forward.1} parent=11 // pred_check
        %p118 = pneg %p67
      $region18: #{model_forward.1} parent=11 // pred_check_branch
        %120 = sbr.rel (%p118) target = $region20
      $region19: #{model_forward.1} parent=11 // pred_region
        _
      $region20: #{model_forward.1} parent=11 // pred_fallthru
        _
    $region12: #{model_forward.1} parent=5 // pred_fallthru
      _
    %p121 = scmp.lt.s32.totalorder %s8, 2
    // Predicated region
    $region21: #{model_forward.1} parent=5 // pred_check
      %p122 = pneg %p121
    $region22: #{model_forward.1} parent=5 // pred_check_branch
      %124 = sbr.rel (%p122) target = $region24
    $region23: #{model_forward.1} parent=5 // pred_region
      _
    $region24: #{model_forward.1} parent=5 // pred_fallthru
      _
    %p125 = scmp.le.s32.totalorder 1, %s8
    %p126 = scmp.lt.s32.totalorder %s8, 3
    %p127 = pnand %p125, %p126
    %p128 = pneg %p127
    // Predicated region
    $region25: #{model_forward.1} parent=5 // pred_check
      _
    $region26: #{model_forward.1} parent=5 // pred_check_branch
      %130 = sbr.rel (%p127) target = $region28
    $region27: #{model_forward.1} parent=5 // pred_region
      %s131 = ssub.s32 %s8, 1
      %p132 = scmp.lt.s32.totalorder %s17, 0
      %s133 = scalar_select %p132, %s17, 0
      %s134 = smul.addr %s133, 288
      %s135 = smul.addr %s134, 4
      %s136 = scalar_lea.vmem %s0, %s135
      %p137 = pneg %p46
      %p138 = pneg %p43
      %p139 = pneg %p67
      %p140 = pneg %p64
      %p141 = pneg %p95
      %p142 = pneg %p92
      %s143 = smul.u32 6, %s18
      %p144 = scmp.lt.s32.totalorder %s17, 0
      %s145 = scalar_select %p144, %s17, 0
      %p146 = scmp.lt.s32.totalorder %s143, 11
      %s147 = scalar_select %p146, %s143, 11
      %s148 = smul.addr %s145, 12
      %s149 = sadd.s32 %s147, %s148
      %s150 = smul.addr %s149, 8
      %s151 = scalar_lea.vmem %s2, %s150
      %p152 = scmp.lt.s32.totalorder %s17, 0
      %s153 = scalar_select %p152, %s17, 0
      %s154 = smul.addr %s153, 288
      %s155 = smul.addr %s154, 4
      %s156 = scalar_lea.vmem %s0, %s155
      %s157 = smul.u32 6, %s18
      %p158 = scmp.lt.s32.totalorder %s17, 0
      %s159 = scalar_select %p158, %s17, 0
      %p160 = scmp.lt.s32.totalorder %s157, 11
      %s161 = scalar_select %p160, %s157, 11
      %s162 = smul.addr %s159, 12
      %s163 = sadd.s32 %s161, %s162
      %s164 = smul.addr %s163, 8
      %s165 = scalar_lea.vmem %s2, %s164
      %s166 = smul.u32 6, %s18
      %s168 = smul.u32 %s18, 6
      %v169 = vld [vmem:[%s1] sm:$0xff]
      %s170 = smul.u32 %s168, 18
      %s171 = smul.addr %s170, 4
      %s172 = scalar_lea.vmem %s156, %s171
      %v173 = vld [vmem:[%s172] sm:$0xf]
      %v174 = vld [vmem:[%s172 + $0x4] sm:$0xf]
      %v175 = vld [vmem:[%s172 + $0x8] sm:$0xf]
      %v176 = vld [vmem:[%s172 + $0xc] sm:$0xf]
      %v177 = vld [vmem:[%s172 + $0x10] sm:$0xf]
      %v178 = vld [vmem:[%s172 + $0x14] sm:$0xf]
      %v179 = vld [vmem:[%s172 + $0x18] sm:$0xf]
      %v180 = vld [vmem:[%s172 + $0x1c] sm:$0xf]
      %v181 = vld [vmem:[%s172 + $0x20] sm:$0xf]
      %v182 = vld [vmem:[%s172 + $0x24] sm:$0xf]
      %v183 = vld [vmem:[%s172 + $0x28] sm:$0xf]
      %v184 = vld [vmem:[%s172 + $0x2c] sm:$0xf]
      %v185 = vld [vmem:[%s172 + $0x30] sm:$0xf]
      %v186 = vld [vmem:[%s172 + $0x34] sm:$0xf]
      %v187 = vld [vmem:[%s172 + $0x38] sm:$0xf]
      %v188 = vld [vmem:[%s172 + $0x3c] sm:$0xf]
      %v189 = vld [vmem:[%s172 + $0x40] sm:$0xf]
      %v190 = vld [vmem:[%s172 + $0x44] sm:$0xf]
      %s191 = scalar_lea.vmem %s1, 8
      %v192 = vld [vmem:[%s191] sm:$0xff]
      %s193 = sadd.s32 %s168, 1
      %s194 = smul.u32 %s193, 18
      %s195 = smul.addr %s194, 4
      %s196 = scalar_lea.vmem %s156, %s195
      %v197 = vld [vmem:[%s196] sm:$0xf]
      %v198 = vld [vmem:[%s196 + $0x4] sm:$0xf]
      %v199 = vld [vmem:[%s196 + $0x8] sm:$0xf]
      %v200 = vld [vmem:[%s196 + $0xc] sm:$0xf]
      %v201 = vld [vmem:[%s196 + $0x10] sm:$0xf]
      %v202 = vld [vmem:[%s196 + $0x14] sm:$0xf]
      %v203 = vld [vmem:[%s196 + $0x18] sm:$0xf]
      %v204 = vld [vmem:[%s196 + $0x1c] sm:$0xf]
      %v205 = vld [vmem:[%s196 + $0x20] sm:$0xf]
      %v206 = vld [vmem:[%s196 + $0x24] sm:$0xf]
      %v207 = vld [vmem:[%s196 + $0x28] sm:$0xf]
      %v208 = vld [vmem:[%s196 + $0x2c] sm:$0xf]
      %v209 = vld [vmem:[%s196 + $0x30] sm:$0xf]
      %v210 = vld [vmem:[%s196 + $0x34] sm:$0xf]
      %v211 = vld [vmem:[%s196 + $0x38] sm:$0xf]
      %v212 = vld [vmem:[%s196 + $0x3c] sm:$0xf]
      %v213 = vld [vmem:[%s196 + $0x40] sm:$0xf]
      %v214 = vld [vmem:[%s196 + $0x44] sm:$0xf]
      %v216 = vunpack.c.l.b16 %v192
      %v217 = vunpack.c.h.b16 %v192
      %v218 = vpack.c.b16 %v216, %v216
      %v219 = vpack.c.b16 %v217, %v217
      %v239 = vunpack.c.l.b16 %v197
      %v240 = vunpack.c.l.b16 %v198
      %v241 = vunpack.c.l.b16 %v199
      %v242 = vunpack.c.l.b16 %v200
      %v243 = vunpack.c.l.b16 %v201
      %v244 = vunpack.c.l.b16 %v202
      %v245 = vunpack.c.l.b16 %v203
      %v246 = vunpack.c.l.b16 %v204
      %v247 = vunpack.c.l.b16 %v205
      %v248 = vunpack.c.l.b16 %v206
      %v249 = vunpack.c.l.b16 %v207
      %v250 = vunpack.c.l.b16 %v208
      %v251 = vunpack.c.l.b16 %v209
      %v252 = vunpack.c.l.b16 %v210
      %v253 = vunpack.c.l.b16 %v211
      %v254 = vunpack.c.l.b16 %v212
      %v255 = vunpack.c.l.b16 %v213
      %v256 = vunpack.c.l.b16 %v214
      %v257 = vpack.c.b16 %v240, %v239
      %v258 = vpack.c.b16 %v242, %v241
      %v259 = vpack.c.b16 %v244, %v243
      %v260 = vpack.c.b16 %v246, %v245
      %v261 = vpack.c.b16 %v248, %v247
      %v262 = vpack.c.b16 %v250, %v249
      %v263 = vpack.c.b16 %v252, %v251
      %v264 = vpack.c.b16 %v254, %v253
      %v265 = vpack.c.b16 %v256, %v255
      %vm275 = vcmask 130048
      %v277 = vsel %vm275, %v219, 0
      %279 = vmatprep.subr.bf16.mxu0 0
      %280 = vmatpush1.bf16.msra.mxu0 %v264
      %281 = vmatprep.subr.bf16.mxu0 0
      %282 = vmatpush1.bf16.msra.mxu0 %v263
      %283 = vmatprep.subr.bf16.mxu0 0
      %284 = vmatpush1.bf16.msra.mxu0 %v262
      %285 = vmatprep.subr.bf16.mxu0 0
      %286 = vmatpush1.bf16.msra.mxu0 %v261
      %287 = vmatprep.subr.bf16.mxu0 0
      %288 = vmatpush1.bf16.msra.mxu0 %v260
      %289 = vmatprep.subr.bf16.mxu0 0
      %290 = vmatpush1.bf16.msra.mxu0 %v259
      %291 = vmatprep.subr.bf16.mxu0 0
      %292 = vmatpush1.bf16.msra.mxu0 %v258
      %293 = vmatprep.subr.bf16.mxu0 0
      %294 = vmatpush1.bf16.msra.mxu0 %v257
      %295 = vmatprep.subr.bf16.mxu0 0
      %296 = vmatpush2.bf16.msra.mxu0 0
      %297 = vmatprep.subr.bf16.mxu0 0
      %298 = vmatpush2.bf16.msra.mxu0 0
      %299 = vmatprep.subr.bf16.mxu0 0
      %300 = vmatpush2.bf16.msra.mxu0 0
      %301 = vmatprep.subr.bf16.mxu0 0
      %302 = vmatpush2.bf16.msra.mxu0 0
      %303 = vmatprep.subr.bf16.mxu0 0
      %304 = vmatpush2.bf16.msra.mxu0 0
      %305 = vmatprep.subr.bf16.mxu0 0
      %306 = vmatpush2.bf16.msra.mxu0 0
      %307 = vmatprep.subr.bf16.mxu0 0
      %308 = vmatpush2.bf16.msra.mxu0 0
      %309 = vmatprep.subr.bf16.mxu0 0
      %310 = vmatpush2.bf16.msra.mxu0 %v265
      %311 = vmatprep.mubr.bf16.mxu0 %v277
      %312 = vmatmul.mubr.bf16.gmra.mxu0 %v218
      %v313 = vpop.f32.mrf.mxu0
      %v314 = vadd.f32 0.0, %v313
      %v315 = vpop.f32.mrf.mxu0
      %v316 = vpop.f32.mrf.mxu0
      %v317 = vpop.f32.mrf.mxu0
      %318 = vdwg.mxu0
      %v320 = vunpack.c.l.b16 %v169
      %v321 = vunpack.c.h.b16 %v169
      %v322 = vpack.c.b16 %v320, %v320
      %v323 = vpack.c.b16 %v321, %v321
      %v343 = vunpack.c.l.b16 %v173
      %v344 = vunpack.c.l.b16 %v174
      %v345 = vunpack.c.l.b16 %v175
      %v346 = vunpack.c.l.b16 %v176
      %v347 = vunpack.c.l.b16 %v177
      %v348 = vunpack.c.l.b16 %v178
      %v349 = vunpack.c.l.b16 %v179
      %v350 = vunpack.c.l.b16 %v180
      %v351 = vunpack.c.l.b16 %v181
      %v352 = vunpack.c.l.b16 %v182
      %v353 = vunpack.c.l.b16 %v183
      %v354 = vunpack.c.l.b16 %v184
      %v355 = vunpack.c.l.b16 %v185
      %v356 = vunpack.c.l.b16 %v186
      %v357 = vunpack.c.l.b16 %v187
      %v358 = vunpack.c.l.b16 %v188
      %v359 = vunpack.c.l.b16 %v189
      %v360 = vunpack.c.l.b16 %v190
      %v361 = vpack.c.b16 %v344, %v343
      %v362 = vpack.c.b16 %v346, %v345
      %v363 = vpack.c.b16 %v348, %v347
      %v364 = vpack.c.b16 %v350, %v349
      %v365 = vpack.c.b16 %v352, %v351
      %v366 = vpack.c.b16 %v354, %v353
      %v367 = vpack.c.b16 %v356, %v355
      %v368 = vpack.c.b16 %v358, %v357
      %v369 = vpack.c.b16 %v360, %v359
      %v380 = vsel %vm275, %v323, 0
      %382 = vmatprep.subr.bf16.mxu0 0
      %383 = vmatpush1.bf16.msra.mxu0 %v368
      %384 = vmatprep.subr.bf16.mxu0 0
      %385 = vmatpush1.bf16.msra.mxu0 %v367
      %386 = vmatprep.subr.bf16.mxu0 0
      %387 = vmatpush1.bf16.msra.mxu0 %v366
      %388 = vmatprep.subr.bf16.mxu0 0
      %389 = vmatpush1.bf16.msra.mxu0 %v365
      %390 = vmatprep.subr.bf16.mxu0 0
      %391 = vmatpush1.bf16.msra.mxu0 %v364
      %392 = vmatprep.subr.bf16.mxu0 0
      %393 = vmatpush1.bf16.msra.mxu0 %v363
      %394 = vmatprep.subr.bf16.mxu0 0
      %395 = vmatpush1.bf16.msra.mxu0 %v362
      %396 = vmatprep.subr.bf16.mxu0 0
      %397 = vmatpush1.bf16.msra.mxu0 %v361
      %398 = vmatprep.subr.bf16.mxu0 0
      %399 = vmatpush2.bf16.msra.mxu0 0
      %400 = vmatprep.subr.bf16.mxu0 0
      %401 = vmatpush2.bf16.msra.mxu0 0
      %402 = vmatprep.subr.bf16.mxu0 0
      %403 = vmatpush2.bf16.msra.mxu0 0
      %404 = vmatprep.subr.bf16.mxu0 0
      %405 = vmatpush2.bf16.msra.mxu0 0
      %406 = vmatprep.subr.bf16.mxu0 0
      %407 = vmatpush2.bf16.msra.mxu0 0
      %408 = vmatprep.subr.bf16.mxu0 0
      %409 = vmatpush2.bf16.msra.mxu0 0
      %410 = vmatprep.subr.bf16.mxu0 0
      %411 = vmatpush2.bf16.msra.mxu0 0
      %412 = vmatprep.subr.bf16.mxu0 0
      %413 = vmatpush2.bf16.msra.mxu0 %v369
      %414 = vmatprep.mubr.bf16.mxu0 %v380
      %415 = vmatmul.mubr.bf16.gmra.mxu0 %v322
      %v416 = vpop.f32.mrf.mxu0
      %v417 = vadd.f32 %v314, %v416
      %v418 = vpop.f32.mrf.mxu0
      %v419 = vpop.f32.mrf.mxu0
      %v420 = vpop.f32.mrf.mxu0
      %421 = vdwg.mxu0
      %s422 = scalar_lea.vmem %s1, 16
      %v423 = vld [vmem:[%s422] sm:$0xff]
      %s424 = sadd.s32 %s168, 2
      %s425 = smul.u32 %s424, 18
      %s426 = smul.addr %s425, 4
      %s427 = scalar_lea.vmem %s156, %s426
      %v428 = vld [vmem:[%s427] sm:$0xf]
      %v429 = vld [vmem:[%s427 + $0x4] sm:$0xf]
      %v430 = vld [vmem:[%s427 + $0x8] sm:$0xf]
      %v431 = vld [vmem:[%s427 + $0xc] sm:$0xf]
      %v432 = vld [vmem:[%s427 + $0x10] sm:$0xf]
      %v433 = vld [vmem:[%s427 + $0x14] sm:$0xf]
      %v434 = vld [vmem:[%s427 + $0x18] sm:$0xf]
      %v435 = vld [vmem:[%s427 + $0x1c] sm:$0xf]
      %v436 = vld [vmem:[%s427 + $0x20] sm:$0xf]
      %v437 = vld [vmem:[%s427 + $0x24] sm:$0xf]
      %v438 = vld [vmem:[%s427 + $0x28] sm:$0xf]
      %v439 = vld [vmem:[%s427 + $0x2c] sm:$0xf]
      %v440 = vld [vmem:[%s427 + $0x30] sm:$0xf]
      %v441 = vld [vmem:[%s427 + $0x34] sm:$0xf]
      %v442 = vld [vmem:[%s427 + $0x38] sm:$0xf]
      %v443 = vld [vmem:[%s427 + $0x3c] sm:$0xf]
      %v444 = vld [vmem:[%s427 + $0x40] sm:$0xf]
      %v445 = vld [vmem:[%s427 + $0x44] sm:$0xf]
      %v447 = vunpack.c.l.b16 %v423
      %v448 = vunpack.c.h.b16 %v423
      %v449 = vpack.c.b16 %v447, %v447
      %v450 = vpack.c.b16 %v448, %v448
      %v470 = vunpack.c.l.b16 %v428
      %v471 = vunpack.c.l.b16 %v429
      %v472 = vunpack.c.l.b16 %v430
      %v473 = vunpack.c.l.b16 %v431
      %v474 = vunpack.c.l.b16 %v432
      %v475 = vunpack.c.l.b16 %v433
      %v476 = vunpack.c.l.b16 %v434
      %v477 = vunpack.c.l.b16 %v435
      %v478 = vunpack.c.l.b16 %v436
      %v479 = vunpack.c.l.b16 %v437
      %v480 = vunpack.c.l.b16 %v438
      %v481 = vunpack.c.l.b16 %v439
      %v482 = vunpack.c.l.b16 %v440
      %v483 = vunpack.c.l.b16 %v441
      %v484 = vunpack.c.l.b16 %v442
      %v485 = vunpack.c.l.b16 %v443
      %v486 = vunpack.c.l.b16 %v444
      %v487 = vunpack.c.l.b16 %v445
      %v488 = vpack.c.b16 %v471, %v470
      %v489 = vpack.c.b16 %v473, %v472
      %v490 = vpack.c.b16 %v475, %v474
      %v491 = vpack.c.b16 %v477, %v476
      %v492 = vpack.c.b16 %v479, %v478
      %v493 = vpack.c.b16 %v481, %v480
      %v494 = vpack.c.b16 %v483, %v482
      %v495 = vpack.c.b16 %v485, %v484
      %v496 = vpack.c.b16 %v487, %v486
      %v507 = vsel %vm275, %v450, 0
      %509 = vmatprep.subr.bf16.mxu0 0
      %510 = vmatpush1.bf16.msra.mxu0 %v495
      %511 = vmatprep.subr.bf16.mxu0 0
      %512 = vmatpush1.bf16.msra.mxu0 %v494
      %513 = vmatprep.subr.bf16.mxu0 0
      %514 = vmatpush1.bf16.msra.mxu0 %v493
      %515 = vmatprep.subr.bf16.mxu0 0
      %516 = vmatpush1.bf16.msra.mxu0 %v492
      %517 = vmatprep.subr.bf16.mxu0 0
      %518 = vmatpush1.bf16.msra.mxu0 %v491
      %519 = vmatprep.subr.bf16.mxu0 0
      %520 = vmatpush1.bf16.msra.mxu0 %v490
      %521 = vmatprep.subr.bf16.mxu0 0
      %522 = vmatpush1.bf16.msra.mxu0 %v489
      %523 = vmatprep.subr.bf16.mxu0 0
      %524 = vmatpush1.bf16.msra.mxu0 %v488
      %525 = vmatprep.subr.bf16.mxu0 0
      %526 = vmatpush2.bf16.msra.mxu0 0
      %527 = vmatprep.subr.bf16.mxu0 0
      %528 = vmatpush2.bf16.msra.mxu0 0
      %529 = vmatprep.subr.bf16.mxu0 0
      %530 = vmatpush2.bf16.msra.mxu0 0
      %531 = vmatprep.subr.bf16.mxu0 0
      %532 = vmatpush2.bf16.msra.mxu0 0
      %533 = vmatprep.subr.bf16.mxu0 0
      %534 = vmatpush2.bf16.msra.mxu0 0
      %535 = vmatprep.subr.bf16.mxu0 0
      %536 = vmatpush2.bf16.msra.mxu0 0
      %537 = vmatprep.subr.bf16.mxu0 0
      %538 = vmatpush2.bf16.msra.mxu0 0
      %539 = vmatprep.subr.bf16.mxu0 0
      %540 = vmatpush2.bf16.msra.mxu0 %v496
      %541 = vmatprep.mubr.bf16.mxu0 %v507
      %542 = vmatmul.mubr.bf16.gmra.mxu0 %v449
      %v543 = vpop.f32.mrf.mxu0
      %v544 = vadd.f32 0.0, %v543
      %v545 = vpop.f32.mrf.mxu0
      %v546 = vpop.f32.mrf.mxu0
      %v547 = vpop.f32.mrf.mxu0
      %548 = vdwg.mxu0
      %v549 = vadd.f32 %v417, %v544
      %s550 = scalar_lea.vmem %s1, 24
      %v551 = vld [vmem:[%s550] sm:$0xff]
      %s552 = sadd.s32 %s168, 3
      %s553 = smul.u32 %s552, 18
      %s554 = smul.addr %s553, 4
      %s555 = scalar_lea.vmem %s156, %s554
      %v556 = vld [vmem:[%s555] sm:$0xf]
      %v557 = vld [vmem:[%s555 + $0x4] sm:$0xf]
      %v558 = vld [vmem:[%s555 + $0x8] sm:$0xf]
      %v559 = vld [vmem:[%s555 + $0xc] sm:$0xf]
      %v560 = vld [vmem:[%s555 + $0x10] sm:$0xf]
      %v561 = vld [vmem:[%s555 + $0x14] sm:$0xf]
      %v562 = vld [vmem:[%s555 + $0x18] sm:$0xf]
      %v563 = vld [vmem:[%s555 + $0x1c] sm:$0xf]
      %v564 = vld [vmem:[%s555 + $0x20] sm:$0xf]
      %v565 = vld [vmem:[%s555 + $0x24] sm:$0xf]
      %v566 = vld [vmem:[%s555 + $0x28] sm:$0xf]
      %v567 = vld [vmem:[%s555 + $0x2c] sm:$0xf]
      %v568 = vld [vmem:[%s555 + $0x30] sm:$0xf]
      %v569 = vld [vmem:[%s555 + $0x34] sm:$0xf]
      %v570 = vld [vmem:[%s555 + $0x38] sm:$0xf]
      %v571 = vld [vmem:[%s555 + $0x3c] sm:$0xf]
      %v572 = vld [vmem:[%s555 + $0x40] sm:$0xf]
      %v573 = vld [vmem:[%s555 + $0x44] sm:$0xf]
      %v575 = vunpack.c.l.b16 %v551
      %v576 = vunpack.c.h.b16 %v551
      %v577 = vpack.c.b16 %v575, %v575
      %v578 = vpack.c.b16 %v576, %v576
      %v598 = vunpack.c.l.b16 %v556
      %v599 = vunpack.c.l.b16 %v557
      %v600 = vunpack.c.l.b16 %v558
      %v601 = vunpack.c.l.b16 %v559
      %v602 = vunpack.c.l.b16 %v560
      %v603 = vunpack.c.l.b16 %v561
      %v604 = vunpack.c.l.b16 %v562
      %v605 = vunpack.c.l.b16 %v563
      %v606 = vunpack.c.l.b16 %v564
      %v607 = vunpack.c.l.b16 %v565
      %v608 = vunpack.c.l.b16 %v566
      %v609 = vunpack.c.l.b16 %v567
      %v610 = vunpack.c.l.b16 %v568
      %v611 = vunpack.c.l.b16 %v569
      %v612 = vunpack.c.l.b16 %v570
      %v613 = vunpack.c.l.b16 %v571
      %v614 = vunpack.c.l.b16 %v572
      %v615 = vunpack.c.l.b16 %v573
      %v616 = vpack.c.b16 %v599, %v598
      %v617 = vpack.c.b16 %v601, %v600
      %v618 = vpack.c.b16 %v603, %v602
      %v619 = vpack.c.b16 %v605, %v604
      %v620 = vpack.c.b16 %v607, %v606
      %v621 = vpack.c.b16 %v609, %v608
      %v622 = vpack.c.b16 %v611, %v610
      %v623 = vpack.c.b16 %v613, %v612
      %v624 = vpack.c.b16 %v615, %v614
      %v635 = vsel %vm275, %v578, 0
      %637 = vmatprep.subr.bf16.mxu0 0
      %638 = vmatpush1.bf16.msra.mxu0 %v623
      %639 = vmatprep.subr.bf16.mxu0 0
      %640 = vmatpush1.bf16.msra.mxu0 %v622
      %641 = vmatprep.subr.bf16.mxu0 0
      %642 = vmatpush1.bf16.msra.mxu0 %v621
      %643 = vmatprep.subr.bf16.mxu0 0
      %644 = vmatpush1.bf16.msra.mxu0 %v620
      %645 = vmatprep.subr.bf16.mxu0 0
      %646 = vmatpush1.bf16.msra.mxu0 %v619
      %647 = vmatprep.subr.bf16.mxu0 0
      %648 = vmatpush1.bf16.msra.mxu0 %v618
      %649 = vmatprep.subr.bf16.mxu0 0
      %650 = vmatpush1.bf16.msra.mxu0 %v617
      %651 = vmatprep.subr.bf16.mxu0 0
      %652 = vmatpush1.bf16.msra.mxu0 %v616
      %653 = vmatprep.subr.bf16.mxu0 0
      %654 = vmatpush2.bf16.msra.mxu0 0
      %655 = vmatprep.subr.bf16.mxu0 0
      %656 = vmatpush2.bf16.msra.mxu0 0
      %657 = vmatprep.subr.bf16.mxu0 0
      %658 = vmatpush2.bf16.msra.mxu0 0
      %659 = vmatprep.subr.bf16.mxu0 0
      %660 = vmatpush2.bf16.msra.mxu0 0
      %661 = vmatprep.subr.bf16.mxu0 0
      %662 = vmatpush2.bf16.msra.mxu0 0
      %663 = vmatprep.subr.bf16.mxu0 0
      %664 = vmatpush2.bf16.msra.mxu0 0
      %665 = vmatprep.subr.bf16.mxu0 0
      %666 = vmatpush2.bf16.msra.mxu0 0
      %667 = vmatprep.subr.bf16.mxu0 0
      %668 = vmatpush2.bf16.msra.mxu0 %v624
      %669 = vmatprep.mubr.bf16.mxu0 %v635
      %670 = vmatmul.mubr.bf16.gmra.mxu0 %v577
      %v671 = vpop.f32.mrf.mxu0
      %v672 = vadd.f32 0.0, %v671
      %v673 = vpop.f32.mrf.mxu0
      %v674 = vpop.f32.mrf.mxu0
      %v675 = vpop.f32.mrf.mxu0
      %676 = vdwg.mxu0
      %v677 = vadd.f32 %v549, %v672
      %s678 = scalar_lea.vmem %s1, 32
      %v679 = vld [vmem:[%s678] sm:$0xff]
      %s680 = sadd.s32 %s168, 4
      %s681 = smul.u32 %s680, 18
      %s682 = smul.addr %s681, 4
      %s683 = scalar_lea.vmem %s156, %s682
      %v684 = vld [vmem:[%s683] sm:$0xf]
      %v685 = vld [vmem:[%s683 + $0x4] sm:$0xf]
      %v686 = vld [vmem:[%s683 + $0x8] sm:$0xf]
      %v687 = vld [vmem:[%s683 + $0xc] sm:$0xf]
      %v688 = vld [vmem:[%s683 + $0x10] sm:$0xf]
      %v689 = vld [vmem:[%s683 + $0x14] sm:$0xf]
      %v690 = vld [vmem:[%s683 + $0x18] sm:$0xf]
      %v691 = vld [vmem:[%s683 + $0x1c] sm:$0xf]
      %v692 = vld [vmem:[%s683 + $0x20] sm:$0xf]
      %v693 = vld [vmem:[%s683 + $0x24] sm:$0xf]
      %v694 = vld [vmem:[%s683 + $0x28] sm:$0xf]
      %v695 = vld [vmem:[%s683 + $0x2c] sm:$0xf]
      %v696 = vld [vmem:[%s683 + $0x30] sm:$0xf]
      %v697 = vld [vmem:[%s683 + $0x34] sm:$0xf]
      %v698 = vld [vmem:[%s683 + $0x38] sm:$0xf]
      %v699 = vld [vmem:[%s683 + $0x3c] sm:$0xf]
      %v700 = vld [vmem:[%s683 + $0x40] sm:$0xf]
      %v701 = vld [vmem:[%s683 + $0x44] sm:$0xf]
      %v703 = vunpack.c.l.b16 %v679
      %v704 = vunpack.c.h.b16 %v679
      %v705 = vpack.c.b16 %v703, %v703
      %v706 = vpack.c.b16 %v704, %v704
      %v726 = vunpack.c.l.b16 %v684
      %v727 = vunpack.c.l.b16 %v685
      %v728 = vunpack.c.l.b16 %v686
      %v729 = vunpack.c.l.b16 %v687
      %v730 = vunpack.c.l.b16 %v688
      %v731 = vunpack.c.l.b16 %v689
      %v732 = vunpack.c.l.b16 %v690
      %v733 = vunpack.c.l.b16 %v691
      %v734 = vunpack.c.l.b16 %v692
      %v735 = vunpack.c.l.b16 %v693
      %v736 = vunpack.c.l.b16 %v694
      %v737 = vunpack.c.l.b16 %v695
      %v738 = vunpack.c.l.b16 %v696
      %v739 = vunpack.c.l.b16 %v697
      %v740 = vunpack.c.l.b16 %v698
      %v741 = vunpack.c.l.b16 %v699
      %v742 = vunpack.c.l.b16 %v700
      %v743 = vunpack.c.l.b16 %v701
      %v744 = vpack.c.b16 %v727, %v726
      %v745 = vpack.c.b16 %v729, %v728
      %v746 = vpack.c.b16 %v731, %v730
      %v747 = vpack.c.b16 %v733, %v732
      %v748 = vpack.c.b16 %v735, %v734
      %v749 = vpack.c.b16 %v737, %v736
      %v750 = vpack.c.b16 %v739, %v738
      %v751 = vpack.c.b16 %v741, %v740
      %v752 = vpack.c.b16 %v743, %v742
      %v763 = vsel %vm275, %v706, 0
      %765 = vmatprep.subr.bf16.mxu0 0
      %766 = vmatpush1.bf16.msra.mxu0 %v751
      %767 = vmatprep.subr.bf16.mxu0 0
      %768 = vmatpush1.bf16.msra.mxu0 %v750
      %769 = vmatprep.subr.bf16.mxu0 0
      %770 = vmatpush1.bf16.msra.mxu0 %v749
      %771 = vmatprep.subr.bf16.mxu0 0
      %772 = vmatpush1.bf16.msra.mxu0 %v748
      %773 = vmatprep.subr.bf16.mxu0 0
      %774 = vmatpush1.bf16.msra.mxu0 %v747
      %775 = vmatprep.subr.bf16.mxu0 0
      %776 = vmatpush1.bf16.msra.mxu0 %v746
      %777 = vmatprep.subr.bf16.mxu0 0
      %778 = vmatpush1.bf16.msra.mxu0 %v745
      %779 = vmatprep.subr.bf16.mxu0 0
      %780 = vmatpush1.bf16.msra.mxu0 %v744
      %781 = vmatprep.subr.bf16.mxu0 0
      %782 = vmatpush2.bf16.msra.mxu0 0
      %783 = vmatprep.subr.bf16.mxu0 0
      %784 = vmatpush2.bf16.msra.mxu0 0
      %785 = vmatprep.subr.bf16.mxu0 0
      %786 = vmatpush2.bf16.msra.mxu0 0
      %787 = vmatprep.subr.bf16.mxu0 0
      %788 = vmatpush2.bf16.msra.mxu0 0
      %789 = vmatprep.subr.bf16.mxu0 0
      %790 = vmatpush2.bf16.msra.mxu0 0
      %791 = vmatprep.subr.bf16.mxu0 0
      %792 = vmatpush2.bf16.msra.mxu0 0
      %793 = vmatprep.subr.bf16.mxu0 0
      %794 = vmatpush2.bf16.msra.mxu0 0
      %795 = vmatprep.subr.bf16.mxu0 0
      %796 = vmatpush2.bf16.msra.mxu0 %v752
      %797 = vmatprep.mubr.bf16.mxu0 %v763
      %798 = vmatmul.mubr.bf16.gmra.mxu0 %v705
      %v799 = vpop.f32.mrf.mxu0
      %v800 = vadd.f32 0.0, %v799
      %v801 = vpop.f32.mrf.mxu0
      %v802 = vpop.f32.mrf.mxu0
      %v803 = vpop.f32.mrf.mxu0
      %804 = vdwg.mxu0
      %v805 = vadd.f32 %v677, %v800
      %v806 = vadd.f32 %v805, 3.0
      %v807 = vmax.f32 %v806, 0.0
      %v808 = vmin.f32 %v807, 6.0
      %v809 = vmul.f32 %v805, %v808
      %v810 = vmul.f32 %v809, 0.16666667
      %811 = vst [vmem:[%s165] sm:$0xff] %v810
      %v812 = vld [vmem:[%s1] sm:$0xff]
      %v813 = vld [vmem:[%s196] sm:$0xf]
      %v814 = vld [vmem:[%s196 + $0x4] sm:$0xf]
      %v815 = vld [vmem:[%s196 + $0x8] sm:$0xf]
      %v816 = vld [vmem:[%s196 + $0xc] sm:$0xf]
      %v817 = vld [vmem:[%s196 + $0x10] sm:$0xf]
      %v818 = vld [vmem:[%s196 + $0x14] sm:$0xf]
      %v819 = vld [vmem:[%s196 + $0x18] sm:$0xf]
      %v820 = vld [vmem:[%s196 + $0x1c] sm:$0xf]
      %v821 = vld [vmem:[%s196 + $0x20] sm:$0xf]
      %v822 = vld [vmem:[%s196 + $0x24] sm:$0xf]
      %v823 = vld [vmem:[%s196 + $0x28] sm:$0xf]
      %v824 = vld [vmem:[%s196 + $0x2c] sm:$0xf]
      %v825 = vld [vmem:[%s196 + $0x30] sm:$0xf]
      %v826 = vld [vmem:[%s196 + $0x34] sm:$0xf]
      %v827 = vld [vmem:[%s196 + $0x38] sm:$0xf]
      %v828 = vld [vmem:[%s196 + $0x3c] sm:$0xf]
      %v829 = vld [vmem:[%s196 + $0x40] sm:$0xf]
      %v830 = vld [vmem:[%s196 + $0x44] sm:$0xf]
      %v831 = vld [vmem:[%s191] sm:$0xff]
      %v832 = vld [vmem:[%s427] sm:$0xf]
      %v833 = vld [vmem:[%s427 + $0x4] sm:$0xf]
      %v834 = vld [vmem:[%s427 + $0x8] sm:$0xf]
      %v835 = vld [vmem:[%s427 + $0xc] sm:$0xf]
      %v836 = vld [vmem:[%s427 + $0x10] sm:$0xf]
      %v837 = vld [vmem:[%s427 + $0x14] sm:$0xf]
      %v838 = vld [vmem:[%s427 + $0x18] sm:$0xf]
      %v839 = vld [vmem:[%s427 + $0x1c] sm:$0xf]
      %v840 = vld [vmem:[%s427 + $0x20] sm:$0xf]
      %v841 = vld [vmem:[%s427 + $0x24] sm:$0xf]
      %v842 = vld [vmem:[%s427 + $0x28] sm:$0xf]
      %v843 = vld [vmem:[%s427 + $0x2c] sm:$0xf]
      %v844 = vld [vmem:[%s427 + $0x30] sm:$0xf]
      %v845 = vld [vmem:[%s427 + $0x34] sm:$0xf]
      %v846 = vld [vmem:[%s427 + $0x38] sm:$0xf]
      %v847 = vld [vmem:[%s427 + $0x3c] sm:$0xf]
      %v848 = vld [vmem:[%s427 + $0x40] sm:$0xf]
      %v849 = vld [vmem:[%s427 + $0x44] sm:$0xf]
      %v851 = vunpack.c.l.b16 %v831
      %v852 = vunpack.c.h.b16 %v831
      %v853 = vpack.c.b16 %v851, %v851
      %v854 = vpack.c.b16 %v852, %v852
      %v874 = vunpack.c.l.b16 %v832
      %v875 = vunpack.c.l.b16 %v833
      %v876 = vunpack.c.l.b16 %v834
      %v877 = vunpack.c.l.b16 %v835
      %v878 = vunpack.c.l.b16 %v836
      %v879 = vunpack.c.l.b16 %v837
      %v880 = vunpack.c.l.b16 %v838
      %v881 = vunpack.c.l.b16 %v839
      %v882 = vunpack.c.l.b16 %v840
      %v883 = vunpack.c.l.b16 %v841
      %v884 = vunpack.c.l.b16 %v842
      %v885 = vunpack.c.l.b16 %v843
      %v886 = vunpack.c.l.b16 %v844
      %v887 = vunpack.c.l.b16 %v845
      %v888 = vunpack.c.l.b16 %v846
      %v889 = vunpack.c.l.b16 %v847
      %v890 = vunpack.c.l.b16 %v848
      %v891 = vunpack.c.l.b16 %v849
      %v892 = vpack.c.b16 %v875, %v874
      %v893 = vpack.c.b16 %v877, %v876
      %v894 = vpack.c.b16 %v879, %v878
      %v895 = vpack.c.b16 %v881, %v880
      %v896 = vpack.c.b16 %v883, %v882
      %v897 = vpack.c.b16 %v885, %v884
      %v898 = vpack.c.b16 %v887, %v886
      %v899 = vpack.c.b16 %v889, %v888
      %v900 = vpack.c.b16 %v891, %v890
      %v911 = vsel %vm275, %v854, 0
      %913 = vmatprep.subr.bf16.mxu0 0
      %914 = vmatpush1.bf16.msra.mxu0 %v899
      %915 = vmatprep.subr.bf16.mxu0 0
      %916 = vmatpush1.bf16.msra.mxu0 %v898
      %917 = vmatprep.subr.bf16.mxu0 0
      %918 = vmatpush1.bf16.msra.mxu0 %v897
      %919 = vmatprep.subr.bf16.mxu0 0
      %920 = vmatpush1.bf16.msra.mxu0 %v896
      %921 = vmatprep.subr.bf16.mxu0 0
      %922 = vmatpush1.bf16.msra.mxu0 %v895
      %923 = vmatprep.subr.bf16.mxu0 0
      %924 = vmatpush1.bf16.msra.mxu0 %v894
      %925 = vmatprep.subr.bf16.mxu0 0
      %926 = vmatpush1.bf16.msra.mxu0 %v893
      %927 = vmatprep.subr.bf16.mxu0 0
      %928 = vmatpush1.bf16.msra.mxu0 %v892
      %929 = vmatprep.subr.bf16.mxu0 0
      %930 = vmatpush2.bf16.msra.mxu0 0
      %931 = vmatprep.subr.bf16.mxu0 0
      %932 = vmatpush2.bf16.msra.mxu0 0
      %933 = vmatprep.subr.bf16.mxu0 0
      %934 = vmatpush2.bf16.msra.mxu0 0
      %935 = vmatprep.subr.bf16.mxu0 0
      %936 = vmatpush2.bf16.msra.mxu0 0
      %937 = vmatprep.subr.bf16.mxu0 0
      %938 = vmatpush2.bf16.msra.mxu0 0
      %939 = vmatprep.subr.bf16.mxu0 0
      %940 = vmatpush2.bf16.msra.mxu0 0
      %941 = vmatprep.subr.bf16.mxu0 0
      %942 = vmatpush2.bf16.msra.mxu0 0
      %943 = vmatprep.subr.bf16.mxu0 0
      %944 = vmatpush2.bf16.msra.mxu0 %v900
      %945 = vmatprep.mubr.bf16.mxu0 %v911
      %946 = vmatmul.mubr.bf16.gmra.mxu0 %v853
      %v947 = vpop.f32.mrf.mxu0
      %v948 = vadd.f32 0.0, %v947
      %v949 = vpop.f32.mrf.mxu0
      %v950 = vpop.f32.mrf.mxu0
      %v951 = vpop.f32.mrf.mxu0
      %952 = vdwg.mxu0
      %v954 = vunpack.c.l.b16 %v812
      %v955 = vunpack.c.h.b16 %v812
      %v956 = vpack.c.b16 %v954, %v954
      %v957 = vpack.c.b16 %v955, %v955
      %v977 = vunpack.c.l.b16 %v813
      %v978 = vunpack.c.l.b16 %v814
      %v979 = vunpack.c.l.b16 %v815
      %v980 = vunpack.c.l.b16 %v816
      %v981 = vunpack.c.l.b16 %v817
      %v982 = vunpack.c.l.b16 %v818
      %v983 = vunpack.c.l.b16 %v819
      %v984 = vunpack.c.l.b16 %v820
      %v985 = vunpack.c.l.b16 %v821
      %v986 = vunpack.c.l.b16 %v822
      %v987 = vunpack.c.l.b16 %v823
      %v988 = vunpack.c.l.b16 %v824
      %v989 = vunpack.c.l.b16 %v825
      %v990 = vunpack.c.l.b16 %v826
      %v991 = vunpack.c.l.b16 %v827
      %v992 = vunpack.c.l.b16 %v828
      %v993 = vunpack.c.l.b16 %v829
      %v994 = vunpack.c.l.b16 %v830
      %v995 = vpack.c.b16 %v978, %v977
      %v996 = vpack.c.b16 %v980, %v979
      %v997 = vpack.c.b16 %v982, %v981
      %v998 = vpack.c.b16 %v984, %v983
      %v999 = vpack.c.b16 %v986, %v985
      %v1000 = vpack.c.b16 %v988, %v987
      %v1001 = vpack.c.b16 %v990, %v989
      %v1002 = vpack.c.b16 %v992, %v991
      %v1003 = vpack.c.b16 %v994, %v993
      %v1014 = vsel %vm275, %v957, 0
      %1016 = vmatprep.subr.bf16.mxu0 0
      %1017 = vmatpush1.bf16.msra.mxu0 %v1002
      %1018 = vmatprep.subr.bf16.mxu0 0
      %1019 = vmatpush1.bf16.msra.mxu0 %v1001
      %1020 = vmatprep.subr.bf16.mxu0 0
      %1021 = vmatpush1.bf16.msra.mxu0 %v1000
      %1022 = vmatprep.subr.bf16.mxu0 0
      %1023 = vmatpush1.bf16.msra.mxu0 %v999
      %1024 = vmatprep.subr.bf16.mxu0 0
      %1025 = vmatpush1.bf16.msra.mxu0 %v998
      %1026 = vmatprep.subr.bf16.mxu0 0
      %1027 = vmatpush1.bf16.msra.mxu0 %v997
      %1028 = vmatprep.subr.bf16.mxu0 0
      %1029 = vmatpush1.bf16.msra.mxu0 %v996
      %1030 = vmatprep.subr.bf16.mxu0 0
      %1031 = vmatpush1.bf16.msra.mxu0 %v995
      %1032 = vmatprep.subr.bf16.mxu0 0
      %1033 = vmatpush2.bf16.msra.mxu0 0
      %1034 = vmatprep.subr.bf16.mxu0 0
      %1035 = vmatpush2.bf16.msra.mxu0 0
      %1036 = vmatprep.subr.bf16.mxu0 0
      %1037 = vmatpush2.bf16.msra.mxu0 0
      %1038 = vmatprep.subr.bf16.mxu0 0
      %1039 = vmatpush2.bf16.msra.mxu0 0
      %1040 = vmatprep.subr.bf16.mxu0 0
      %1041 = vmatpush2.bf16.msra.mxu0 0
      %1042 = vmatprep.subr.bf16.mxu0 0
      %1043 = vmatpush2.bf16.msra.mxu0 0
      %1044 = vmatprep.subr.bf16.mxu0 0
      %1045 = vmatpush2.bf16.msra.mxu0 0
      %1046 = vmatprep.subr.bf16.mxu0 0
      %1047 = vmatpush2.bf16.msra.mxu0 %v1003
      %1048 = vmatprep.mubr.bf16.mxu0 %v1014
      %1049 = vmatmul.mubr.bf16.gmra.mxu0 %v956
      %v1050 = vpop.f32.mrf.mxu0
      %v1051 = vadd.f32 %v948, %v1050
      %v1052 = vpop.f32.mrf.mxu0
      %v1053 = vpop.f32.mrf.mxu0
      %v1054 = vpop.f32.mrf.mxu0
      %1055 = vdwg.mxu0
      %v1056 = vld [vmem:[%s422] sm:$0xff]
      %v1057 = vld [vmem:[%s555] sm:$0xf]
      %v1058 = vld [vmem:[%s555 + $0x4] sm:$0xf]
      %v1059 = vld [vmem:[%s555 + $0x8] sm:$0xf]
      %v1060 = vld [vmem:[%s555 + $0xc] sm:$0xf]
      %v1061 = vld [vmem:[%s555 + $0x10] sm:$0xf]
      %v1062 = vld [vmem:[%s555 + $0x14] sm:$0xf]
      %v1063 = vld [vmem:[%s555 + $0x18] sm:$0xf]
      %v1064 = vld [vmem:[%s555 + $0x1c] sm:$0xf]
      %v1065 = vld [vmem:[%s555 + $0x20] sm:$0xf]
      %v1066 = vld [vmem:[%s555 + $0x24] sm:$0xf]
      %v1067 = vld [vmem:[%s555 + $0x28] sm:$0xf]
      %v1068 = vld [vmem:[%s555 + $0x2c] sm:$0xf]
      %v1069 = vld [vmem:[%s555 + $0x30] sm:$0xf]
      %v1070 = vld [vmem:[%s555 + $0x34] sm:$0xf]
      %v1071 = vld [vmem:[%s555 + $0x38] sm:$0xf]
      %v1072 = vld [vmem:[%s555 + $0x3c] sm:$0xf]
      %v1073 = vld [vmem:[%s555 + $0x40] sm:$0xf]
      %v1074 = vld [vmem:[%s555 + $0x44] sm:$0xf]
      %v1076 = vunpack.c.l.b16 %v1056
      %v1077 = vunpack.c.h.b16 %v1056
      %v1078 = vpack.c.b16 %v1076, %v1076
      %v1079 = vpack.c.b16 %v1077, %v1077
      %v1099 = vunpack.c.l.b16 %v1057
      %v1100 = vunpack.c.l.b16 %v1058
      %v1101 = vunpack.c.l.b16 %v1059
      %v1102 = vunpack.c.l.b16 %v1060
      %v1103 = vunpack.c.l.b16 %v1061
      %v1104 = vunpack.c.l.b16 %v1062
      %v1105 = vunpack.c.l.b16 %v1063
      %v1106 = vunpack.c.l.b16 %v1064
      %v1107 = vunpack.c.l.b16 %v1065
      %v1108 = vunpack.c.l.b16 %v1066
      %v1109 = vunpack.c.l.b16 %v1067
      %v1110 = vunpack.c.l.b16 %v1068
      %v1111 = vunpack.c.l.b16 %v1069
      %v1112 = vunpack.c.l.b16 %v1070
      %v1113 = vunpack.c.l.b16 %v1071
      %v1114 = vunpack.c.l.b16 %v1072
      %v1115 = vunpack.c.l.b16 %v1073
      %v1116 = vunpack.c.l.b16 %v1074
      %v1117 = vpack.c.b16 %v1100, %v1099
      %v1118 = vpack.c.b16 %v1102, %v1101
      %v1119 = vpack.c.b16 %v1104, %v1103
      %v1120 = vpack.c.b16 %v1106, %v1105
      %v1121 = vpack.c.b16 %v1108, %v1107
      %v1122 = vpack.c.b16 %v1110, %v1109
      %v1123 = vpack.c.b16 %v1112, %v1111
      %v1124 = vpack.c.b16 %v1114, %v1113
      %v1125 = vpack.c.b16 %v1116, %v1115
      %v1136 = vsel %vm275, %v1079, 0
      %1138 = vmatprep.subr.bf16.mxu0 0
      %1139 = vmatpush1.bf16.msra.mxu0 %v1124
      %1140 = vmatprep.subr.bf16.mxu0 0
      %1141 = vmatpush1.bf16.msra.mxu0 %v1123
      %1142 = vmatprep.subr.bf16.mxu0 0
      %1143 = vmatpush1.bf16.msra.mxu0 %v1122
      %1144 = vmatprep.subr.bf16.mxu0 0
      %1145 = vmatpush1.bf16.msra.mxu0 %v1121
      %1146 = vmatprep.subr.bf16.mxu0 0
      %1147 = vmatpush1.bf16.msra.mxu0 %v1120
      %1148 = vmatprep.subr.bf16.mxu0 0
      %1149 = vmatpush1.bf16.msra.mxu0 %v1119
      %1150 = vmatprep.subr.bf16.mxu0 0
      %1151 = vmatpush1.bf16.msra.mxu0 %v1118
      %1152 = vmatprep.subr.bf16.mxu0 0
      %1153 = vmatpush1.bf16.msra.mxu0 %v1117
      %1154 = vmatprep.subr.bf16.mxu0 0
      %1155 = vmatpush2.bf16.msra.mxu0 0
      %1156 = vmatprep.subr.bf16.mxu0 0
      %1157 = vmatpush2.bf16.msra.mxu0 0
      %1158 = vmatprep.subr.bf16.mxu0 0
      %1159 = vmatpush2.bf16.msra.mxu0 0
      %1160 = vmatprep.subr.bf16.mxu0 0
      %1161 = vmatpush2.bf16.msra.mxu0 0
      %1162 = vmatprep.subr.bf16.mxu0 0
      %1163 = vmatpush2.bf16.msra.mxu0 0
      %1164 = vmatprep.subr.bf16.mxu0 0
      %1165 = vmatpush2.bf16.msra.mxu0 0
      %1166 = vmatprep.subr.bf16.mxu0 0
      %1167 = vmatpush2.bf16.msra.mxu0 0
      %1168 = vmatprep.subr.bf16.mxu0 0
      %1169 = vmatpush2.bf16.msra.mxu0 %v1125
      %1170 = vmatprep.mubr.bf16.mxu0 %v1136
      %1171 = vmatmul.mubr.bf16.gmra.mxu0 %v1078
      %v1172 = vpop.f32.mrf.mxu0
      %v1173 = vadd.f32 0.0, %v1172
      %v1174 = vpop.f32.mrf.mxu0
      %v1175 = vpop.f32.mrf.mxu0
      %v1176 = vpop.f32.mrf.mxu0
      %1177 = vdwg.mxu0
      %v1178 = vadd.f32 %v1051, %v1173
      %v1179 = vld [vmem:[%s550] sm:$0xff]
      %v1180 = vld [vmem:[%s683] sm:$0xf]
      %v1181 = vld [vmem:[%s683 + $0x4] sm:$0xf]
      %v1182 = vld [vmem:[%s683 + $0x8] sm:$0xf]
      %v1183 = vld [vmem:[%s683 + $0xc] sm:$0xf]
      %v1184 = vld [vmem:[%s683 + $0x10] sm:$0xf]
      %v1185 = vld [vmem:[%s683 + $0x14] sm:$0xf]
      %v1186 = vld [vmem:[%s683 + $0x18] sm:$0xf]
      %v1187 = vld [vmem:[%s683 + $0x1c] sm:$0xf]
      %v1188 = vld [vmem:[%s683 + $0x20] sm:$0xf]
      %v1189 = vld [vmem:[%s683 + $0x24] sm:$0xf]
      %v1190 = vld [vmem:[%s683 + $0x28] sm:$0xf]
      %v1191 = vld [vmem:[%s683 + $0x2c] sm:$0xf]
      %v1192 = vld [vmem:[%s683 + $0x30] sm:$0xf]
      %v1193 = vld [vmem:[%s683 + $0x34] sm:$0xf]
      %v1194 = vld [vmem:[%s683 + $0x38] sm:$0xf]
      %v1195 = vld [vmem:[%s683 + $0x3c] sm:$0xf]
      %v1196 = vld [vmem:[%s683 + $0x40] sm:$0xf]
      %v1197 = vld [vmem:[%s683 + $0x44] sm:$0xf]
      %v1199 = vunpack.c.l.b16 %v1179
      %v1200 = vunpack.c.h.b16 %v1179
      %v1201 = vpack.c.b16 %v1199, %v1199
      %v1202 = vpack.c.b16 %v1200, %v1200
      %v1222 = vunpack.c.l.b16 %v1180
      %v1223 = vunpack.c.l.b16 %v1181
      %v1224 = vunpack.c.l.b16 %v1182
      %v1225 = vunpack.c.l.b16 %v1183
      %v1226 = vunpack.c.l.b16 %v1184
      %v1227 = vunpack.c.l.b16 %v1185
      %v1228 = vunpack.c.l.b16 %v1186
      %v1229 = vunpack.c.l.b16 %v1187
      %v1230 = vunpack.c.l.b16 %v1188
      %v1231 = vunpack.c.l.b16 %v1189
      %v1232 = vunpack.c.l.b16 %v1190
      %v1233 = vunpack.c.l.b16 %v1191
      %v1234 = vunpack.c.l.b16 %v1192
      %v1235 = vunpack.c.l.b16 %v1193
      %v1236 = vunpack.c.l.b16 %v1194
      %v1237 = vunpack.c.l.b16 %v1195
      %v1238 = vunpack.c.l.b16 %v1196
      %v1239 = vunpack.c.l.b16 %v1197
      %v1240 = vpack.c.b16 %v1223, %v1222
      %v1241 = vpack.c.b16 %v1225, %v1224
      %v1242 = vpack.c.b16 %v1227, %v1226
      %v1243 = vpack.c.b16 %v1229, %v1228
      %v1244 = vpack.c.b16 %v1231, %v1230
      %v1245 = vpack.c.b16 %v1233, %v1232
      %v1246 = vpack.c.b16 %v1235, %v1234
      %v1247 = vpack.c.b16 %v1237, %v1236
      %v1248 = vpack.c.b16 %v1239, %v1238
      %v1259 = vsel %vm275, %v1202, 0
      %1261 = vmatprep.subr.bf16.mxu0 0
      %1262 = vmatpush1.bf16.msra.mxu0 %v1247
      %1263 = vmatprep.subr.bf16.mxu0 0
      %1264 = vmatpush1.bf16.msra.mxu0 %v1246
      %1265 = vmatprep.subr.bf16.mxu0 0
      %1266 = vmatpush1.bf16.msra.mxu0 %v1245
      %1267 = vmatprep.subr.bf16.mxu0 0
      %1268 = vmatpush1.bf16.msra.mxu0 %v1244
      %1269 = vmatprep.subr.bf16.mxu0 0
      %1270 = vmatpush1.bf16.msra.mxu0 %v1243
      %1271 = vmatprep.subr.bf16.mxu0 0
      %1272 = vmatpush1.bf16.msra.mxu0 %v1242
      %1273 = vmatprep.subr.bf16.mxu0 0
      %1274 = vmatpush1.bf16.msra.mxu0 %v1241
      %1275 = vmatprep.subr.bf16.mxu0 0
      %1276 = vmatpush1.bf16.msra.mxu0 %v1240
      %1277 = vmatprep.subr.bf16.mxu0 0
      %1278 = vmatpush2.bf16.msra.mxu0 0
      %1279 = vmatprep.subr.bf16.mxu0 0
      %1280 = vmatpush2.bf16.msra.mxu0 0
      %1281 = vmatprep.subr.bf16.mxu0 0
      %1282 = vmatpush2.bf16.msra.mxu0 0
      %1283 = vmatprep.subr.bf16.mxu0 0
      %1284 = vmatpush2.bf16.msra.mxu0 0
      %1285 = vmatprep.subr.bf16.mxu0 0
      %1286 = vmatpush2.bf16.msra.mxu0 0
      %1287 = vmatprep.subr.bf16.mxu0 0
      %1288 = vmatpush2.bf16.msra.mxu0 0
      %1289 = vmatprep.subr.bf16.mxu0 0
      %1290 = vmatpush2.bf16.msra.mxu0 0
      %1291 = vmatprep.subr.bf16.mxu0 0
      %1292 = vmatpush2.bf16.msra.mxu0 %v1248
      %1293 = vmatprep.mubr.bf16.mxu0 %v1259
      %1294 = vmatmul.mubr.bf16.gmra.mxu0 %v1201
      %v1295 = vpop.f32.mrf.mxu0
      %v1296 = vadd.f32 0.0, %v1295
      %v1297 = vpop.f32.mrf.mxu0
      %v1298 = vpop.f32.mrf.mxu0
      %v1299 = vpop.f32.mrf.mxu0
      %1300 = vdwg.mxu0
      %v1301 = vadd.f32 %v1178, %v1296
      %v1302 = vld [vmem:[%s678] sm:$0xff]
      %s1303 = sadd.s32 %s168, 5
      %s1304 = smul.u32 %s1303, 18
      %s1305 = smul.addr %s1304, 4
      %s1306 = scalar_lea.vmem %s156, %s1305
      %v1307 = vld [vmem:[%s1306] sm:$0xf]
      %v1308 = vld [vmem:[%s1306 + $0x4] sm:$0xf]
      %v1309 = vld [vmem:[%s1306 + $0x8] sm:$0xf]
      %v1310 = vld [vmem:[%s1306 + $0xc] sm:$0xf]
      %v1311 = vld [vmem:[%s1306 + $0x10] sm:$0xf]
      %v1312 = vld [vmem:[%s1306 + $0x14] sm:$0xf]
      %v1313 = vld [vmem:[%s1306 + $0x18] sm:$0xf]
      %v1314 = vld [vmem:[%s1306 + $0x1c] sm:$0xf]
      %v1315 = vld [vmem:[%s1306 + $0x20] sm:$0xf]
      %v1316 = vld [vmem:[%s1306 + $0x24] sm:$0xf]
      %v1317 = vld [vmem:[%s1306 + $0x28] sm:$0xf]
      %v1318 = vld [vmem:[%s1306 + $0x2c] sm:$0xf]
      %v1319 = vld [vmem:[%s1306 + $0x30] sm:$0xf]
      %v1320 = vld [vmem:[%s1306 + $0x34] sm:$0xf]
      %v1321 = vld [vmem:[%s1306 + $0x38] sm:$0xf]
      %v1322 = vld [vmem:[%s1306 + $0x3c] sm:$0xf]
      %v1323 = vld [vmem:[%s1306 + $0x40] sm:$0xf]
      %v1324 = vld [vmem:[%s1306 + $0x44] sm:$0xf]
      %v1326 = vunpack.c.l.b16 %v1302
      %v1327 = vunpack.c.h.b16 %v1302
      %v1328 = vpack.c.b16 %v1326, %v1326
      %v1329 = vpack.c.b16 %v1327, %v1327
      %v1349 = vunpack.c.l.b16 %v1307
      %v1350 = vunpack.c.l.b16 %v1308
      %v1351 = vunpack.c.l.b16 %v1309
      %v1352 = vunpack.c.l.b16 %v1310
      %v1353 = vunpack.c.l.b16 %v1311
      %v1354 = vunpack.c.l.b16 %v1312
      %v1355 = vunpack.c.l.b16 %v1313
      %v1356 = vunpack.c.l.b16 %v1314
      %v1357 = vunpack.c.l.b16 %v1315
      %v1358 = vunpack.c.l.b16 %v1316
      %v1359 = vunpack.c.l.b16 %v1317
      %v1360 = vunpack.c.l.b16 %v1318
      %v1361 = vunpack.c.l.b16 %v1319
      %v1362 = vunpack.c.l.b16 %v1320
      %v1363 = vunpack.c.l.b16 %v1321
      %v1364 = vunpack.c.l.b16 %v1322
      %v1365 = vunpack.c.l.b16 %v1323
      %v1366 = vunpack.c.l.b16 %v1324
      %v1367 = vpack.c.b16 %v1350, %v1349
      %v1368 = vpack.c.b16 %v1352, %v1351
      %v1369 = vpack.c.b16 %v1354, %v1353
      %v1370 = vpack.c.b16 %v1356, %v1355
      %v1371 = vpack.c.b16 %v1358, %v1357
      %v1372 = vpack.c.b16 %v1360, %v1359
      %v1373 = vpack.c.b16 %v1362, %v1361
      %v1374 = vpack.c.b16 %v1364, %v1363
      %v1375 = vpack.c.b16 %v1366, %v1365
      %v1386 = vsel %vm275, %v1329, 0
      %1388 = vmatprep.subr.bf16.mxu0 0
      %1389 = vmatpush1.bf16.msra.mxu0 %v1374
      %1390 = vmatprep.subr.bf16.mxu0 0
      %1391 = vmatpush1.bf16.msra.mxu0 %v1373
      %1392 = vmatprep.subr.bf16.mxu0 0
      %1393 = vmatpush1.bf16.msra.mxu0 %v1372
      %1394 = vmatprep.subr.bf16.mxu0 0
      %1395 = vmatpush1.bf16.msra.mxu0 %v1371
      %1396 = vmatprep.subr.bf16.mxu0 0
      %1397 = vmatpush1.bf16.msra.mxu0 %v1370
      %1398 = vmatprep.subr.bf16.mxu0 0
      %1399 = vmatpush1.bf16.msra.mxu0 %v1369
      %1400 = vmatprep.subr.bf16.mxu0 0
      %1401 = vmatpush1.bf16.msra.mxu0 %v1368
      %1402 = vmatprep.subr.bf16.mxu0 0
      %1403 = vmatpush1.bf16.msra.mxu0 %v1367
      %1404 = vmatprep.subr.bf16.mxu0 0
      %1405 = vmatpush2.bf16.msra.mxu0 0
      %1406 = vmatprep.subr.bf16.mxu0 0
      %1407 = vmatpush2.bf16.msra.mxu0 0
      %1408 = vmatprep.subr.bf16.mxu0 0
      %1409 = vmatpush2.bf16.msra.mxu0 0
      %1410 = vmatprep.subr.bf16.mxu0 0
      %1411 = vmatpush2.bf16.msra.mxu0 0
      %1412 = vmatprep.subr.bf16.mxu0 0
      %1413 = vmatpush2.bf16.msra.mxu0 0
      %1414 = vmatprep.subr.bf16.mxu0 0
      %1415 = vmatpush2.bf16.msra.mxu0 0
      %1416 = vmatprep.subr.bf16.mxu0 0
      %1417 = vmatpush2.bf16.msra.mxu0 0
      %1418 = vmatprep.subr.bf16.mxu0 0
      %1419 = vmatpush2.bf16.msra.mxu0 %v1375
      %1420 = vmatprep.mubr.bf16.mxu0 %v1386
      %1421 = vmatmul.mubr.bf16.gmra.mxu0 %v1328
      %v1422 = vpop.f32.mrf.mxu0
      %v1423 = vadd.f32 0.0, %v1422
      %v1424 = vpop.f32.mrf.mxu0
      %v1425 = vpop.f32.mrf.mxu0
      %v1426 = vpop.f32.mrf.mxu0
      %1427 = vdwg.mxu0
      %v1428 = vadd.f32 %v1301, %v1423
      %v1429 = vadd.f32 %v1428, 3.0
      %v1430 = vmax.f32 %v1429, 0.0
      %v1431 = vmin.f32 %v1430, 6.0
      %v1432 = vmul.f32 %v1428, %v1431
      %v1433 = vmul.f32 %v1432, 0.16666667
      %s1434 = scalar_lea.vmem %s165, 8
      %1435 = vst [vmem:[%s1434] sm:$0xff] %v1433
      %v1436 = vld [vmem:[%s1] sm:$0xff]
      %v1437 = vld [vmem:[%s427] sm:$0xf]
      %v1438 = vld [vmem:[%s427 + $0x4] sm:$0xf]
      %v1439 = vld [vmem:[%s427 + $0x8] sm:$0xf]
      %v1440 = vld [vmem:[%s427 + $0xc] sm:$0xf]
      %v1441 = vld [vmem:[%s427 + $0x10] sm:$0xf]
      %v1442 = vld [vmem:[%s427 + $0x14] sm:$0xf]
      %v1443 = vld [vmem:[%s427 + $0x18] sm:$0xf]
      %v1444 = vld [vmem:[%s427 + $0x1c] sm:$0xf]
      %v1445 = vld [vmem:[%s427 + $0x20] sm:$0xf]
      %v1446 = vld [vmem:[%s427 + $0x24] sm:$0xf]
      %v1447 = vld [vmem:[%s427 + $0x28] sm:$0xf]
      %v1448 = vld [vmem:[%s427 + $0x2c] sm:$0xf]
      %v1449 = vld [vmem:[%s427 + $0x30] sm:$0xf]
      %v1450 = vld [vmem:[%s427 + $0x34] sm:$0xf]
      %v1451 = vld [vmem:[%s427 + $0x38] sm:$0xf]
      %v1452 = vld [vmem:[%s427 + $0x3c] sm:$0xf]
      %v1453 = vld [vmem:[%s427 + $0x40] sm:$0xf]
      %v1454 = vld [vmem:[%s427 + $0x44] sm:$0xf]
      %v1455 = vld [vmem:[%s191] sm:$0xff]
      %v1456 = vld [vmem:[%s555] sm:$0xf]
      %v1457 = vld [vmem:[%s555 + $0x4] sm:$0xf]
      %v1458 = vld [vmem:[%s555 + $0x8] sm:$0xf]
      %v1459 = vld [vmem:[%s555 + $0xc] sm:$0xf]
      %v1460 = vld [vmem:[%s555 + $0x10] sm:$0xf]
      %v1461 = vld [vmem:[%s555 + $0x14] sm:$0xf]
      %v1462 = vld [vmem:[%s555 + $0x18] sm:$0xf]
      %v1463 = vld [vmem:[%s555 + $0x1c] sm:$0xf]
      %v1464 = vld [vmem:[%s555 + $0x20] sm:$0xf]
      %v1465 = vld [vmem:[%s555 + $0x24] sm:$0xf]
      %v1466 = vld [vmem:[%s555 + $0x28] sm:$0xf]
      %v1467 = vld [vmem:[%s555 + $0x2c] sm:$0xf]
      %v1468 = vld [vmem:[%s555 + $0x30] sm:$0xf]
      %v1469 = vld [vmem:[%s555 + $0x34] sm:$0xf]
      %v1470 = vld [vmem:[%s555 + $0x38] sm:$0xf]
      %v1471 = vld [vmem:[%s555 + $0x3c] sm:$0xf]
      %v1472 = vld [vmem:[%s555 + $0x40] sm:$0xf]
      %v1473 = vld [vmem:[%s555 + $0x44] sm:$0xf]
      %v1475 = vunpack.c.l.b16 %v1455
      %v1476 = vunpack.c.h.b16 %v1455
      %v1477 = vpack.c.b16 %v1475, %v1475
      %v1478 = vpack.c.b16 %v1476, %v1476
      %v1498 = vunpack.c.l.b16 %v1456
      %v1499 = vunpack.c.l.b16 %v1457
      %v1500 = vunpack.c.l.b16 %v1458
      %v1501 = vunpack.c.l.b16 %v1459
      %v1502 = vunpack.c.l.b16 %v1460
      %v1503 = vunpack.c.l.b16 %v1461
      %v1504 = vunpack.c.l.b16 %v1462
      %v1505 = vunpack.c.l.b16 %v1463
      %v1506 = vunpack.c.l.b16 %v1464
      %v1507 = vunpack.c.l.b16 %v1465
      %v1508 = vunpack.c.l.b16 %v1466
      %v1509 = vunpack.c.l.b16 %v1467
      %v1510 = vunpack.c.l.b16 %v1468
      %v1511 = vunpack.c.l.b16 %v1469
      %v1512 = vunpack.c.l.b16 %v1470
      %v1513 = vunpack.c.l.b16 %v1471
      %v1514 = vunpack.c.l.b16 %v1472
      %v1515 = vunpack.c.l.b16 %v1473
      %v1516 = vpack.c.b16 %v1499, %v1498
      %v1517 = vpack.c.b16 %v1501, %v1500
      %v1518 = vpack.c.b16 %v1503, %v1502
      %v1519 = vpack.c.b16 %v1505, %v1504
      %v1520 = vpack.c.b16 %v1507, %v1506
      %v1521 = vpack.c.b16 %v1509, %v1508
      %v1522 = vpack.c.b16 %v1511, %v1510
      %v1523 = vpack.c.b16 %v1513, %v1512
      %v1524 = vpack.c.b16 %v1515, %v1514
      %v1535 = vsel %vm275, %v1478, 0
      %1537 = vmatprep.subr.bf16.mxu0 0
      %1538 = vmatpush1.bf16.msra.mxu0 %v1523
      %1539 = vmatprep.subr.bf16.mxu0 0
      %1540 = vmatpush1.bf16.msra.mxu0 %v1522
      %1541 = vmatprep.subr.bf16.mxu0 0
      %1542 = vmatpush1.bf16.msra.mxu0 %v1521
      %1543 = vmatprep.subr.bf16.mxu0 0
      %1544 = vmatpush1.bf16.msra.mxu0 %v1520
      %1545 = vmatprep.subr.bf16.mxu0 0
      %1546 = vmatpush1.bf16.msra.mxu0 %v1519
      %1547 = vmatprep.subr.bf16.mxu0 0
      %1548 = vmatpush1.bf16.msra.mxu0 %v1518
      %1549 = vmatprep.subr.bf16.mxu0 0
      %1550 = vmatpush1.bf16.msra.mxu0 %v1517
      %1551 = vmatprep.subr.bf16.mxu0 0
      %1552 = vmatpush1.bf16.msra.mxu0 %v1516
      %1553 = vmatprep.subr.bf16.mxu0 0
      %1554 = vmatpush2.bf16.msra.mxu0 0
      %1555 = vmatprep.subr.bf16.mxu0 0
      %1556 = vmatpush2.bf16.msra.mxu0 0
      %1557 = vmatprep.subr.bf16.mxu0 0
      %1558 = vmatpush2.bf16.msra.mxu0 0
      %1559 = vmatprep.subr.bf16.mxu0 0
      %1560 = vmatpush2.bf16.msra.mxu0 0
      %1561 = vmatprep.subr.bf16.mxu0 0
      %1562 = vmatpush2.bf16.msra.mxu0 0
      %1563 = vmatprep.subr.bf16.mxu0 0
      %1564 = vmatpush2.bf16.msra.mxu0 0
      %1565 = vmatprep.subr.bf16.mxu0 0
      %1566 = vmatpush2.bf16.msra.mxu0 0
      %1567 = vmatprep.subr.bf16.mxu0 0
      %1568 = vmatpush2.bf16.msra.mxu0 %v1524
      %1569 = vmatprep.mubr.bf16.mxu0 %v1535
      %1570 = vmatmul.mubr.bf16.gmra.mxu0 %v1477
      %v1571 = vpop.f32.mrf.mxu0
      %v1572 = vadd.f32 0.0, %v1571
      %v1573 = vpop.f32.mrf.mxu0
      %v1574 = vpop.f32.mrf.mxu0
      %v1575 = vpop.f32.mrf.mxu0
      %1576 = vdwg.mxu0
      %v1578 = vunpack.c.l.b16 %v1436
      %v1579 = vunpack.c.h.b16 %v1436
      %v1580 = vpack.c.b16 %v1578, %v1578
      %v1581 = vpack.c.b16 %v1579, %v1579
      %v1601 = vunpack.c.l.b16 %v1437
      %v1602 = vunpack.c.l.b16 %v1438
      %v1603 = vunpack.c.l.b16 %v1439
      %v1604 = vunpack.c.l.b16 %v1440
      %v1605 = vunpack.c.l.b16 %v1441
      %v1606 = vunpack.c.l.b16 %v1442
      %v1607 = vunpack.c.l.b16 %v1443
      %v1608 = vunpack.c.l.b16 %v1444
      %v1609 = vunpack.c.l.b16 %v1445
      %v1610 = vunpack.c.l.b16 %v1446
      %v1611 = vunpack.c.l.b16 %v1447
      %v1612 = vunpack.c.l.b16 %v1448
      %v1613 = vunpack.c.l.b16 %v1449
      %v1614 = vunpack.c.l.b16 %v1450
      %v1615 = vunpack.c.l.b16 %v1451
      %v1616 = vunpack.c.l.b16 %v1452
      %v1617 = vunpack.c.l.b16 %v1453
      %v1618 = vunpack.c.l.b16 %v1454
      %v1619 = vpack.c.b16 %v1602, %v1601
      %v1620 = vpack.c.b16 %v1604, %v1603
      %v1621 = vpack.c.b16 %v1606, %v1605
      %v1622 = vpack.c.b16 %v1608, %v1607
      %v1623 = vpack.c.b16 %v1610, %v1609
      %v1624 = vpack.c.b16 %v1612, %v1611
      %v1625 = vpack.c.b16 %v1614, %v1613
      %v1626 = vpack.c.b16 %v1616, %v1615
      %v1627 = vpack.c.b16 %v1618, %v1617
      %v1638 = vsel %vm275, %v1581, 0
      %1640 = vmatprep.subr.bf16.mxu0 0
      %1641 = vmatpush1.bf16.msra.mxu0 %v1626
      %1642 = vmatprep.subr.bf16.mxu0 0
      %1643 = vmatpush1.bf16.msra.mxu0 %v1625
      %1644 = vmatprep.subr.bf16.mxu0 0
      %1645 = vmatpush1.bf16.msra.mxu0 %v1624
      %1646 = vmatprep.subr.bf16.mxu0 0
      %1647 = vmatpush1.bf16.msra.mxu0 %v1623
      %1648 = vmatprep.subr.bf16.mxu0 0
      %1649 = vmatpush1.bf16.msra.mxu0 %v1622
      %1650 = vmatprep.subr.bf16.mxu0 0
      %1651 = vmatpush1.bf16.msra.mxu0 %v1621
      %1652 = vmatprep.subr.bf16.mxu0 0
      %1653 = vmatpush1.bf16.msra.mxu0 %v1620
      %1654 = vmatprep.subr.bf16.mxu0 0
      %1655 = vmatpush1.bf16.msra.mxu0 %v1619
      %1656 = vmatprep.subr.bf16.mxu0 0
      %1657 = vmatpush2.bf16.msra.mxu0 0
      %1658 = vmatprep.subr.bf16.mxu0 0
      %1659 = vmatpush2.bf16.msra.mxu0 0
      %1660 = vmatprep.subr.bf16.mxu0 0
      %1661 = vmatpush2.bf16.msra.mxu0 0
      %1662 = vmatprep.subr.bf16.mxu0 0
      %1663 = vmatpush2.bf16.msra.mxu0 0
      %1664 = vmatprep.subr.bf16.mxu0 0
      %1665 = vmatpush2.bf16.msra.mxu0 0
      %1666 = vmatprep.subr.bf16.mxu0 0
      %1667 = vmatpush2.bf16.msra.mxu0 0
      %1668 = vmatprep.subr.bf16.mxu0 0
      %1669 = vmatpush2.bf16.msra.mxu0 0
      %1670 = vmatprep.subr.bf16.mxu0 0
      %1671 = vmatpush2.bf16.msra.mxu0 %v1627
      %1672 = vmatprep.mubr.bf16.mxu0 %v1638
      %1673 = vmatmul.mubr.bf16.gmra.mxu0 %v1580
      %v1674 = vpop.f32.mrf.mxu0
      %v1675 = vadd.f32 %v1572, %v1674
      %v1676 = vpop.f32.mrf.mxu0
      %v1677 = vpop.f32.mrf.mxu0
      %v1678 = vpop.f32.mrf.mxu0
      %1679 = vdwg.mxu0
      %v1680 = vld [vmem:[%s422] sm:$0xff]
      %v1681 = vld [vmem:[%s683] sm:$0xf]
      %v1682 = vld [vmem:[%s683 + $0x4] sm:$0xf]
      %v1683 = vld [vmem:[%s683 + $0x8] sm:$0xf]
      %v1684 = vld [vmem:[%s683 + $0xc] sm:$0xf]
      %v1685 = vld [vmem:[%s683 + $0x10] sm:$0xf]
      %v1686 = vld [vmem:[%s683 + $0x14] sm:$0xf]
      %v1687 = vld [vmem:[%s683 + $0x18] sm:$0xf]
      %v1688 = vld [vmem:[%s683 + $0x1c] sm:$0xf]
      %v1689 = vld [vmem:[%s683 + $0x20] sm:$0xf]
      %v1690 = vld [vmem:[%s683 + $0x24] sm:$0xf]
      %v1691 = vld [vmem:[%s683 + $0x28] sm:$0xf]
      %v1692 = vld [vmem:[%s683 + $0x2c] sm:$0xf]
      %v1693 = vld [vmem:[%s683 + $0x30] sm:$0xf]
      %v1694 = vld [vmem:[%s683 + $0x34] sm:$0xf]
      %v1695 = vld [vmem:[%s683 + $0x38] sm:$0xf]
      %v1696 = vld [vmem:[%s683 + $0x3c] sm:$0xf]
      %v1697 = vld [vmem:[%s683 + $0x40] sm:$0xf]
      %v1698 = vld [vmem:[%s683 + $0x44] sm:$0xf]
      %v1700 = vunpack.c.l.b16 %v1680
      %v1701 = vunpack.c.h.b16 %v1680
      %v1702 = vpack.c.b16 %v1700, %v1700
      %v1703 = vpack.c.b16 %v1701, %v1701
      %v1723 = vunpack.c.l.b16 %v1681
      %v1724 = vunpack.c.l.b16 %v1682
      %v1725 = vunpack.c.l.b16 %v1683
      %v1726 = vunpack.c.l.b16 %v1684
      %v1727 = vunpack.c.l.b16 %v1685
      %v1728 = vunpack.c.l.b16 %v1686
      %v1729 = vunpack.c.l.b16 %v1687
      %v1730 = vunpack.c.l.b16 %v1688
      %v1731 = vunpack.c.l.b16 %v1689
      %v1732 = vunpack.c.l.b16 %v1690
      %v1733 = vunpack.c.l.b16 %v1691
      %v1734 = vunpack.c.l.b16 %v1692
      %v1735 = vunpack.c.l.b16 %v1693
      %v1736 = vunpack.c.l.b16 %v1694
      %v1737 = vunpack.c.l.b16 %v1695
      %v1738 = vunpack.c.l.b16 %v1696
      %v1739 = vunpack.c.l.b16 %v1697
      %v1740 = vunpack.c.l.b16 %v1698
      %v1741 = vpack.c.b16 %v1724, %v1723
      %v1742 = vpack.c.b16 %v1726, %v1725
      %v1743 = vpack.c.b16 %v1728, %v1727
      %v1744 = vpack.c.b16 %v1730, %v1729
      %v1745 = vpack.c.b16 %v1732, %v1731
      %v1746 = vpack.c.b16 %v1734, %v1733
      %v1747 = vpack.c.b16 %v1736, %v1735
      %v1748 = vpack.c.b16 %v1738, %v1737
      %v1749 = vpack.c.b16 %v1740, %v1739
      %v1760 = vsel %vm275, %v1703, 0
      %1762 = vmatprep.subr.bf16.mxu0 0
      %1763 = vmatpush1.bf16.msra.mxu0 %v1748
      %1764 = vmatprep.subr.bf16.mxu0 0
      %1765 = vmatpush1.bf16.msra.mxu0 %v1747
      %1766 = vmatprep.subr.bf16.mxu0 0
      %1767 = vmatpush1.bf16.msra.mxu0 %v1746
      %1768 = vmatprep.subr.bf16.mxu0 0
      %1769 = vmatpush1.bf16.msra.mxu0 %v1745
      %1770 = vmatprep.subr.bf16.mxu0 0
      %1771 = vmatpush1.bf16.msra.mxu0 %v1744
      %1772 = vmatprep.subr.bf16.mxu0 0
      %1773 = vmatpush1.bf16.msra.mxu0 %v1743
      %1774 = vmatprep.subr.bf16.mxu0 0
      %1775 = vmatpush1.bf16.msra.mxu0 %v1742
      %1776 = vmatprep.subr.bf16.mxu0 0
      %1777 = vmatpush1.bf16.msra.mxu0 %v1741
      %1778 = vmatprep.subr.bf16.mxu0 0
      %1779 = vmatpush2.bf16.msra.mxu0 0
      %1780 = vmatprep.subr.bf16.mxu0 0
      %1781 = vmatpush2.bf16.msra.mxu0 0
      %1782 = vmatprep.subr.bf16.mxu0 0
      %1783 = vmatpush2.bf16.msra.mxu0 0
      %1784 = vmatprep.subr.bf16.mxu0 0
      %1785 = vmatpush2.bf16.msra.mxu0 0
      %1786 = vmatprep.subr.bf16.mxu0 0
      %1787 = vmatpush2.bf16.msra.mxu0 0
      %1788 = vmatprep.subr.bf16.mxu0 0
      %1789 = vmatpush2.bf16.msra.mxu0 0
      %1790 = vmatprep.subr.bf16.mxu0 0
      %1791 = vmatpush2.bf16.msra.mxu0 0
      %1792 = vmatprep.subr.bf16.mxu0 0
      %1793 = vmatpush2.bf16.msra.mxu0 %v1749
      %1794 = vmatprep.mubr.bf16.mxu0 %v1760
      %1795 = vmatmul.mubr.bf16.gmra.mxu0 %v1702
      %v1796 = vpop.f32.mrf.mxu0
      %v1797 = vadd.f32 0.0, %v1796
      %v1798 = vpop.f32.mrf.mxu0
      %v1799 = vpop.f32.mrf.mxu0
      %v1800 = vpop.f32.mrf.mxu0
      %1801 = vdwg.mxu0
      %v1802 = vadd.f32 %v1675, %v1797
      %v1803 = vld [vmem:[%s550] sm:$0xff]
      %v1804 = vld [vmem:[%s1306] sm:$0xf]
      %v1805 = vld [vmem:[%s1306 + $0x4] sm:$0xf]
      %v1806 = vld [vmem:[%s1306 + $0x8] sm:$0xf]
      %v1807 = vld [vmem:[%s1306 + $0xc] sm:$0xf]
      %v1808 = vld [vmem:[%s1306 + $0x10] sm:$0xf]
      %v1809 = vld [vmem:[%s1306 + $0x14] sm:$0xf]
      %v1810 = vld [vmem:[%s1306 + $0x18] sm:$0xf]
      %v1811 = vld [vmem:[%s1306 + $0x1c] sm:$0xf]
      %v1812 = vld [vmem:[%s1306 + $0x20] sm:$0xf]
      %v1813 = vld [vmem:[%s1306 + $0x24] sm:$0xf]
      %v1814 = vld [vmem:[%s1306 + $0x28] sm:$0xf]
      %v1815 = vld [vmem:[%s1306 + $0x2c] sm:$0xf]
      %v1816 = vld [vmem:[%s1306 + $0x30] sm:$0xf]
      %v1817 = vld [vmem:[%s1306 + $0x34] sm:$0xf]
      %v1818 = vld [vmem:[%s1306 + $0x38] sm:$0xf]
      %v1819 = vld [vmem:[%s1306 + $0x3c] sm:$0xf]
      %v1820 = vld [vmem:[%s1306 + $0x40] sm:$0xf]
      %v1821 = vld [vmem:[%s1306 + $0x44] sm:$0xf]
      %v1823 = vunpack.c.l.b16 %v1803
      %v1824 = vunpack.c.h.b16 %v1803
      %v1825 = vpack.c.b16 %v1823, %v1823
      %v1826 = vpack.c.b16 %v1824, %v1824
      %v1846 = vunpack.c.l.b16 %v1804
      %v1847 = vunpack.c.l.b16 %v1805
      %v1848 = vunpack.c.l.b16 %v1806
      %v1849 = vunpack.c.l.b16 %v1807
      %v1850 = vunpack.c.l.b16 %v1808
      %v1851 = vunpack.c.l.b16 %v1809
      %v1852 = vunpack.c.l.b16 %v1810
      %v1853 = vunpack.c.l.b16 %v1811
      %v1854 = vunpack.c.l.b16 %v1812
      %v1855 = vunpack.c.l.b16 %v1813
      %v1856 = vunpack.c.l.b16 %v1814
      %v1857 = vunpack.c.l.b16 %v1815
      %v1858 = vunpack.c.l.b16 %v1816
      %v1859 = vunpack.c.l.b16 %v1817
      %v1860 = vunpack.c.l.b16 %v1818
      %v1861 = vunpack.c.l.b16 %v1819
      %v1862 = vunpack.c.l.b16 %v1820
      %v1863 = vunpack.c.l.b16 %v1821
      %v1864 = vpack.c.b16 %v1847, %v1846
      %v1865 = vpack.c.b16 %v1849, %v1848
      %v1866 = vpack.c.b16 %v1851, %v1850
      %v1867 = vpack.c.b16 %v1853, %v1852
      %v1868 = vpack.c.b16 %v1855, %v1854
      %v1869 = vpack.c.b16 %v1857, %v1856
      %v1870 = vpack.c.b16 %v1859, %v1858
      %v1871 = vpack.c.b16 %v1861, %v1860
      %v1872 = vpack.c.b16 %v1863, %v1862
      %v1883 = vsel %vm275, %v1826, 0
      %1885 = vmatprep.subr.bf16.mxu0 0
      %1886 = vmatpush1.bf16.msra.mxu0 %v1871
      %1887 = vmatprep.subr.bf16.mxu0 0
      %1888 = vmatpush1.bf16.msra.mxu0 %v1870
      %1889 = vmatprep.subr.bf16.mxu0 0
      %1890 = vmatpush1.bf16.msra.mxu0 %v1869
      %1891 = vmatprep.subr.bf16.mxu0 0
      %1892 = vmatpush1.bf16.msra.mxu0 %v1868
      %1893 = vmatprep.subr.bf16.mxu0 0
      %1894 = vmatpush1.bf16.msra.mxu0 %v1867
      %1895 = vmatprep.subr.bf16.mxu0 0
      %1896 = vmatpush1.bf16.msra.mxu0 %v1866
      %1897 = vmatprep.subr.bf16.mxu0 0
      %1898 = vmatpush1.bf16.msra.mxu0 %v1865
      %1899 = vmatprep.subr.bf16.mxu0 0
      %1900 = vmatpush1.bf16.msra.mxu0 %v1864
      %1901 = vmatprep.subr.bf16.mxu0 0
      %1902 = vmatpush2.bf16.msra.mxu0 0
      %1903 = vmatprep.subr.bf16.mxu0 0
      %1904 = vmatpush2.bf16.msra.mxu0 0
      %1905 = vmatprep.subr.bf16.mxu0 0
      %1906 = vmatpush2.bf16.msra.mxu0 0
      %1907 = vmatprep.subr.bf16.mxu0 0
      %1908 = vmatpush2.bf16.msra.mxu0 0
      %1909 = vmatprep.subr.bf16.mxu0 0
      %1910 = vmatpush2.bf16.msra.mxu0 0
      %1911 = vmatprep.subr.bf16.mxu0 0
      %1912 = vmatpush2.bf16.msra.mxu0 0
      %1913 = vmatprep.subr.bf16.mxu0 0
      %1914 = vmatpush2.bf16.msra.mxu0 0
      %1915 = vmatprep.subr.bf16.mxu0 0
      %1916 = vmatpush2.bf16.msra.mxu0 %v1872
      %1917 = vmatprep.mubr.bf16.mxu0 %v1883
      %1918 = vmatmul.mubr.bf16.gmra.mxu0 %v1825
      %v1919 = vpop.f32.mrf.mxu0
      %v1920 = vadd.f32 0.0, %v1919
      %v1921 = vpop.f32.mrf.mxu0
      %v1922 = vpop.f32.mrf.mxu0
      %v1923 = vpop.f32.mrf.mxu0
      %1924 = vdwg.mxu0
      %v1925 = vadd.f32 %v1802, %v1920
      %v1926 = vld [vmem:[%s678] sm:$0xff]
      %s1927 = sadd.s32 %s168, 6
      %s1928 = smul.u32 %s1927, 18
      %s1929 = smul.addr %s1928, 4
      %s1930 = scalar_lea.vmem %s156, %s1929
      %v1931 = vld [vmem:[%s1930] sm:$0xf]
      %v1932 = vld [vmem:[%s1930 + $0x4] sm:$0xf]
      %v1933 = vld [vmem:[%s1930 + $0x8] sm:$0xf]
      %v1934 = vld [vmem:[%s1930 + $0xc] sm:$0xf]
      %v1935 = vld [vmem:[%s1930 + $0x10] sm:$0xf]
      %v1936 = vld [vmem:[%s1930 + $0x14] sm:$0xf]
      %v1937 = vld [vmem:[%s1930 + $0x18] sm:$0xf]
      %v1938 = vld [vmem:[%s1930 + $0x1c] sm:$0xf]
      %v1939 = vld [vmem:[%s1930 + $0x20] sm:$0xf]
      %v1940 = vld [vmem:[%s1930 + $0x24] sm:$0xf]
      %v1941 = vld [vmem:[%s1930 + $0x28] sm:$0xf]
      %v1942 = vld [vmem:[%s1930 + $0x2c] sm:$0xf]
      %v1943 = vld [vmem:[%s1930 + $0x30] sm:$0xf]
      %v1944 = vld [vmem:[%s1930 + $0x34] sm:$0xf]
      %v1945 = vld [vmem:[%s1930 + $0x38] sm:$0xf]
      %v1946 = vld [vmem:[%s1930 + $0x3c] sm:$0xf]
      %v1947 = vld [vmem:[%s1930 + $0x40] sm:$0xf]
      %v1948 = vld [vmem:[%s1930 + $0x44] sm:$0xf]
      %v1950 = vunpack.c.l.b16 %v1926
      %v1951 = vunpack.c.h.b16 %v1926
      %v1952 = vpack.c.b16 %v1950, %v1950
      %v1953 = vpack.c.b16 %v1951, %v1951
      %v1973 = vunpack.c.l.b16 %v1931
      %v1974 = vunpack.c.l.b16 %v1932
      %v1975 = vunpack.c.l.b16 %v1933
      %v1976 = vunpack.c.l.b16 %v1934
      %v1977 = vunpack.c.l.b16 %v1935
      %v1978 = vunpack.c.l.b16 %v1936
      %v1979 = vunpack.c.l.b16 %v1937
      %v1980 = vunpack.c.l.b16 %v1938
      %v1981 = vunpack.c.l.b16 %v1939
      %v1982 = vunpack.c.l.b16 %v1940
      %v1983 = vunpack.c.l.b16 %v1941
      %v1984 = vunpack.c.l.b16 %v1942
      %v1985 = vunpack.c.l.b16 %v1943
      %v1986 = vunpack.c.l.b16 %v1944
      %v1987 = vunpack.c.l.b16 %v1945
      %v1988 = vunpack.c.l.b16 %v1946
      %v1989 = vunpack.c.l.b16 %v1947
      %v1990 = vunpack.c.l.b16 %v1948
      %v1991 = vpack.c.b16 %v1974, %v1973
      %v1992 = vpack.c.b16 %v1976, %v1975
      %v1993 = vpack.c.b16 %v1978, %v1977
      %v1994 = vpack.c.b16 %v1980, %v1979
      %v1995 = vpack.c.b16 %v1982, %v1981
      %v1996 = vpack.c.b16 %v1984, %v1983
      %v1997 = vpack.c.b16 %v1986, %v1985
      %v1998 = vpack.c.b16 %v1988, %v1987
      %v1999 = vpack.c.b16 %v1990, %v1989
      %v2010 = vsel %vm275, %v1953, 0
      %2012 = vmatprep.subr.bf16.mxu0 0
      %2013 = vmatpush1.bf16.msra.mxu0 %v1998
      %2014 = vmatprep.subr.bf16.mxu0 0
      %2015 = vmatpush1.bf16.msra.mxu0 %v1997
      %2016 = vmatprep.subr.bf16.mxu0 0
      %2017 = vmatpush1.bf16.msra.mxu0 %v1996
      %2018 = vmatprep.subr.bf16.mxu0 0
      %2019 = vmatpush1.bf16.msra.mxu0 %v1995
      %2020 = vmatprep.subr.bf16.mxu0 0
      %2021 = vmatpush1.bf16.msra.mxu0 %v1994
      %2022 = vmatprep.subr.bf16.mxu0 0
      %2023 = vmatpush1.bf16.msra.mxu0 %v1993
      %2024 = vmatprep.subr.bf16.mxu0 0
      %2025 = vmatpush1.bf16.msra.mxu0 %v1992
      %2026 = vmatprep.subr.bf16.mxu0 0
      %2027 = vmatpush1.bf16.msra.mxu0 %v1991
      %2028 = vmatprep.subr.bf16.mxu0 0
      %2029 = vmatpush2.bf16.msra.mxu0 0
      %2030 = vmatprep.subr.bf16.mxu0 0
      %2031 = vmatpush2.bf16.msra.mxu0 0
      %2032 = vmatprep.subr.bf16.mxu0 0
      %2033 = vmatpush2.bf16.msra.mxu0 0
      %2034 = vmatprep.subr.bf16.mxu0 0
      %2035 = vmatpush2.bf16.msra.mxu0 0
      %2036 = vmatprep.subr.bf16.mxu0 0
      %2037 = vmatpush2.bf16.msra.mxu0 0
      %2038 = vmatprep.subr.bf16.mxu0 0
      %2039 = vmatpush2.bf16.msra.mxu0 0
      %2040 = vmatprep.subr.bf16.mxu0 0
      %2041 = vmatpush2.bf16.msra.mxu0 0
      %2042 = vmatprep.subr.bf16.mxu0 0
      %2043 = vmatpush2.bf16.msra.mxu0 %v1999
      %2044 = vmatprep.mubr.bf16.mxu0 %v2010
      %2045 = vmatmul.mubr.bf16.gmra.mxu0 %v1952
      %v2046 = vpop.f32.mrf.mxu0
      %v2047 = vadd.f32 0.0, %v2046
      %v2048 = vpop.f32.mrf.mxu0
      %v2049 = vpop.f32.mrf.mxu0
      %v2050 = vpop.f32.mrf.mxu0
      %2051 = vdwg.mxu0
      %v2052 = vadd.f32 %v1925, %v2047
      %v2053 = vadd.f32 %v2052, 3.0
      %v2054 = vmax.f32 %v2053, 0.0
      %v2055 = vmin.f32 %v2054, 6.0
      %v2056 = vmul.f32 %v2052, %v2055
      %v2057 = vmul.f32 %v2056, 0.16666667
      %s2058 = scalar_lea.vmem %s165, 16
      %2059 = vst [vmem:[%s2058] sm:$0xff] %v2057
      %v2060 = vld [vmem:[%s1] sm:$0xff]
      %v2061 = vld [vmem:[%s555] sm:$0xf]
      %v2062 = vld [vmem:[%s555 + $0x4] sm:$0xf]
      %v2063 = vld [vmem:[%s555 + $0x8] sm:$0xf]
      %v2064 = vld [vmem:[%s555 + $0xc] sm:$0xf]
      %v2065 = vld [vmem:[%s555 + $0x10] sm:$0xf]
      %v2066 = vld [vmem:[%s555 + $0x14] sm:$0xf]
      %v2067 = vld [vmem:[%s555 + $0x18] sm:$0xf]
      %v2068 = vld [vmem:[%s555 + $0x1c] sm:$0xf]
      %v2069 = vld [vmem:[%s555 + $0x20] sm:$0xf]
      %v2070 = vld [vmem:[%s555 + $0x24] sm:$0xf]
      %v2071 = vld [vmem:[%s555 + $0x28] sm:$0xf]
      %v2072 = vld [vmem:[%s555 + $0x2c] sm:$0xf]
      %v2073 = vld [vmem:[%s555 + $0x30] sm:$0xf]
      %v2074 = vld [vmem:[%s555 + $0x34] sm:$0xf]
      %v2075 = vld [vmem:[%s555 + $0x38] sm:$0xf]
      %v2076 = vld [vmem:[%s555 + $0x3c] sm:$0xf]
      %v2077 = vld [vmem:[%s555 + $0x40] sm:$0xf]
      %v2078 = vld [vmem:[%s555 + $0x44] sm:$0xf]
      %v2079 = vld [vmem:[%s191] sm:$0xff]
      %v2080 = vld [vmem:[%s683] sm:$0xf]
      %v2081 = vld [vmem:[%s683 + $0x4] sm:$0xf]
      %v2082 = vld [vmem:[%s683 + $0x8] sm:$0xf]
      %v2083 = vld [vmem:[%s683 + $0xc] sm:$0xf]
      %v2084 = vld [vmem:[%s683 + $0x10] sm:$0xf]
      %v2085 = vld [vmem:[%s683 + $0x14] sm:$0xf]
      %v2086 = vld [vmem:[%s683 + $0x18] sm:$0xf]
      %v2087 = vld [vmem:[%s683 + $0x1c] sm:$0xf]
      %v2088 = vld [vmem:[%s683 + $0x20] sm:$0xf]
      %v2089 = vld [vmem:[%s683 + $0x24] sm:$0xf]
      %v2090 = vld [vmem:[%s683 + $0x28] sm:$0xf]
      %v2091 = vld [vmem:[%s683 + $0x2c] sm:$0xf]
      %v2092 = vld [vmem:[%s683 + $0x30] sm:$0xf]
      %v2093 = vld [vmem:[%s683 + $0x34] sm:$0xf]
      %v2094 = vld [vmem:[%s683 + $0x38] sm:$0xf]
      %v2095 = vld [vmem:[%s683 + $0x3c] sm:$0xf]
      %v2096 = vld [vmem:[%s683 + $0x40] sm:$0xf]
      %v2097 = vld [vmem:[%s683 + $0x44] sm:$0xf]
      %v2099 = vunpack.c.l.b16 %v2079
      %v2100 = vunpack.c.h.b16 %v2079
      %v2101 = vpack.c.b16 %v2099, %v2099
      %v2102 = vpack.c.b16 %v2100, %v2100
      %v2122 = vunpack.c.l.b16 %v2080
      %v2123 = vunpack.c.l.b16 %v2081
      %v2124 = vunpack.c.l.b16 %v2082
      %v2125 = vunpack.c.l.b16 %v2083
      %v2126 = vunpack.c.l.b16 %v2084
      %v2127 = vunpack.c.l.b16 %v2085
      %v2128 = vunpack.c.l.b16 %v2086
      %v2129 = vunpack.c.l.b16 %v2087
      %v2130 = vunpack.c.l.b16 %v2088
      %v2131 = vunpack.c.l.b16 %v2089
      %v2132 = vunpack.c.l.b16 %v2090
      %v2133 = vunpack.c.l.b16 %v2091
      %v2134 = vunpack.c.l.b16 %v2092
      %v2135 = vunpack.c.l.b16 %v2093
      %v2136 = vunpack.c.l.b16 %v2094
      %v2137 = vunpack.c.l.b16 %v2095
      %v2138 = vunpack.c.l.b16 %v2096
      %v2139 = vunpack.c.l.b16 %v2097
      %v2140 = vpack.c.b16 %v2123, %v2122
      %v2141 = vpack.c.b16 %v2125, %v2124
      %v2142 = vpack.c.b16 %v2127, %v2126
      %v2143 = vpack.c.b16 %v2129, %v2128
      %v2144 = vpack.c.b16 %v2131, %v2130
      %v2145 = vpack.c.b16 %v2133, %v2132
      %v2146 = vpack.c.b16 %v2135, %v2134
      %v2147 = vpack.c.b16 %v2137, %v2136
      %v2148 = vpack.c.b16 %v2139, %v2138
      %v2159 = vsel %vm275, %v2102, 0
      %2161 = vmatprep.subr.bf16.mxu0 0
      %2162 = vmatpush1.bf16.msra.mxu0 %v2147
      %2163 = vmatprep.subr.bf16.mxu0 0
      %2164 = vmatpush1.bf16.msra.mxu0 %v2146
      %2165 = vmatprep.subr.bf16.mxu0 0
      %2166 = vmatpush1.bf16.msra.mxu0 %v2145
      %2167 = vmatprep.subr.bf16.mxu0 0
      %2168 = vmatpush1.bf16.msra.mxu0 %v2144
      %2169 = vmatprep.subr.bf16.mxu0 0
      %2170 = vmatpush1.bf16.msra.mxu0 %v2143
      %2171 = vmatprep.subr.bf16.mxu0 0
      %2172 = vmatpush1.bf16.msra.mxu0 %v2142
      %2173 = vmatprep.subr.bf16.mxu0 0
      %2174 = vmatpush1.bf16.msra.mxu0 %v2141
      %2175 = vmatprep.subr.bf16.mxu0 0
      %2176 = vmatpush1.bf16.msra.mxu0 %v2140
      %2177 = vmatprep.subr.bf16.mxu0 0
      %2178 = vmatpush2.bf16.msra.mxu0 0
      %2179 = vmatprep.subr.bf16.mxu0 0
      %2180 = vmatpush2.bf16.msra.mxu0 0
      %2181 = vmatprep.subr.bf16.mxu0 0
      %2182 = vmatpush2.bf16.msra.mxu0 0
      %2183 = vmatprep.subr.bf16.mxu0 0
      %2184 = vmatpush2.bf16.msra.mxu0 0
      %2185 = vmatprep.subr.bf16.mxu0 0
      %2186 = vmatpush2.bf16.msra.mxu0 0
      %2187 = vmatprep.subr.bf16.mxu0 0
      %2188 = vmatpush2.bf16.msra.mxu0 0
      %2189 = vmatprep.subr.bf16.mxu0 0
      %2190 = vmatpush2.bf16.msra.mxu0 0
      %2191 = vmatprep.subr.bf16.mxu0 0
      %2192 = vmatpush2.bf16.msra.mxu0 %v2148
      %2193 = vmatprep.mubr.bf16.mxu0 %v2159
      %2194 = vmatmul.mubr.bf16.gmra.mxu0 %v2101
      %v2195 = vpop.f32.mrf.mxu0
      %v2196 = vadd.f32 0.0, %v2195
      %v2197 = vpop.f32.mrf.mxu0
      %v2198 = vpop.f32.mrf.mxu0
      %v2199 = vpop.f32.mrf.mxu0
      %2200 = vdwg.mxu0
      %v2202 = vunpack.c.l.b16 %v2060
      %v2203 = vunpack.c.h.b16 %v2060
      %v2204 = vpack.c.b16 %v2202, %v2202
      %v2205 = vpack.c.b16 %v2203, %v2203
      %v2225 = vunpack.c.l.b16 %v2061
      %v2226 = vunpack.c.l.b16 %v2062
      %v2227 = vunpack.c.l.b16 %v2063
      %v2228 = vunpack.c.l.b16 %v2064
      %v2229 = vunpack.c.l.b16 %v2065
      %v2230 = vunpack.c.l.b16 %v2066
      %v2231 = vunpack.c.l.b16 %v2067
      %v2232 = vunpack.c.l.b16 %v2068
      %v2233 = vunpack.c.l.b16 %v2069
      %v2234 = vunpack.c.l.b16 %v2070
      %v2235 = vunpack.c.l.b16 %v2071
      %v2236 = vunpack.c.l.b16 %v2072
      %v2237 = vunpack.c.l.b16 %v2073
      %v2238 = vunpack.c.l.b16 %v2074
      %v2239 = vunpack.c.l.b16 %v2075
      %v2240 = vunpack.c.l.b16 %v2076
      %v2241 = vunpack.c.l.b16 %v2077
      %v2242 = vunpack.c.l.b16 %v2078
      %v2243 = vpack.c.b16 %v2226, %v2225
      %v2244 = vpack.c.b16 %v2228, %v2227
      %v2245 = vpack.c.b16 %v2230, %v2229
      %v2246 = vpack.c.b16 %v2232, %v2231
      %v2247 = vpack.c.b16 %v2234, %v2233
      %v2248 = vpack.c.b16 %v2236, %v2235
      %v2249 = vpack.c.b16 %v2238, %v2237
      %v2250 = vpack.c.b16 %v2240, %v2239
      %v2251 = vpack.c.b16 %v2242, %v2241
      %v2262 = vsel %vm275, %v2205, 0
      %2264 = vmatprep.subr.bf16.mxu0 0
      %2265 = vmatpush1.bf16.msra.mxu0 %v2250
      %2266 = vmatprep.subr.bf16.mxu0 0
      %2267 = vmatpush1.bf16.msra.mxu0 %v2249
      %2268 = vmatprep.subr.bf16.mxu0 0
      %2269 = vmatpush1.bf16.msra.mxu0 %v2248
      %2270 = vmatprep.subr.bf16.mxu0 0
      %2271 = vmatpush1.bf16.msra.mxu0 %v2247
      %2272 = vmatprep.subr.bf16.mxu0 0
      %2273 = vmatpush1.bf16.msra.mxu0 %v2246
      %2274 = vmatprep.subr.bf16.mxu0 0
      %2275 = vmatpush1.bf16.msra.mxu0 %v2245
      %2276 = vmatprep.subr.bf16.mxu0 0
      %2277 = vmatpush1.bf16.msra.mxu0 %v2244
      %2278 = vmatprep.subr.bf16.mxu0 0
      %2279 = vmatpush1.bf16.msra.mxu0 %v2243
      %2280 = vmatprep.subr.bf16.mxu0 0
      %2281 = vmatpush2.bf16.msra.mxu0 0
      %2282 = vmatprep.subr.bf16.mxu0 0
      %2283 = vmatpush2.bf16.msra.mxu0 0
      %2284 = vmatprep.subr.bf16.mxu0 0
      %2285 = vmatpush2.bf16.msra.mxu0 0
      %2286 = vmatprep.subr.bf16.mxu0 0
      %2287 = vmatpush2.bf16.msra.mxu0 0
      %2288 = vmatprep.subr.bf16.mxu0 0
      %2289 = vmatpush2.bf16.msra.mxu0 0
      %2290 = vmatprep.subr.bf16.mxu0 0
      %2291 = vmatpush2.bf16.msra.mxu0 0
      %2292 = vmatprep.subr.bf16.mxu0 0
      %2293 = vmatpush2.bf16.msra.mxu0 0
      %2294 = vmatprep.subr.bf16.mxu0 0
      %2295 = vmatpush2.bf16.msra.mxu0 %v2251
      %2296 = vmatprep.mubr.bf16.mxu0 %v2262
      %2297 = vmatmul.mubr.bf16.gmra.mxu0 %v2204
      %v2298 = vpop.f32.mrf.mxu0
      %v2299 = vadd.f32 %v2196, %v2298
      %v2300 = vpop.f32.mrf.mxu0
      %v2301 = vpop.f32.mrf.mxu0
      %v2302 = vpop.f32.mrf.mxu0
      %2303 = vdwg.mxu0
      %v2304 = vld [vmem:[%s422] sm:$0xff]
      %v2305 = vld [vmem:[%s1306] sm:$0xf]
      %v2306 = vld [vmem:[%s1306 + $0x4] sm:$0xf]
      %v2307 = vld [vmem:[%s1306 + $0x8] sm:$0xf]
      %v2308 = vld [vmem:[%s1306 + $0xc] sm:$0xf]
      %v2309 = vld [vmem:[%s1306 + $0x10] sm:$0xf]
      %v2310 = vld [vmem:[%s1306 + $0x14] sm:$0xf]
      %v2311 = vld [vmem:[%s1306 + $0x18] sm:$0xf]
      %v2312 = vld [vmem:[%s1306 + $0x1c] sm:$0xf]
      %v2313 = vld [vmem:[%s1306 + $0x20] sm:$0xf]
      %v2314 = vld [vmem:[%s1306 + $0x24] sm:$0xf]
      %v2315 = vld [vmem:[%s1306 + $0x28] sm:$0xf]
      %v2316 = vld [vmem:[%s1306 + $0x2c] sm:$0xf]
      %v2317 = vld [vmem:[%s1306 + $0x30] sm:$0xf]
      %v2318 = vld [vmem:[%s1306 + $0x34] sm:$0xf]
      %v2319 = vld [vmem:[%s1306 + $0x38] sm:$0xf]
      %v2320 = vld [vmem:[%s1306 + $0x3c] sm:$0xf]
      %v2321 = vld [vmem:[%s1306 + $0x40] sm:$0xf]
      %v2322 = vld [vmem:[%s1306 + $0x44] sm:$0xf]
      %v2324 = vunpack.c.l.b16 %v2304
      %v2325 = vunpack.c.h.b16 %v2304
      %v2326 = vpack.c.b16 %v2324, %v2324
      %v2327 = vpack.c.b16 %v2325, %v2325
      %v2347 = vunpack.c.l.b16 %v2305
      %v2348 = vunpack.c.l.b16 %v2306
      %v2349 = vunpack.c.l.b16 %v2307
      %v2350 = vunpack.c.l.b16 %v2308
      %v2351 = vunpack.c.l.b16 %v2309
      %v2352 = vunpack.c.l.b16 %v2310
      %v2353 = vunpack.c.l.b16 %v2311
      %v2354 = vunpack.c.l.b16 %v2312
      %v2355 = vunpack.c.l.b16 %v2313
      %v2356 = vunpack.c.l.b16 %v2314
      %v2357 = vunpack.c.l.b16 %v2315
      %v2358 = vunpack.c.l.b16 %v2316
      %v2359 = vunpack.c.l.b16 %v2317
      %v2360 = vunpack.c.l.b16 %v2318
      %v2361 = vunpack.c.l.b16 %v2319
      %v2362 = vunpack.c.l.b16 %v2320
      %v2363 = vunpack.c.l.b16 %v2321
      %v2364 = vunpack.c.l.b16 %v2322
      %v2365 = vpack.c.b16 %v2348, %v2347
      %v2366 = vpack.c.b16 %v2350, %v2349
      %v2367 = vpack.c.b16 %v2352, %v2351
      %v2368 = vpack.c.b16 %v2354, %v2353
      %v2369 = vpack.c.b16 %v2356, %v2355
      %v2370 = vpack.c.b16 %v2358, %v2357
      %v2371 = vpack.c.b16 %v2360, %v2359
      %v2372 = vpack.c.b16 %v2362, %v2361
      %v2373 = vpack.c.b16 %v2364, %v2363
      %v2384 = vsel %vm275, %v2327, 0
      %2386 = vmatprep.subr.bf16.mxu0 0
      %2387 = vmatpush1.bf16.msra.mxu0 %v2372
      %2388 = vmatprep.subr.bf16.mxu0 0
      %2389 = vmatpush1.bf16.msra.mxu0 %v2371
      %2390 = vmatprep.subr.bf16.mxu0 0
      %2391 = vmatpush1.bf16.msra.mxu0 %v2370
      %2392 = vmatprep.subr.bf16.mxu0 0
      %2393 = vmatpush1.bf16.msra.mxu0 %v2369
      %2394 = vmatprep.subr.bf16.mxu0 0
      %2395 = vmatpush1.bf16.msra.mxu0 %v2368
      %2396 = vmatprep.subr.bf16.mxu0 0
      %2397 = vmatpush1.bf16.msra.mxu0 %v2367
      %2398 = vmatprep.subr.bf16.mxu0 0
      %2399 = vmatpush1.bf16.msra.mxu0 %v2366
      %2400 = vmatprep.subr.bf16.mxu0 0
      %2401 = vmatpush1.bf16.msra.mxu0 %v2365
      %2402 = vmatprep.subr.bf16.mxu0 0
      %2403 = vmatpush2.bf16.msra.mxu0 0
      %2404 = vmatprep.subr.bf16.mxu0 0
      %2405 = vmatpush2.bf16.msra.mxu0 0
      %2406 = vmatprep.subr.bf16.mxu0 0
      %2407 = vmatpush2.bf16.msra.mxu0 0
      %2408 = vmatprep.subr.bf16.mxu0 0
      %2409 = vmatpush2.bf16.msra.mxu0 0
      %2410 = vmatprep.subr.bf16.mxu0 0
      %2411 = vmatpush2.bf16.msra.mxu0 0
      %2412 = vmatprep.subr.bf16.mxu0 0
      %2413 = vmatpush2.bf16.msra.mxu0 0
      %2414 = vmatprep.subr.bf16.mxu0 0
      %2415 = vmatpush2.bf16.msra.mxu0 0
      %2416 = vmatprep.subr.bf16.mxu0 0
      %2417 = vmatpush2.bf16.msra.mxu0 %v2373
      %2418 = vmatprep.mubr.bf16.mxu0 %v2384
      %2419 = vmatmul.mubr.bf16.gmra.mxu0 %v2326
      %v2420 = vpop.f32.mrf.mxu0
      %v2421 = vadd.f32 0.0, %v2420
      %v2422 = vpop.f32.mrf.mxu0
      %v2423 = vpop.f32.mrf.mxu0
      %v2424 = vpop.f32.mrf.mxu0
      %2425 = vdwg.mxu0
      %v2426 = vadd.f32 %v2299, %v2421
      %v2427 = vld [vmem:[%s550] sm:$0xff]
      %v2428 = vld [vmem:[%s1930] sm:$0xf]
      %v2429 = vld [vmem:[%s1930 + $0x4] sm:$0xf]
      %v2430 = vld [vmem:[%s1930 + $0x8] sm:$0xf]
      %v2431 = vld [vmem:[%s1930 + $0xc] sm:$0xf]
      %v2432 = vld [vmem:[%s1930 + $0x10] sm:$0xf]
      %v2433 = vld [vmem:[%s1930 + $0x14] sm:$0xf]
      %v2434 = vld [vmem:[%s1930 + $0x18] sm:$0xf]
      %v2435 = vld [vmem:[%s1930 + $0x1c] sm:$0xf]
      %v2436 = vld [vmem:[%s1930 + $0x20] sm:$0xf]
      %v2437 = vld [vmem:[%s1930 + $0x24] sm:$0xf]
      %v2438 = vld [vmem:[%s1930 + $0x28] sm:$0xf]
      %v2439 = vld [vmem:[%s1930 + $0x2c] sm:$0xf]
      %v2440 = vld [vmem:[%s1930 + $0x30] sm:$0xf]
      %v2441 = vld [vmem:[%s1930 + $0x34] sm:$0xf]
      %v2442 = vld [vmem:[%s1930 + $0x38] sm:$0xf]
      %v2443 = vld [vmem:[%s1930 + $0x3c] sm:$0xf]
      %v2444 = vld [vmem:[%s1930 + $0x40] sm:$0xf]
      %v2445 = vld [vmem:[%s1930 + $0x44] sm:$0xf]
      %v2447 = vunpack.c.l.b16 %v2427
      %v2448 = vunpack.c.h.b16 %v2427
      %v2449 = vpack.c.b16 %v2447, %v2447
      %v2450 = vpack.c.b16 %v2448, %v2448
      %v2470 = vunpack.c.l.b16 %v2428
      %v2471 = vunpack.c.l.b16 %v2429
      %v2472 = vunpack.c.l.b16 %v2430
      %v2473 = vunpack.c.l.b16 %v2431
      %v2474 = vunpack.c.l.b16 %v2432
      %v2475 = vunpack.c.l.b16 %v2433
      %v2476 = vunpack.c.l.b16 %v2434
      %v2477 = vunpack.c.l.b16 %v2435
      %v2478 = vunpack.c.l.b16 %v2436
      %v2479 = vunpack.c.l.b16 %v2437
      %v2480 = vunpack.c.l.b16 %v2438
      %v2481 = vunpack.c.l.b16 %v2439
      %v2482 = vunpack.c.l.b16 %v2440
      %v2483 = vunpack.c.l.b16 %v2441
      %v2484 = vunpack.c.l.b16 %v2442
      %v2485 = vunpack.c.l.b16 %v2443
      %v2486 = vunpack.c.l.b16 %v2444
      %v2487 = vunpack.c.l.b16 %v2445
      %v2488 = vpack.c.b16 %v2471, %v2470
      %v2489 = vpack.c.b16 %v2473, %v2472
      %v2490 = vpack.c.b16 %v2475, %v2474
      %v2491 = vpack.c.b16 %v2477, %v2476
      %v2492 = vpack.c.b16 %v2479, %v2478
      %v2493 = vpack.c.b16 %v2481, %v2480
      %v2494 = vpack.c.b16 %v2483, %v2482
      %v2495 = vpack.c.b16 %v2485, %v2484
      %v2496 = vpack.c.b16 %v2487, %v2486
      %v2507 = vsel %vm275, %v2450, 0
      %2509 = vmatprep.subr.bf16.mxu0 0
      %2510 = vmatpush1.bf16.msra.mxu0 %v2495
      %2511 = vmatprep.subr.bf16.mxu0 0
      %2512 = vmatpush1.bf16.msra.mxu0 %v2494
      %2513 = vmatprep.subr.bf16.mxu0 0
      %2514 = vmatpush1.bf16.msra.mxu0 %v2493
      %2515 = vmatprep.subr.bf16.mxu0 0
      %2516 = vmatpush1.bf16.msra.mxu0 %v2492
      %2517 = vmatprep.subr.bf16.mxu0 0
      %2518 = vmatpush1.bf16.msra.mxu0 %v2491
      %2519 = vmatprep.subr.bf16.mxu0 0
      %2520 = vmatpush1.bf16.msra.mxu0 %v2490
      %2521 = vmatprep.subr.bf16.mxu0 0
      %2522 = vmatpush1.bf16.msra.mxu0 %v2489
      %2523 = vmatprep.subr.bf16.mxu0 0
      %2524 = vmatpush1.bf16.msra.mxu0 %v2488
      %2525 = vmatprep.subr.bf16.mxu0 0
      %2526 = vmatpush2.bf16.msra.mxu0 0
      %2527 = vmatprep.subr.bf16.mxu0 0
      %2528 = vmatpush2.bf16.msra.mxu0 0
      %2529 = vmatprep.subr.bf16.mxu0 0
      %2530 = vmatpush2.bf16.msra.mxu0 0
      %2531 = vmatprep.subr.bf16.mxu0 0
      %2532 = vmatpush2.bf16.msra.mxu0 0
      %2533 = vmatprep.subr.bf16.mxu0 0
      %2534 = vmatpush2.bf16.msra.mxu0 0
      %2535 = vmatprep.subr.bf16.mxu0 0
      %2536 = vmatpush2.bf16.msra.mxu0 0
      %2537 = vmatprep.subr.bf16.mxu0 0
      %2538 = vmatpush2.bf16.msra.mxu0 0
      %2539 = vmatprep.subr.bf16.mxu0 0
      %2540 = vmatpush2.bf16.msra.mxu0 %v2496
      %2541 = vmatprep.mubr.bf16.mxu0 %v2507
      %2542 = vmatmul.mubr.bf16.gmra.mxu0 %v2449
      %v2543 = vpop.f32.mrf.mxu0
      %v2544 = vadd.f32 0.0, %v2543
      %v2545 = vpop.f32.mrf.mxu0
      %v2546 = vpop.f32.mrf.mxu0
      %v2547 = vpop.f32.mrf.mxu0
      %2548 = vdwg.mxu0
      %v2549 = vadd.f32 %v2426, %v2544
      %v2550 = vld [vmem:[%s678] sm:$0xff]
      %s2551 = sadd.s32 %s168, 7
      %s2552 = smul.u32 %s2551, 18
      %s2553 = smul.addr %s2552, 4
      %s2554 = scalar_lea.vmem %s156, %s2553
      %v2555 = vld [vmem:[%s2554] sm:$0xf]
      %v2556 = vld [vmem:[%s2554 + $0x4] sm:$0xf]
      %v2557 = vld [vmem:[%s2554 + $0x8] sm:$0xf]
      %v2558 = vld [vmem:[%s2554 + $0xc] sm:$0xf]
      %v2559 = vld [vmem:[%s2554 + $0x10] sm:$0xf]
      %v2560 = vld [vmem:[%s2554 + $0x14] sm:$0xf]
      %v2561 = vld [vmem:[%s2554 + $0x18] sm:$0xf]
      %v2562 = vld [vmem:[%s2554 + $0x1c] sm:$0xf]
      %v2563 = vld [vmem:[%s2554 + $0x20] sm:$0xf]
      %v2564 = vld [vmem:[%s2554 + $0x24] sm:$0xf]
      %v2565 = vld [vmem:[%s2554 + $0x28] sm:$0xf]
      %v2566 = vld [vmem:[%s2554 + $0x2c] sm:$0xf]
      %v2567 = vld [vmem:[%s2554 + $0x30] sm:$0xf]
      %v2568 = vld [vmem:[%s2554 + $0x34] sm:$0xf]
      %v2569 = vld [vmem:[%s2554 + $0x38] sm:$0xf]
      %v2570 = vld [vmem:[%s2554 + $0x3c] sm:$0xf]
      %v2571 = vld [vmem:[%s2554 + $0x40] sm:$0xf]
      %v2572 = vld [vmem:[%s2554 + $0x44] sm:$0xf]
      %v2574 = vunpack.c.l.b16 %v2550
      %v2575 = vunpack.c.h.b16 %v2550
      %v2576 = vpack.c.b16 %v2574, %v2574
      %v2577 = vpack.c.b16 %v2575, %v2575
      %v2597 = vunpack.c.l.b16 %v2555
      %v2598 = vunpack.c.l.b16 %v2556
      %v2599 = vunpack.c.l.b16 %v2557
      %v2600 = vunpack.c.l.b16 %v2558
      %v2601 = vunpack.c.l.b16 %v2559
      %v2602 = vunpack.c.l.b16 %v2560
      %v2603 = vunpack.c.l.b16 %v2561
      %v2604 = vunpack.c.l.b16 %v2562
      %v2605 = vunpack.c.l.b16 %v2563
      %v2606 = vunpack.c.l.b16 %v2564
      %v2607 = vunpack.c.l.b16 %v2565
      %v2608 = vunpack.c.l.b16 %v2566
      %v2609 = vunpack.c.l.b16 %v2567
      %v2610 = vunpack.c.l.b16 %v2568
      %v2611 = vunpack.c.l.b16 %v2569
      %v2612 = vunpack.c.l.b16 %v2570
      %v2613 = vunpack.c.l.b16 %v2571
      %v2614 = vunpack.c.l.b16 %v2572
      %v2615 = vpack.c.b16 %v2598, %v2597
      %v2616 = vpack.c.b16 %v2600, %v2599
      %v2617 = vpack.c.b16 %v2602, %v2601
      %v2618 = vpack.c.b16 %v2604, %v2603
      %v2619 = vpack.c.b16 %v2606, %v2605
      %v2620 = vpack.c.b16 %v2608, %v2607
      %v2621 = vpack.c.b16 %v2610, %v2609
      %v2622 = vpack.c.b16 %v2612, %v2611
      %v2623 = vpack.c.b16 %v2614, %v2613
      %v2634 = vsel %vm275, %v2577, 0
      %2636 = vmatprep.subr.bf16.mxu0 0
      %2637 = vmatpush1.bf16.msra.mxu0 %v2622
      %2638 = vmatprep.subr.bf16.mxu0 0
      %2639 = vmatpush1.bf16.msra.mxu0 %v2621
      %2640 = vmatprep.subr.bf16.mxu0 0
      %2641 = vmatpush1.bf16.msra.mxu0 %v2620
      %2642 = vmatprep.subr.bf16.mxu0 0
      %2643 = vmatpush1.bf16.msra.mxu0 %v2619
      %2644 = vmatprep.subr.bf16.mxu0 0
      %2645 = vmatpush1.bf16.msra.mxu0 %v2618
      %2646 = vmatprep.subr.bf16.mxu0 0
      %2647 = vmatpush1.bf16.msra.mxu0 %v2617
      %2648 = vmatprep.subr.bf16.mxu0 0
      %2649 = vmatpush1.bf16.msra.mxu0 %v2616
      %2650 = vmatprep.subr.bf16.mxu0 0
      %2651 = vmatpush1.bf16.msra.mxu0 %v2615
      %2652 = vmatprep.subr.bf16.mxu0 0
      %2653 = vmatpush2.bf16.msra.mxu0 0
      %2654 = vmatprep.subr.bf16.mxu0 0
      %2655 = vmatpush2.bf16.msra.mxu0 0
      %2656 = vmatprep.subr.bf16.mxu0 0
      %2657 = vmatpush2.bf16.msra.mxu0 0
      %2658 = vmatprep.subr.bf16.mxu0 0
      %2659 = vmatpush2.bf16.msra.mxu0 0
      %2660 = vmatprep.subr.bf16.mxu0 0
      %2661 = vmatpush2.bf16.msra.mxu0 0
      %2662 = vmatprep.subr.bf16.mxu0 0
      %2663 = vmatpush2.bf16.msra.mxu0 0
      %2664 = vmatprep.subr.bf16.mxu0 0
      %2665 = vmatpush2.bf16.msra.mxu0 0
      %2666 = vmatprep.subr.bf16.mxu0 0
      %2667 = vmatpush2.bf16.msra.mxu0 %v2623
      %2668 = vmatprep.mubr.bf16.mxu0 %v2634
      %2669 = vmatmul.mubr.bf16.gmra.mxu0 %v2576
      %v2670 = vpop.f32.mrf.mxu0
      %v2671 = vadd.f32 0.0, %v2670
      %v2672 = vpop.f32.mrf.mxu0
      %v2673 = vpop.f32.mrf.mxu0
      %v2674 = vpop.f32.mrf.mxu0
      %2675 = vdwg.mxu0
      %v2676 = vadd.f32 %v2549, %v2671
      %v2677 = vadd.f32 %v2676, 3.0
      %v2678 = vmax.f32 %v2677, 0.0
      %v2679 = vmin.f32 %v2678, 6.0
      %v2680 = vmul.f32 %v2676, %v2679
      %v2681 = vmul.f32 %v2680, 0.16666667
      %s2682 = scalar_lea.vmem %s165, 24
      %2683 = vst [vmem:[%s2682] sm:$0xff] %v2681
      %v2684 = vld [vmem:[%s1] sm:$0xff]
      %v2685 = vld [vmem:[%s683] sm:$0xf]
      %v2686 = vld [vmem:[%s683 + $0x4] sm:$0xf]
      %v2687 = vld [vmem:[%s683 + $0x8] sm:$0xf]
      %v2688 = vld [vmem:[%s683 + $0xc] sm:$0xf]
      %v2689 = vld [vmem:[%s683 + $0x10] sm:$0xf]
      %v2690 = vld [vmem:[%s683 + $0x14] sm:$0xf]
      %v2691 = vld [vmem:[%s683 + $0x18] sm:$0xf]
      %v2692 = vld [vmem:[%s683 + $0x1c] sm:$0xf]
      %v2693 = vld [vmem:[%s683 + $0x20] sm:$0xf]
      %v2694 = vld [vmem:[%s683 + $0x24] sm:$0xf]
      %v2695 = vld [vmem:[%s683 + $0x28] sm:$0xf]
      %v2696 = vld [vmem:[%s683 + $0x2c] sm:$0xf]
      %v2697 = vld [vmem:[%s683 + $0x30] sm:$0xf]
      %v2698 = vld [vmem:[%s683 + $0x34] sm:$0xf]
      %v2699 = vld [vmem:[%s683 + $0x38] sm:$0xf]
      %v2700 = vld [vmem:[%s683 + $0x3c] sm:$0xf]
      %v2701 = vld [vmem:[%s683 + $0x40] sm:$0xf]
      %v2702 = vld [vmem:[%s683 + $0x44] sm:$0xf]
      %v2703 = vld [vmem:[%s191] sm:$0xff]
      %v2704 = vld [vmem:[%s1306] sm:$0xf]
      %v2705 = vld [vmem:[%s1306 + $0x4] sm:$0xf]
      %v2706 = vld [vmem:[%s1306 + $0x8] sm:$0xf]
      %v2707 = vld [vmem:[%s1306 + $0xc] sm:$0xf]
      %v2708 = vld [vmem:[%s1306 + $0x10] sm:$0xf]
      %v2709 = vld [vmem:[%s1306 + $0x14] sm:$0xf]
      %v2710 = vld [vmem:[%s1306 + $0x18] sm:$0xf]
      %v2711 = vld [vmem:[%s1306 + $0x1c] sm:$0xf]
      %v2712 = vld [vmem:[%s1306 + $0x20] sm:$0xf]
      %v2713 = vld [vmem:[%s1306 + $0x24] sm:$0xf]
      %v2714 = vld [vmem:[%s1306 + $0x28] sm:$0xf]
      %v2715 = vld [vmem:[%s1306 + $0x2c] sm:$0xf]
      %v2716 = vld [vmem:[%s1306 + $0x30] sm:$0xf]
      %v2717 = vld [vmem:[%s1306 + $0x34] sm:$0xf]
      %v2718 = vld [vmem:[%s1306 + $0x38] sm:$0xf]
      %v2719 = vld [vmem:[%s1306 + $0x3c] sm:$0xf]
      %v2720 = vld [vmem:[%s1306 + $0x40] sm:$0xf]
      %v2721 = vld [vmem:[%s1306 + $0x44] sm:$0xf]
      %v2723 = vunpack.c.l.b16 %v2703
      %v2724 = vunpack.c.h.b16 %v2703
      %v2725 = vpack.c.b16 %v2723, %v2723
      %v2726 = vpack.c.b16 %v2724, %v2724
      %v2746 = vunpack.c.l.b16 %v2704
      %v2747 = vunpack.c.l.b16 %v2705
      %v2748 = vunpack.c.l.b16 %v2706
      %v2749 = vunpack.c.l.b16 %v2707
      %v2750 = vunpack.c.l.b16 %v2708
      %v2751 = vunpack.c.l.b16 %v2709
      %v2752 = vunpack.c.l.b16 %v2710
      %v2753 = vunpack.c.l.b16 %v2711
      %v2754 = vunpack.c.l.b16 %v2712
      %v2755 = vunpack.c.l.b16 %v2713
      %v2756 = vunpack.c.l.b16 %v2714
      %v2757 = vunpack.c.l.b16 %v2715
      %v2758 = vunpack.c.l.b16 %v2716
      %v2759 = vunpack.c.l.b16 %v2717
      %v2760 = vunpack.c.l.b16 %v2718
      %v2761 = vunpack.c.l.b16 %v2719
      %v2762 = vunpack.c.l.b16 %v2720
      %v2763 = vunpack.c.l.b16 %v2721
      %v2764 = vpack.c.b16 %v2747, %v2746
      %v2765 = vpack.c.b16 %v2749, %v2748
      %v2766 = vpack.c.b16 %v2751, %v2750
      %v2767 = vpack.c.b16 %v2753, %v2752
      %v2768 = vpack.c.b16 %v2755, %v2754
      %v2769 = vpack.c.b16 %v2757, %v2756
      %v2770 = vpack.c.b16 %v2759, %v2758
      %v2771 = vpack.c.b16 %v2761, %v2760
      %v2772 = vpack.c.b16 %v2763, %v2762
      %v2783 = vsel %vm275, %v2726, 0
      %2785 = vmatprep.subr.bf16.mxu0 0
      %2786 = vmatpush1.bf16.msra.mxu0 %v2771
      %2787 = vmatprep.subr.bf16.mxu0 0
      %2788 = vmatpush1.bf16.msra.mxu0 %v2770
      %2789 = vmatprep.subr.bf16.mxu0 0
      %2790 = vmatpush1.bf16.msra.mxu0 %v2769
      %2791 = vmatprep.subr.bf16.mxu0 0
      %2792 = vmatpush1.bf16.msra.mxu0 %v2768
      %2793 = vmatprep.subr.bf16.mxu0 0
      %2794 = vmatpush1.bf16.msra.mxu0 %v2767
      %2795 = vmatprep.subr.bf16.mxu0 0
      %2796 = vmatpush1.bf16.msra.mxu0 %v2766
      %2797 = vmatprep.subr.bf16.mxu0 0
      %2798 = vmatpush1.bf16.msra.mxu0 %v2765
      %2799 = vmatprep.subr.bf16.mxu0 0
      %2800 = vmatpush1.bf16.msra.mxu0 %v2764
      %2801 = vmatprep.subr.bf16.mxu0 0
      %2802 = vmatpush2.bf16.msra.mxu0 0
      %2803 = vmatprep.subr.bf16.mxu0 0
      %2804 = vmatpush2.bf16.msra.mxu0 0
      %2805 = vmatprep.subr.bf16.mxu0 0
      %2806 = vmatpush2.bf16.msra.mxu0 0
      %2807 = vmatprep.subr.bf16.mxu0 0
      %2808 = vmatpush2.bf16.msra.mxu0 0
      %2809 = vmatprep.subr.bf16.mxu0 0
      %2810 = vmatpush2.bf16.msra.mxu0 0
      %2811 = vmatprep.subr.bf16.mxu0 0
      %2812 = vmatpush2.bf16.msra.mxu0 0
      %2813 = vmatprep.subr.bf16.mxu0 0
      %2814 = vmatpush2.bf16.msra.mxu0 0
      %2815 = vmatprep.subr.bf16.mxu0 0
      %2816 = vmatpush2.bf16.msra.mxu0 %v2772
      %2817 = vmatprep.mubr.bf16.mxu0 %v2783
      %2818 = vmatmul.mubr.bf16.gmra.mxu0 %v2725
      %v2819 = vpop.f32.mrf.mxu0
      %v2820 = vadd.f32 0.0, %v2819
      %v2821 = vpop.f32.mrf.mxu0
      %v2822 = vpop.f32.mrf.mxu0
      %v2823 = vpop.f32.mrf.mxu0
      %2824 = vdwg.mxu0
      %v2826 = vunpack.c.l.b16 %v2684
      %v2827 = vunpack.c.h.b16 %v2684
      %v2828 = vpack.c.b16 %v2826, %v2826
      %v2829 = vpack.c.b16 %v2827, %v2827
      %v2849 = vunpack.c.l.b16 %v2685
      %v2850 = vunpack.c.l.b16 %v2686
      %v2851 = vunpack.c.l.b16 %v2687
      %v2852 = vunpack.c.l.b16 %v2688
      %v2853 = vunpack.c.l.b16 %v2689
      %v2854 = vunpack.c.l.b16 %v2690
      %v2855 = vunpack.c.l.b16 %v2691
      %v2856 = vunpack.c.l.b16 %v2692
      %v2857 = vunpack.c.l.b16 %v2693
      %v2858 = vunpack.c.l.b16 %v2694
      %v2859 = vunpack.c.l.b16 %v2695
      %v2860 = vunpack.c.l.b16 %v2696
      %v2861 = vunpack.c.l.b16 %v2697
      %v2862 = vunpack.c.l.b16 %v2698
      %v2863 = vunpack.c.l.b16 %v2699
      %v2864 = vunpack.c.l.b16 %v2700
      %v2865 = vunpack.c.l.b16 %v2701
      %v2866 = vunpack.c.l.b16 %v2702
      %v2867 = vpack.c.b16 %v2850, %v2849
      %v2868 = vpack.c.b16 %v2852, %v2851
      %v2869 = vpack.c.b16 %v2854, %v2853
      %v2870 = vpack.c.b16 %v2856, %v2855
      %v2871 = vpack.c.b16 %v2858, %v2857
      %v2872 = vpack.c.b16 %v2860, %v2859
      %v2873 = vpack.c.b16 %v2862, %v2861
      %v2874 = vpack.c.b16 %v2864, %v2863
      %v2875 = vpack.c.b16 %v2866, %v2865
      %v2886 = vsel %vm275, %v2829, 0
      %2888 = vmatprep.subr.bf16.mxu0 0
      %2889 = vmatpush1.bf16.msra.mxu0 %v2874
      %2890 = vmatprep.subr.bf16.mxu0 0
      %2891 = vmatpush1.bf16.msra.mxu0 %v2873
      %2892 = vmatprep.subr.bf16.mxu0 0
      %2893 = vmatpush1.bf16.msra.mxu0 %v2872
      %2894 = vmatprep.subr.bf16.mxu0 0
      %2895 = vmatpush1.bf16.msra.mxu0 %v2871
      %2896 = vmatprep.subr.bf16.mxu0 0
      %2897 = vmatpush1.bf16.msra.mxu0 %v2870
      %2898 = vmatprep.subr.bf16.mxu0 0
      %2899 = vmatpush1.bf16.msra.mxu0 %v2869
      %2900 = vmatprep.subr.bf16.mxu0 0
      %2901 = vmatpush1.bf16.msra.mxu0 %v2868
      %2902 = vmatprep.subr.bf16.mxu0 0
      %2903 = vmatpush1.bf16.msra.mxu0 %v2867
      %2904 = vmatprep.subr.bf16.mxu0 0
      %2905 = vmatpush2.bf16.msra.mxu0 0
      %2906 = vmatprep.subr.bf16.mxu0 0
      %2907 = vmatpush2.bf16.msra.mxu0 0
      %2908 = vmatprep.subr.bf16.mxu0 0
      %2909 = vmatpush2.bf16.msra.mxu0 0
      %2910 = vmatprep.subr.bf16.mxu0 0
      %2911 = vmatpush2.bf16.msra.mxu0 0
      %2912 = vmatprep.subr.bf16.mxu0 0
      %2913 = vmatpush2.bf16.msra.mxu0 0
      %2914 = vmatprep.subr.bf16.mxu0 0
      %2915 = vmatpush2.bf16.msra.mxu0 0
      %2916 = vmatprep.subr.bf16.mxu0 0
      %2917 = vmatpush2.bf16.msra.mxu0 0
      %2918 = vmatprep.subr.bf16.mxu0 0
      %2919 = vmatpush2.bf16.msra.mxu0 %v2875
      %2920 = vmatprep.mubr.bf16.mxu0 %v2886
      %2921 = vmatmul.mubr.bf16.gmra.mxu0 %v2828
      %v2922 = vpop.f32.mrf.mxu0
      %v2923 = vadd.f32 %v2820, %v2922
      %v2924 = vpop.f32.mrf.mxu0
      %v2925 = vpop.f32.mrf.mxu0
      %v2926 = vpop.f32.mrf.mxu0
      %2927 = vdwg.mxu0
      %v2928 = vld [vmem:[%s422] sm:$0xff]
      %v2929 = vld [vmem:[%s1930] sm:$0xf]
      %v2930 = vld [vmem:[%s1930 + $0x4] sm:$0xf]
      %v2931 = vld [vmem:[%s1930 + $0x8] sm:$0xf]
      %v2932 = vld [vmem:[%s1930 + $0xc] sm:$0xf]
      %v2933 = vld [vmem:[%s1930 + $0x10] sm:$0xf]
      %v2934 = vld [vmem:[%s1930 + $0x14] sm:$0xf]
      %v2935 = vld [vmem:[%s1930 + $0x18] sm:$0xf]
      %v2936 = vld [vmem:[%s1930 + $0x1c] sm:$0xf]
      %v2937 = vld [vmem:[%s1930 + $0x20] sm:$0xf]
      %v2938 = vld [vmem:[%s1930 + $0x24] sm:$0xf]
      %v2939 = vld [vmem:[%s1930 + $0x28] sm:$0xf]
      %v2940 = vld [vmem:[%s1930 + $0x2c] sm:$0xf]
      %v2941 = vld [vmem:[%s1930 + $0x30] sm:$0xf]
      %v2942 = vld [vmem:[%s1930 + $0x34] sm:$0xf]
      %v2943 = vld [vmem:[%s1930 + $0x38] sm:$0xf]
      %v2944 = vld [vmem:[%s1930 + $0x3c] sm:$0xf]
      %v2945 = vld [vmem:[%s1930 + $0x40] sm:$0xf]
      %v2946 = vld [vmem:[%s1930 + $0x44] sm:$0xf]
      %v2948 = vunpack.c.l.b16 %v2928
      %v2949 = vunpack.c.h.b16 %v2928
      %v2950 = vpack.c.b16 %v2948, %v2948
      %v2951 = vpack.c.b16 %v2949, %v2949
      %v2971 = vunpack.c.l.b16 %v2929
      %v2972 = vunpack.c.l.b16 %v2930
      %v2973 = vunpack.c.l.b16 %v2931
      %v2974 = vunpack.c.l.b16 %v2932
      %v2975 = vunpack.c.l.b16 %v2933
      %v2976 = vunpack.c.l.b16 %v2934
      %v2977 = vunpack.c.l.b16 %v2935
      %v2978 = vunpack.c.l.b16 %v2936
      %v2979 = vunpack.c.l.b16 %v2937
      %v2980 = vunpack.c.l.b16 %v2938
      %v2981 = vunpack.c.l.b16 %v2939
      %v2982 = vunpack.c.l.b16 %v2940
      %v2983 = vunpack.c.l.b16 %v2941
      %v2984 = vunpack.c.l.b16 %v2942
      %v2985 = vunpack.c.l.b16 %v2943
      %v2986 = vunpack.c.l.b16 %v2944
      %v2987 = vunpack.c.l.b16 %v2945
      %v2988 = vunpack.c.l.b16 %v2946
      %v2989 = vpack.c.b16 %v2972, %v2971
      %v2990 = vpack.c.b16 %v2974, %v2973
      %v2991 = vpack.c.b16 %v2976, %v2975
      %v2992 = vpack.c.b16 %v2978, %v2977
      %v2993 = vpack.c.b16 %v2980, %v2979
      %v2994 = vpack.c.b16 %v2982, %v2981
      %v2995 = vpack.c.b16 %v2984, %v2983
      %v2996 = vpack.c.b16 %v2986, %v2985
      %v2997 = vpack.c.b16 %v2988, %v2987
      %v3008 = vsel %vm275, %v2951, 0
      %3010 = vmatprep.subr.bf16.mxu0 0
      %3011 = vmatpush1.bf16.msra.mxu0 %v2996
      %3012 = vmatprep.subr.bf16.mxu0 0
      %3013 = vmatpush1.bf16.msra.mxu0 %v2995
      %3014 = vmatprep.subr.bf16.mxu0 0
      %3015 = vmatpush1.bf16.msra.mxu0 %v2994
      %3016 = vmatprep.subr.bf16.mxu0 0
      %3017 = vmatpush1.bf16.msra.mxu0 %v2993
      %3018 = vmatprep.subr.bf16.mxu0 0
      %3019 = vmatpush1.bf16.msra.mxu0 %v2992
      %3020 = vmatprep.subr.bf16.mxu0 0
      %3021 = vmatpush1.bf16.msra.mxu0 %v2991
      %3022 = vmatprep.subr.bf16.mxu0 0
      %3023 = vmatpush1.bf16.msra.mxu0 %v2990
      %3024 = vmatprep.subr.bf16.mxu0 0
      %3025 = vmatpush1.bf16.msra.mxu0 %v2989
      %3026 = vmatprep.subr.bf16.mxu0 0
      %3027 = vmatpush2.bf16.msra.mxu0 0
      %3028 = vmatprep.subr.bf16.mxu0 0
      %3029 = vmatpush2.bf16.msra.mxu0 0
      %3030 = vmatprep.subr.bf16.mxu0 0
      %3031 = vmatpush2.bf16.msra.mxu0 0
      %3032 = vmatprep.subr.bf16.mxu0 0
      %3033 = vmatpush2.bf16.msra.mxu0 0
      %3034 = vmatprep.subr.bf16.mxu0 0
      %3035 = vmatpush2.bf16.msra.mxu0 0
      %3036 = vmatprep.subr.bf16.mxu0 0
      %3037 = vmatpush2.bf16.msra.mxu0 0
      %3038 = vmatprep.subr.bf16.mxu0 0
      %3039 = vmatpush2.bf16.msra.mxu0 0
      %3040 = vmatprep.subr.bf16.mxu0 0
      %3041 = vmatpush2.bf16.msra.mxu0 %v2997
      %3042 = vmatprep.mubr.bf16.mxu0 %v3008
      %3043 = vmatmul.mubr.bf16.gmra.mxu0 %v2950
      %v3044 = vpop.f32.mrf.mxu0
      %v3045 = vadd.f32 0.0, %v3044
      %v3046 = vpop.f32.mrf.mxu0
      %v3047 = vpop.f32.mrf.mxu0
      %v3048 = vpop.f32.mrf.mxu0
      %3049 = vdwg.mxu0
      %v3050 = vadd.f32 %v2923, %v3045
      %v3051 = vld [vmem:[%s550] sm:$0xff]
      %v3052 = vld [vmem:[%s2554] sm:$0xf]
      %v3053 = vld [vmem:[%s2554 + $0x4] sm:$0xf]
      %v3054 = vld [vmem:[%s2554 + $0x8] sm:$0xf]
      %v3055 = vld [vmem:[%s2554 + $0xc] sm:$0xf]
      %v3056 = vld [vmem:[%s2554 + $0x10] sm:$0xf]
      %v3057 = vld [vmem:[%s2554 + $0x14] sm:$0xf]
      %v3058 = vld [vmem:[%s2554 + $0x18] sm:$0xf]
      %v3059 = vld [vmem:[%s2554 + $0x1c] sm:$0xf]
      %v3060 = vld [vmem:[%s2554 + $0x20] sm:$0xf]
      %v3061 = vld [vmem:[%s2554 + $0x24] sm:$0xf]
      %v3062 = vld [vmem:[%s2554 + $0x28] sm:$0xf]
      %v3063 = vld [vmem:[%s2554 + $0x2c] sm:$0xf]
      %v3064 = vld [vmem:[%s2554 + $0x30] sm:$0xf]
      %v3065 = vld [vmem:[%s2554 + $0x34] sm:$0xf]
      %v3066 = vld [vmem:[%s2554 + $0x38] sm:$0xf]
      %v3067 = vld [vmem:[%s2554 + $0x3c] sm:$0xf]
      %v3068 = vld [vmem:[%s2554 + $0x40] sm:$0xf]
      %v3069 = vld [vmem:[%s2554 + $0x44] sm:$0xf]
      %v3071 = vunpack.c.l.b16 %v3051
      %v3072 = vunpack.c.h.b16 %v3051
      %v3073 = vpack.c.b16 %v3071, %v3071
      %v3074 = vpack.c.b16 %v3072, %v3072
      %v3094 = vunpack.c.l.b16 %v3052
      %v3095 = vunpack.c.l.b16 %v3053
      %v3096 = vunpack.c.l.b16 %v3054
      %v3097 = vunpack.c.l.b16 %v3055
      %v3098 = vunpack.c.l.b16 %v3056
      %v3099 = vunpack.c.l.b16 %v3057
      %v3100 = vunpack.c.l.b16 %v3058
      %v3101 = vunpack.c.l.b16 %v3059
      %v3102 = vunpack.c.l.b16 %v3060
      %v3103 = vunpack.c.l.b16 %v3061
      %v3104 = vunpack.c.l.b16 %v3062
      %v3105 = vunpack.c.l.b16 %v3063
      %v3106 = vunpack.c.l.b16 %v3064
      %v3107 = vunpack.c.l.b16 %v3065
      %v3108 = vunpack.c.l.b16 %v3066
      %v3109 = vunpack.c.l.b16 %v3067
      %v3110 = vunpack.c.l.b16 %v3068
      %v3111 = vunpack.c.l.b16 %v3069
      %v3112 = vpack.c.b16 %v3095, %v3094
      %v3113 = vpack.c.b16 %v3097, %v3096
      %v3114 = vpack.c.b16 %v3099, %v3098
      %v3115 = vpack.c.b16 %v3101, %v3100
      %v3116 = vpack.c.b16 %v3103, %v3102
      %v3117 = vpack.c.b16 %v3105, %v3104
      %v3118 = vpack.c.b16 %v3107, %v3106
      %v3119 = vpack.c.b16 %v3109, %v3108
      %v3120 = vpack.c.b16 %v3111, %v3110
      %v3131 = vsel %vm275, %v3074, 0
      %3133 = vmatprep.subr.bf16.mxu0 0
      %3134 = vmatpush1.bf16.msra.mxu0 %v3119
      %3135 = vmatprep.subr.bf16.mxu0 0
      %3136 = vmatpush1.bf16.msra.mxu0 %v3118
      %3137 = vmatprep.subr.bf16.mxu0 0
      %3138 = vmatpush1.bf16.msra.mxu0 %v3117
      %3139 = vmatprep.subr.bf16.mxu0 0
      %3140 = vmatpush1.bf16.msra.mxu0 %v3116
      %3141 = vmatprep.subr.bf16.mxu0 0
      %3142 = vmatpush1.bf16.msra.mxu0 %v3115
      %3143 = vmatprep.subr.bf16.mxu0 0
      %3144 = vmatpush1.bf16.msra.mxu0 %v3114
      %3145 = vmatprep.subr.bf16.mxu0 0
      %3146 = vmatpush1.bf16.msra.mxu0 %v3113
      %3147 = vmatprep.subr.bf16.mxu0 0
      %3148 = vmatpush1.bf16.msra.mxu0 %v3112
      %3149 = vmatprep.subr.bf16.mxu0 0
      %3150 = vmatpush2.bf16.msra.mxu0 0
      %3151 = vmatprep.subr.bf16.mxu0 0
      %3152 = vmatpush2.bf16.msra.mxu0 0
      %3153 = vmatprep.subr.bf16.mxu0 0
      %3154 = vmatpush2.bf16.msra.mxu0 0
      %3155 = vmatprep.subr.bf16.mxu0 0
      %3156 = vmatpush2.bf16.msra.mxu0 0
      %3157 = vmatprep.subr.bf16.mxu0 0
      %3158 = vmatpush2.bf16.msra.mxu0 0
      %3159 = vmatprep.subr.bf16.mxu0 0
      %3160 = vmatpush2.bf16.msra.mxu0 0
      %3161 = vmatprep.subr.bf16.mxu0 0
      %3162 = vmatpush2.bf16.msra.mxu0 0
      %3163 = vmatprep.subr.bf16.mxu0 0
      %3164 = vmatpush2.bf16.msra.mxu0 %v3120
      %3165 = vmatprep.mubr.bf16.mxu0 %v3131
      %3166 = vmatmul.mubr.bf16.gmra.mxu0 %v3073
      %v3167 = vpop.f32.mrf.mxu0
      %v3168 = vadd.f32 0.0, %v3167
      %v3169 = vpop.f32.mrf.mxu0
      %v3170 = vpop.f32.mrf.mxu0
      %v3171 = vpop.f32.mrf.mxu0
      %3172 = vdwg.mxu0
      %v3173 = vadd.f32 %v3050, %v3168
      %v3174 = vld [vmem:[%s678] sm:$0xff]
      %s3175 = sadd.s32 %s168, 8
      %s3176 = smul.u32 %s3175, 18
      %s3177 = smul.addr %s3176, 4
      %s3178 = scalar_lea.vmem %s156, %s3177
      %v3179 = vld [vmem:[%s3178] sm:$0xf]
      %v3180 = vld [vmem:[%s3178 + $0x4] sm:$0xf]
      %v3181 = vld [vmem:[%s3178 + $0x8] sm:$0xf]
      %v3182 = vld [vmem:[%s3178 + $0xc] sm:$0xf]
      %v3183 = vld [vmem:[%s3178 + $0x10] sm:$0xf]
      %v3184 = vld [vmem:[%s3178 + $0x14] sm:$0xf]
      %v3185 = vld [vmem:[%s3178 + $0x18] sm:$0xf]
      %v3186 = vld [vmem:[%s3178 + $0x1c] sm:$0xf]
      %v3187 = vld [vmem:[%s3178 + $0x20] sm:$0xf]
      %v3188 = vld [vmem:[%s3178 + $0x24] sm:$0xf]
      %v3189 = vld [vmem:[%s3178 + $0x28] sm:$0xf]
      %v3190 = vld [vmem:[%s3178 + $0x2c] sm:$0xf]
      %v3191 = vld [vmem:[%s3178 + $0x30] sm:$0xf]
      %v3192 = vld [vmem:[%s3178 + $0x34] sm:$0xf]
      %v3193 = vld [vmem:[%s3178 + $0x38] sm:$0xf]
      %v3194 = vld [vmem:[%s3178 + $0x3c] sm:$0xf]
      %v3195 = vld [vmem:[%s3178 + $0x40] sm:$0xf]
      %v3196 = vld [vmem:[%s3178 + $0x44] sm:$0xf]
      %v3198 = vunpack.c.l.b16 %v3174
      %v3199 = vunpack.c.h.b16 %v3174
      %v3200 = vpack.c.b16 %v3198, %v3198
      %v3201 = vpack.c.b16 %v3199, %v3199
      %v3221 = vunpack.c.l.b16 %v3179
      %v3222 = vunpack.c.l.b16 %v3180
      %v3223 = vunpack.c.l.b16 %v3181
      %v3224 = vunpack.c.l.b16 %v3182
      %v3225 = vunpack.c.l.b16 %v3183
      %v3226 = vunpack.c.l.b16 %v3184
      %v3227 = vunpack.c.l.b16 %v3185
      %v3228 = vunpack.c.l.b16 %v3186
      %v3229 = vunpack.c.l.b16 %v3187
      %v3230 = vunpack.c.l.b16 %v3188
      %v3231 = vunpack.c.l.b16 %v3189
      %v3232 = vunpack.c.l.b16 %v3190
      %v3233 = vunpack.c.l.b16 %v3191
      %v3234 = vunpack.c.l.b16 %v3192
      %v3235 = vunpack.c.l.b16 %v3193
      %v3236 = vunpack.c.l.b16 %v3194
      %v3237 = vunpack.c.l.b16 %v3195
      %v3238 = vunpack.c.l.b16 %v3196
      %v3239 = vpack.c.b16 %v3222, %v3221
      %v3240 = vpack.c.b16 %v3224, %v3223
      %v3241 = vpack.c.b16 %v3226, %v3225
      %v3242 = vpack.c.b16 %v3228, %v3227
      %v3243 = vpack.c.b16 %v3230, %v3229
      %v3244 = vpack.c.b16 %v3232, %v3231
      %v3245 = vpack.c.b16 %v3234, %v3233
      %v3246 = vpack.c.b16 %v3236, %v3235
      %v3247 = vpack.c.b16 %v3238, %v3237
      %v3258 = vsel %vm275, %v3201, 0
      %3260 = vmatprep.subr.bf16.mxu0 0
      %3261 = vmatpush1.bf16.msra.mxu0 %v3246
      %3262 = vmatprep.subr.bf16.mxu0 0
      %3263 = vmatpush1.bf16.msra.mxu0 %v3245
      %3264 = vmatprep.subr.bf16.mxu0 0
      %3265 = vmatpush1.bf16.msra.mxu0 %v3244
      %3266 = vmatprep.subr.bf16.mxu0 0
      %3267 = vmatpush1.bf16.msra.mxu0 %v3243
      %3268 = vmatprep.subr.bf16.mxu0 0
      %3269 = vmatpush1.bf16.msra.mxu0 %v3242
      %3270 = vmatprep.subr.bf16.mxu0 0
      %3271 = vmatpush1.bf16.msra.mxu0 %v3241
      %3272 = vmatprep.subr.bf16.mxu0 0
      %3273 = vmatpush1.bf16.msra.mxu0 %v3240
      %3274 = vmatprep.subr.bf16.mxu0 0
      %3275 = vmatpush1.bf16.msra.mxu0 %v3239
      %3276 = vmatprep.subr.bf16.mxu0 0
      %3277 = vmatpush2.bf16.msra.mxu0 0
      %3278 = vmatprep.subr.bf16.mxu0 0
      %3279 = vmatpush2.bf16.msra.mxu0 0
      %3280 = vmatprep.subr.bf16.mxu0 0
      %3281 = vmatpush2.bf16.msra.mxu0 0
      %3282 = vmatprep.subr.bf16.mxu0 0
      %3283 = vmatpush2.bf16.msra.mxu0 0
      %3284 = vmatprep.subr.bf16.mxu0 0
      %3285 = vmatpush2.bf16.msra.mxu0 0
      %3286 = vmatprep.subr.bf16.mxu0 0
      %3287 = vmatpush2.bf16.msra.mxu0 0
      %3288 = vmatprep.subr.bf16.mxu0 0
      %3289 = vmatpush2.bf16.msra.mxu0 0
      %3290 = vmatprep.subr.bf16.mxu0 0
      %3291 = vmatpush2.bf16.msra.mxu0 %v3247
      %3292 = vmatprep.mubr.bf16.mxu0 %v3258
      %3293 = vmatmul.mubr.bf16.gmra.mxu0 %v3200
      %v3294 = vpop.f32.mrf.mxu0
      %v3295 = vadd.f32 0.0, %v3294
      %v3296 = vpop.f32.mrf.mxu0
      %v3297 = vpop.f32.mrf.mxu0
      %v3298 = vpop.f32.mrf.mxu0
      %3299 = vdwg.mxu0
      %v3300 = vadd.f32 %v3173, %v3295
      %v3301 = vadd.f32 %v3300, 3.0
      %v3302 = vmax.f32 %v3301, 0.0
      %v3303 = vmin.f32 %v3302, 6.0
      %v3304 = vmul.f32 %v3300, %v3303
      %v3305 = vmul.f32 %v3304, 0.16666667
      %s3306 = scalar_lea.vmem %s165, 32
      %3307 = vst [vmem:[%s3306] sm:$0xff] %v3305
      %v3308 = vld [vmem:[%s1] sm:$0xff]
      %v3309 = vld [vmem:[%s1306] sm:$0xf]
      %v3310 = vld [vmem:[%s1306 + $0x4] sm:$0xf]
      %v3311 = vld [vmem:[%s1306 + $0x8] sm:$0xf]
      %v3312 = vld [vmem:[%s1306 + $0xc] sm:$0xf]
      %v3313 = vld [vmem:[%s1306 + $0x10] sm:$0xf]
      %v3314 = vld [vmem:[%s1306 + $0x14] sm:$0xf]
      %v3315 = vld [vmem:[%s1306 + $0x18] sm:$0xf]
      %v3316 = vld [vmem:[%s1306 + $0x1c] sm:$0xf]
      %v3317 = vld [vmem:[%s1306 + $0x20] sm:$0xf]
      %v3318 = vld [vmem:[%s1306 + $0x24] sm:$0xf]
      %v3319 = vld [vmem:[%s1306 + $0x28] sm:$0xf]
      %v3320 = vld [vmem:[%s1306 + $0x2c] sm:$0xf]
      %v3321 = vld [vmem:[%s1306 + $0x30] sm:$0xf]
      %v3322 = vld [vmem:[%s1306 + $0x34] sm:$0xf]
      %v3323 = vld [vmem:[%s1306 + $0x38] sm:$0xf]
      %v3324 = vld [vmem:[%s1306 + $0x3c] sm:$0xf]
      %v3325 = vld [vmem:[%s1306 + $0x40] sm:$0xf]
      %v3326 = vld [vmem:[%s1306 + $0x44] sm:$0xf]
      %v3327 = vld [vmem:[%s191] sm:$0xff]
      %v3328 = vld [vmem:[%s1930] sm:$0xf]
      %v3329 = vld [vmem:[%s1930 + $0x4] sm:$0xf]
      %v3330 = vld [vmem:[%s1930 + $0x8] sm:$0xf]
      %v3331 = vld [vmem:[%s1930 + $0xc] sm:$0xf]
      %v3332 = vld [vmem:[%s1930 + $0x10] sm:$0xf]
      %v3333 = vld [vmem:[%s1930 + $0x14] sm:$0xf]
      %v3334 = vld [vmem:[%s1930 + $0x18] sm:$0xf]
      %v3335 = vld [vmem:[%s1930 + $0x1c] sm:$0xf]
      %v3336 = vld [vmem:[%s1930 + $0x20] sm:$0xf]
      %v3337 = vld [vmem:[%s1930 + $0x24] sm:$0xf]
      %v3338 = vld [vmem:[%s1930 + $0x28] sm:$0xf]
      %v3339 = vld [vmem:[%s1930 + $0x2c] sm:$0xf]
      %v3340 = vld [vmem:[%s1930 + $0x30] sm:$0xf]
      %v3341 = vld [vmem:[%s1930 + $0x34] sm:$0xf]
      %v3342 = vld [vmem:[%s1930 + $0x38] sm:$0xf]
      %v3343 = vld [vmem:[%s1930 + $0x3c] sm:$0xf]
      %v3344 = vld [vmem:[%s1930 + $0x40] sm:$0xf]
      %v3345 = vld [vmem:[%s1930 + $0x44] sm:$0xf]
      %v3347 = vunpack.c.l.b16 %v3327
      %v3348 = vunpack.c.h.b16 %v3327
      %v3349 = vpack.c.b16 %v3347, %v3347
      %v3350 = vpack.c.b16 %v3348, %v3348
      %v3370 = vunpack.c.l.b16 %v3328
      %v3371 = vunpack.c.l.b16 %v3329
      %v3372 = vunpack.c.l.b16 %v3330
      %v3373 = vunpack.c.l.b16 %v3331
      %v3374 = vunpack.c.l.b16 %v3332
      %v3375 = vunpack.c.l.b16 %v3333
      %v3376 = vunpack.c.l.b16 %v3334
      %v3377 = vunpack.c.l.b16 %v3335
      %v3378 = vunpack.c.l.b16 %v3336
      %v3379 = vunpack.c.l.b16 %v3337
      %v3380 = vunpack.c.l.b16 %v3338
      %v3381 = vunpack.c.l.b16 %v3339
      %v3382 = vunpack.c.l.b16 %v3340
      %v3383 = vunpack.c.l.b16 %v3341
      %v3384 = vunpack.c.l.b16 %v3342
      %v3385 = vunpack.c.l.b16 %v3343
      %v3386 = vunpack.c.l.b16 %v3344
      %v3387 = vunpack.c.l.b16 %v3345
      %v3388 = vpack.c.b16 %v3371, %v3370
      %v3389 = vpack.c.b16 %v3373, %v3372
      %v3390 = vpack.c.b16 %v3375, %v3374
      %v3391 = vpack.c.b16 %v3377, %v3376
      %v3392 = vpack.c.b16 %v3379, %v3378
      %v3393 = vpack.c.b16 %v3381, %v3380
      %v3394 = vpack.c.b16 %v3383, %v3382
      %v3395 = vpack.c.b16 %v3385, %v3384
      %v3396 = vpack.c.b16 %v3387, %v3386
      %v3407 = vsel %vm275, %v3350, 0
      %3409 = vmatprep.subr.bf16.mxu0 0
      %3410 = vmatpush1.bf16.msra.mxu0 %v3395
      %3411 = vmatprep.subr.bf16.mxu0 0
      %3412 = vmatpush1.bf16.msra.mxu0 %v3394
      %3413 = vmatprep.subr.bf16.mxu0 0
      %3414 = vmatpush1.bf16.msra.mxu0 %v3393
      %3415 = vmatprep.subr.bf16.mxu0 0
      %3416 = vmatpush1.bf16.msra.mxu0 %v3392
      %3417 = vmatprep.subr.bf16.mxu0 0
      %3418 = vmatpush1.bf16.msra.mxu0 %v3391
      %3419 = vmatprep.subr.bf16.mxu0 0
      %3420 = vmatpush1.bf16.msra.mxu0 %v3390
      %3421 = vmatprep.subr.bf16.mxu0 0
      %3422 = vmatpush1.bf16.msra.mxu0 %v3389
      %3423 = vmatprep.subr.bf16.mxu0 0
      %3424 = vmatpush1.bf16.msra.mxu0 %v3388
      %3425 = vmatprep.subr.bf16.mxu0 0
      %3426 = vmatpush2.bf16.msra.mxu0 0
      %3427 = vmatprep.subr.bf16.mxu0 0
      %3428 = vmatpush2.bf16.msra.mxu0 0
      %3429 = vmatprep.subr.bf16.mxu0 0
      %3430 = vmatpush2.bf16.msra.mxu0 0
      %3431 = vmatprep.subr.bf16.mxu0 0
      %3432 = vmatpush2.bf16.msra.mxu0 0
      %3433 = vmatprep.subr.bf16.mxu0 0
      %3434 = vmatpush2.bf16.msra.mxu0 0
      %3435 = vmatprep.subr.bf16.mxu0 0
      %3436 = vmatpush2.bf16.msra.mxu0 0
      %3437 = vmatprep.subr.bf16.mxu0 0
      %3438 = vmatpush2.bf16.msra.mxu0 0
      %3439 = vmatprep.subr.bf16.mxu0 0
      %3440 = vmatpush2.bf16.msra.mxu0 %v3396
      %3441 = vmatprep.mubr.bf16.mxu0 %v3407
      %3442 = vmatmul.mubr.bf16.gmra.mxu0 %v3349
      %v3443 = vpop.f32.mrf.mxu0
      %v3444 = vadd.f32 0.0, %v3443
      %v3445 = vpop.f32.mrf.mxu0
      %v3446 = vpop.f32.mrf.mxu0
      %v3447 = vpop.f32.mrf.mxu0
      %3448 = vdwg.mxu0
      %v3450 = vunpack.c.l.b16 %v3308
      %v3451 = vunpack.c.h.b16 %v3308
      %v3452 = vpack.c.b16 %v3450, %v3450
      %v3453 = vpack.c.b16 %v3451, %v3451
      %v3473 = vunpack.c.l.b16 %v3309
      %v3474 = vunpack.c.l.b16 %v3310
      %v3475 = vunpack.c.l.b16 %v3311
      %v3476 = vunpack.c.l.b16 %v3312
      %v3477 = vunpack.c.l.b16 %v3313
      %v3478 = vunpack.c.l.b16 %v3314
      %v3479 = vunpack.c.l.b16 %v3315
      %v3480 = vunpack.c.l.b16 %v3316
      %v3481 = vunpack.c.l.b16 %v3317
      %v3482 = vunpack.c.l.b16 %v3318
      %v3483 = vunpack.c.l.b16 %v3319
      %v3484 = vunpack.c.l.b16 %v3320
      %v3485 = vunpack.c.l.b16 %v3321
      %v3486 = vunpack.c.l.b16 %v3322
      %v3487 = vunpack.c.l.b16 %v3323
      %v3488 = vunpack.c.l.b16 %v3324
      %v3489 = vunpack.c.l.b16 %v3325
      %v3490 = vunpack.c.l.b16 %v3326
      %v3491 = vpack.c.b16 %v3474, %v3473
      %v3492 = vpack.c.b16 %v3476, %v3475
      %v3493 = vpack.c.b16 %v3478, %v3477
      %v3494 = vpack.c.b16 %v3480, %v3479
      %v3495 = vpack.c.b16 %v3482, %v3481
      %v3496 = vpack.c.b16 %v3484, %v3483
      %v3497 = vpack.c.b16 %v3486, %v3485
      %v3498 = vpack.c.b16 %v3488, %v3487
      %v3499 = vpack.c.b16 %v3490, %v3489
      %v3510 = vsel %vm275, %v3453, 0
      %3512 = vmatprep.subr.bf16.mxu0 0
      %3513 = vmatpush1.bf16.msra.mxu0 %v3498
      %3514 = vmatprep.subr.bf16.mxu0 0
      %3515 = vmatpush1.bf16.msra.mxu0 %v3497
      %3516 = vmatprep.subr.bf16.mxu0 0
      %3517 = vmatpush1.bf16.msra.mxu0 %v3496
      %3518 = vmatprep.subr.bf16.mxu0 0
      %3519 = vmatpush1.bf16.msra.mxu0 %v3495
      %3520 = vmatprep.subr.bf16.mxu0 0
      %3521 = vmatpush1.bf16.msra.mxu0 %v3494
      %3522 = vmatprep.subr.bf16.mxu0 0
      %3523 = vmatpush1.bf16.msra.mxu0 %v3493
      %3524 = vmatprep.subr.bf16.mxu0 0
      %3525 = vmatpush1.bf16.msra.mxu0 %v3492
      %3526 = vmatprep.subr.bf16.mxu0 0
      %3527 = vmatpush1.bf16.msra.mxu0 %v3491
      %3528 = vmatprep.subr.bf16.mxu0 0
      %3529 = vmatpush2.bf16.msra.mxu0 0
      %3530 = vmatprep.subr.bf16.mxu0 0
      %3531 = vmatpush2.bf16.msra.mxu0 0
      %3532 = vmatprep.subr.bf16.mxu0 0
      %3533 = vmatpush2.bf16.msra.mxu0 0
      %3534 = vmatprep.subr.bf16.mxu0 0
      %3535 = vmatpush2.bf16.msra.mxu0 0
      %3536 = vmatprep.subr.bf16.mxu0 0
      %3537 = vmatpush2.bf16.msra.mxu0 0
      %3538 = vmatprep.subr.bf16.mxu0 0
      %3539 = vmatpush2.bf16.msra.mxu0 0
      %3540 = vmatprep.subr.bf16.mxu0 0
      %3541 = vmatpush2.bf16.msra.mxu0 0
      %3542 = vmatprep.subr.bf16.mxu0 0
      %3543 = vmatpush2.bf16.msra.mxu0 %v3499
      %3544 = vmatprep.mubr.bf16.mxu0 %v3510
      %3545 = vmatmul.mubr.bf16.gmra.mxu0 %v3452
      %v3546 = vpop.f32.mrf.mxu0
      %v3547 = vadd.f32 %v3444, %v3546
      %v3548 = vpop.f32.mrf.mxu0
      %v3549 = vpop.f32.mrf.mxu0
      %v3550 = vpop.f32.mrf.mxu0
      %3551 = vdwg.mxu0
      %v3552 = vld [vmem:[%s422] sm:$0xff]
      %v3553 = vld [vmem:[%s2554] sm:$0xf]
      %v3554 = vld [vmem:[%s2554 + $0x4] sm:$0xf]
      %v3555 = vld [vmem:[%s2554 + $0x8] sm:$0xf]
      %v3556 = vld [vmem:[%s2554 + $0xc] sm:$0xf]
      %v3557 = vld [vmem:[%s2554 + $0x10] sm:$0xf]
      %v3558 = vld [vmem:[%s2554 + $0x14] sm:$0xf]
      %v3559 = vld [vmem:[%s2554 + $0x18] sm:$0xf]
      %v3560 = vld [vmem:[%s2554 + $0x1c] sm:$0xf]
      %v3561 = vld [vmem:[%s2554 + $0x20] sm:$0xf]
      %v3562 = vld [vmem:[%s2554 + $0x24] sm:$0xf]
      %v3563 = vld [vmem:[%s2554 + $0x28] sm:$0xf]
      %v3564 = vld [vmem:[%s2554 + $0x2c] sm:$0xf]
      %v3565 = vld [vmem:[%s2554 + $0x30] sm:$0xf]
      %v3566 = vld [vmem:[%s2554 + $0x34] sm:$0xf]
      %v3567 = vld [vmem:[%s2554 + $0x38] sm:$0xf]
      %v3568 = vld [vmem:[%s2554 + $0x3c] sm:$0xf]
      %v3569 = vld [vmem:[%s2554 + $0x40] sm:$0xf]
      %v3570 = vld [vmem:[%s2554 + $0x44] sm:$0xf]
      %v3572 = vunpack.c.l.b16 %v3552
      %v3573 = vunpack.c.h.b16 %v3552
      %v3574 = vpack.c.b16 %v3572, %v3572
      %v3575 = vpack.c.b16 %v3573, %v3573
      %v3595 = vunpack.c.l.b16 %v3553
      %v3596 = vunpack.c.l.b16 %v3554
      %v3597 = vunpack.c.l.b16 %v3555
      %v3598 = vunpack.c.l.b16 %v3556
      %v3599 = vunpack.c.l.b16 %v3557
      %v3600 = vunpack.c.l.b16 %v3558
      %v3601 = vunpack.c.l.b16 %v3559
      %v3602 = vunpack.c.l.b16 %v3560
      %v3603 = vunpack.c.l.b16 %v3561
      %v3604 = vunpack.c.l.b16 %v3562
      %v3605 = vunpack.c.l.b16 %v3563
      %v3606 = vunpack.c.l.b16 %v3564
      %v3607 = vunpack.c.l.b16 %v3565
      %v3608 = vunpack.c.l.b16 %v3566
      %v3609 = vunpack.c.l.b16 %v3567
      %v3610 = vunpack.c.l.b16 %v3568
      %v3611 = vunpack.c.l.b16 %v3569
      %v3612 = vunpack.c.l.b16 %v3570
      %v3613 = vpack.c.b16 %v3596, %v3595
      %v3614 = vpack.c.b16 %v3598, %v3597
      %v3615 = vpack.c.b16 %v3600, %v3599
      %v3616 = vpack.c.b16 %v3602, %v3601
      %v3617 = vpack.c.b16 %v3604, %v3603
      %v3618 = vpack.c.b16 %v3606, %v3605
      %v3619 = vpack.c.b16 %v3608, %v3607
      %v3620 = vpack.c.b16 %v3610, %v3609
      %v3621 = vpack.c.b16 %v3612, %v3611
      %v3632 = vsel %vm275, %v3575, 0
      %3634 = vmatprep.subr.bf16.mxu0 0
      %3635 = vmatpush1.bf16.msra.mxu0 %v3620
      %3636 = vmatprep.subr.bf16.mxu0 0
      %3637 = vmatpush1.bf16.msra.mxu0 %v3619
      %3638 = vmatprep.subr.bf16.mxu0 0
      %3639 = vmatpush1.bf16.msra.mxu0 %v3618
      %3640 = vmatprep.subr.bf16.mxu0 0
      %3641 = vmatpush1.bf16.msra.mxu0 %v3617
      %3642 = vmatprep.subr.bf16.mxu0 0
      %3643 = vmatpush1.bf16.msra.mxu0 %v3616
      %3644 = vmatprep.subr.bf16.mxu0 0
      %3645 = vmatpush1.bf16.msra.mxu0 %v3615
      %3646 = vmatprep.subr.bf16.mxu0 0
      %3647 = vmatpush1.bf16.msra.mxu0 %v3614
      %3648 = vmatprep.subr.bf16.mxu0 0
      %3649 = vmatpush1.bf16.msra.mxu0 %v3613
      %3650 = vmatprep.subr.bf16.mxu0 0
      %3651 = vmatpush2.bf16.msra.mxu0 0
      %3652 = vmatprep.subr.bf16.mxu0 0
      %3653 = vmatpush2.bf16.msra.mxu0 0
      %3654 = vmatprep.subr.bf16.mxu0 0
      %3655 = vmatpush2.bf16.msra.mxu0 0
      %3656 = vmatprep.subr.bf16.mxu0 0
      %3657 = vmatpush2.bf16.msra.mxu0 0
      %3658 = vmatprep.subr.bf16.mxu0 0
      %3659 = vmatpush2.bf16.msra.mxu0 0
      %3660 = vmatprep.subr.bf16.mxu0 0
      %3661 = vmatpush2.bf16.msra.mxu0 0
      %3662 = vmatprep.subr.bf16.mxu0 0
      %3663 = vmatpush2.bf16.msra.mxu0 0
      %3664 = vmatprep.subr.bf16.mxu0 0
      %3665 = vmatpush2.bf16.msra.mxu0 %v3621
      %3666 = vmatprep.mubr.bf16.mxu0 %v3632
      %3667 = vmatmul.mubr.bf16.gmra.mxu0 %v3574
      %v3668 = vpop.f32.mrf.mxu0
      %v3669 = vadd.f32 0.0, %v3668
      %v3670 = vpop.f32.mrf.mxu0
      %v3671 = vpop.f32.mrf.mxu0
      %v3672 = vpop.f32.mrf.mxu0
      %3673 = vdwg.mxu0
      %v3674 = vadd.f32 %v3547, %v3669
      %v3675 = vld [vmem:[%s550] sm:$0xff]
      %v3676 = vld [vmem:[%s3178] sm:$0xf]
      %v3677 = vld [vmem:[%s3178 + $0x4] sm:$0xf]
      %v3678 = vld [vmem:[%s3178 + $0x8] sm:$0xf]
      %v3679 = vld [vmem:[%s3178 + $0xc] sm:$0xf]
      %v3680 = vld [vmem:[%s3178 + $0x10] sm:$0xf]
      %v3681 = vld [vmem:[%s3178 + $0x14] sm:$0xf]
      %v3682 = vld [vmem:[%s3178 + $0x18] sm:$0xf]
      %v3683 = vld [vmem:[%s3178 + $0x1c] sm:$0xf]
      %v3684 = vld [vmem:[%s3178 + $0x20] sm:$0xf]
      %v3685 = vld [vmem:[%s3178 + $0x24] sm:$0xf]
      %v3686 = vld [vmem:[%s3178 + $0x28] sm:$0xf]
      %v3687 = vld [vmem:[%s3178 + $0x2c] sm:$0xf]
      %v3688 = vld [vmem:[%s3178 + $0x30] sm:$0xf]
      %v3689 = vld [vmem:[%s3178 + $0x34] sm:$0xf]
      %v3690 = vld [vmem:[%s3178 + $0x38] sm:$0xf]
      %v3691 = vld [vmem:[%s3178 + $0x3c] sm:$0xf]
      %v3692 = vld [vmem:[%s3178 + $0x40] sm:$0xf]
      %v3693 = vld [vmem:[%s3178 + $0x44] sm:$0xf]
      %v3695 = vunpack.c.l.b16 %v3675
      %v3696 = vunpack.c.h.b16 %v3675
      %v3697 = vpack.c.b16 %v3695, %v3695
      %v3698 = vpack.c.b16 %v3696, %v3696
      %v3718 = vunpack.c.l.b16 %v3676
      %v3719 = vunpack.c.l.b16 %v3677
      %v3720 = vunpack.c.l.b16 %v3678
      %v3721 = vunpack.c.l.b16 %v3679
      %v3722 = vunpack.c.l.b16 %v3680
      %v3723 = vunpack.c.l.b16 %v3681
      %v3724 = vunpack.c.l.b16 %v3682
      %v3725 = vunpack.c.l.b16 %v3683
      %v3726 = vunpack.c.l.b16 %v3684
      %v3727 = vunpack.c.l.b16 %v3685
      %v3728 = vunpack.c.l.b16 %v3686
      %v3729 = vunpack.c.l.b16 %v3687
      %v3730 = vunpack.c.l.b16 %v3688
      %v3731 = vunpack.c.l.b16 %v3689
      %v3732 = vunpack.c.l.b16 %v3690
      %v3733 = vunpack.c.l.b16 %v3691
      %v3734 = vunpack.c.l.b16 %v3692
      %v3735 = vunpack.c.l.b16 %v3693
      %v3736 = vpack.c.b16 %v3719, %v3718
      %v3737 = vpack.c.b16 %v3721, %v3720
      %v3738 = vpack.c.b16 %v3723, %v3722
      %v3739 = vpack.c.b16 %v3725, %v3724
      %v3740 = vpack.c.b16 %v3727, %v3726
      %v3741 = vpack.c.b16 %v3729, %v3728
      %v3742 = vpack.c.b16 %v3731, %v3730
      %v3743 = vpack.c.b16 %v3733, %v3732
      %v3744 = vpack.c.b16 %v3735, %v3734
      %v3755 = vsel %vm275, %v3698, 0
      %3757 = vmatprep.subr.bf16.mxu0 0
      %3758 = vmatpush1.bf16.msra.mxu0 %v3743
      %3759 = vmatprep.subr.bf16.mxu0 0
      %3760 = vmatpush1.bf16.msra.mxu0 %v3742
      %3761 = vmatprep.subr.bf16.mxu0 0
      %3762 = vmatpush1.bf16.msra.mxu0 %v3741
      %3763 = vmatprep.subr.bf16.mxu0 0
      %3764 = vmatpush1.bf16.msra.mxu0 %v3740
      %3765 = vmatprep.subr.bf16.mxu0 0
      %3766 = vmatpush1.bf16.msra.mxu0 %v3739
      %3767 = vmatprep.subr.bf16.mxu0 0
      %3768 = vmatpush1.bf16.msra.mxu0 %v3738
      %3769 = vmatprep.subr.bf16.mxu0 0
      %3770 = vmatpush1.bf16.msra.mxu0 %v3737
      %3771 = vmatprep.subr.bf16.mxu0 0
      %3772 = vmatpush1.bf16.msra.mxu0 %v3736
      %3773 = vmatprep.subr.bf16.mxu0 0
      %3774 = vmatpush2.bf16.msra.mxu0 0
      %3775 = vmatprep.subr.bf16.mxu0 0
      %3776 = vmatpush2.bf16.msra.mxu0 0
      %3777 = vmatprep.subr.bf16.mxu0 0
      %3778 = vmatpush2.bf16.msra.mxu0 0
      %3779 = vmatprep.subr.bf16.mxu0 0
      %3780 = vmatpush2.bf16.msra.mxu0 0
      %3781 = vmatprep.subr.bf16.mxu0 0
      %3782 = vmatpush2.bf16.msra.mxu0 0
      %3783 = vmatprep.subr.bf16.mxu0 0
      %3784 = vmatpush2.bf16.msra.mxu0 0
      %3785 = vmatprep.subr.bf16.mxu0 0
      %3786 = vmatpush2.bf16.msra.mxu0 0
      %3787 = vmatprep.subr.bf16.mxu0 0
      %3788 = vmatpush2.bf16.msra.mxu0 %v3744
      %3789 = vmatprep.mubr.bf16.mxu0 %v3755
      %3790 = vmatmul.mubr.bf16.gmra.mxu0 %v3697
      %v3791 = vpop.f32.mrf.mxu0
      %v3792 = vadd.f32 0.0, %v3791
      %v3793 = vpop.f32.mrf.mxu0
      %v3794 = vpop.f32.mrf.mxu0
      %v3795 = vpop.f32.mrf.mxu0
      %3796 = vdwg.mxu0
      %v3797 = vadd.f32 %v3674, %v3792
      %v3798 = vld [vmem:[%s678] sm:$0xff]
      %s3799 = sadd.s32 %s168, 9
      %s3800 = smul.u32 %s3799, 18
      %s3801 = smul.addr %s3800, 4
      %s3802 = scalar_lea.vmem %s156, %s3801
      %v3803 = vld [vmem:[%s3802] sm:$0xf]
      %v3804 = vld [vmem:[%s3802 + $0x4] sm:$0xf]
      %v3805 = vld [vmem:[%s3802 + $0x8] sm:$0xf]
      %v3806 = vld [vmem:[%s3802 + $0xc] sm:$0xf]
      %v3807 = vld [vmem:[%s3802 + $0x10] sm:$0xf]
      %v3808 = vld [vmem:[%s3802 + $0x14] sm:$0xf]
      %v3809 = vld [vmem:[%s3802 + $0x18] sm:$0xf]
      %v3810 = vld [vmem:[%s3802 + $0x1c] sm:$0xf]
      %v3811 = vld [vmem:[%s3802 + $0x20] sm:$0xf]
      %v3812 = vld [vmem:[%s3802 + $0x24] sm:$0xf]
      %v3813 = vld [vmem:[%s3802 + $0x28] sm:$0xf]
      %v3814 = vld [vmem:[%s3802 + $0x2c] sm:$0xf]
      %v3815 = vld [vmem:[%s3802 + $0x30] sm:$0xf]
      %v3816 = vld [vmem:[%s3802 + $0x34] sm:$0xf]
      %v3817 = vld [vmem:[%s3802 + $0x38] sm:$0xf]
      %v3818 = vld [vmem:[%s3802 + $0x3c] sm:$0xf]
      %v3819 = vld [vmem:[%s3802 + $0x40] sm:$0xf]
      %v3820 = vld [vmem:[%s3802 + $0x44] sm:$0xf]
      %v3822 = vunpack.c.l.b16 %v3798
      %v3823 = vunpack.c.h.b16 %v3798
      %v3824 = vpack.c.b16 %v3822, %v3822
      %v3825 = vpack.c.b16 %v3823, %v3823
      %v3845 = vunpack.c.l.b16 %v3803
      %v3846 = vunpack.c.l.b16 %v3804
      %v3847 = vunpack.c.l.b16 %v3805
      %v3848 = vunpack.c.l.b16 %v3806
      %v3849 = vunpack.c.l.b16 %v3807
      %v3850 = vunpack.c.l.b16 %v3808
      %v3851 = vunpack.c.l.b16 %v3809
      %v3852 = vunpack.c.l.b16 %v3810
      %v3853 = vunpack.c.l.b16 %v3811
      %v3854 = vunpack.c.l.b16 %v3812
      %v3855 = vunpack.c.l.b16 %v3813
      %v3856 = vunpack.c.l.b16 %v3814
      %v3857 = vunpack.c.l.b16 %v3815
      %v3858 = vunpack.c.l.b16 %v3816
      %v3859 = vunpack.c.l.b16 %v3817
      %v3860 = vunpack.c.l.b16 %v3818
      %v3861 = vunpack.c.l.b16 %v3819
      %v3862 = vunpack.c.l.b16 %v3820
      %v3863 = vpack.c.b16 %v3846, %v3845
      %v3864 = vpack.c.b16 %v3848, %v3847
      %v3865 = vpack.c.b16 %v3850, %v3849
      %v3866 = vpack.c.b16 %v3852, %v3851
      %v3867 = vpack.c.b16 %v3854, %v3853
      %v3868 = vpack.c.b16 %v3856, %v3855
      %v3869 = vpack.c.b16 %v3858, %v3857
      %v3870 = vpack.c.b16 %v3860, %v3859
      %v3871 = vpack.c.b16 %v3862, %v3861
      %v3882 = vsel %vm275, %v3825, 0
      %3884 = vmatprep.subr.bf16.mxu0 0
      %3885 = vmatpush1.bf16.msra.mxu0 %v3870
      %3886 = vmatprep.subr.bf16.mxu0 0
      %3887 = vmatpush1.bf16.msra.mxu0 %v3869
      %3888 = vmatprep.subr.bf16.mxu0 0
      %3889 = vmatpush1.bf16.msra.mxu0 %v3868
      %3890 = vmatprep.subr.bf16.mxu0 0
      %3891 = vmatpush1.bf16.msra.mxu0 %v3867
      %3892 = vmatprep.subr.bf16.mxu0 0
      %3893 = vmatpush1.bf16.msra.mxu0 %v3866
      %3894 = vmatprep.subr.bf16.mxu0 0
      %3895 = vmatpush1.bf16.msra.mxu0 %v3865
      %3896 = vmatprep.subr.bf16.mxu0 0
      %3897 = vmatpush1.bf16.msra.mxu0 %v3864
      %3898 = vmatprep.subr.bf16.mxu0 0
      %3899 = vmatpush1.bf16.msra.mxu0 %v3863
      %3900 = vmatprep.subr.bf16.mxu0 0
      %3901 = vmatpush2.bf16.msra.mxu0 0
      %3902 = vmatprep.subr.bf16.mxu0 0
      %3903 = vmatpush2.bf16.msra.mxu0 0
      %3904 = vmatprep.subr.bf16.mxu0 0
      %3905 = vmatpush2.bf16.msra.mxu0 0
      %3906 = vmatprep.subr.bf16.mxu0 0
      %3907 = vmatpush2.bf16.msra.mxu0 0
      %3908 = vmatprep.subr.bf16.mxu0 0
      %3909 = vmatpush2.bf16.msra.mxu0 0
      %3910 = vmatprep.subr.bf16.mxu0 0
      %3911 = vmatpush2.bf16.msra.mxu0 0
      %3912 = vmatprep.subr.bf16.mxu0 0
      %3913 = vmatpush2.bf16.msra.mxu0 0
      %3914 = vmatprep.subr.bf16.mxu0 0
      %3915 = vmatpush2.bf16.msra.mxu0 %v3871
      %3916 = vmatprep.mubr.bf16.mxu0 %v3882
      %3917 = vmatmul.mubr.bf16.gmra.mxu0 %v3824
      %v3918 = vpop.f32.mrf.mxu0
      %v3919 = vadd.f32 0.0, %v3918
      %v3920 = vpop.f32.mrf.mxu0
      %v3921 = vpop.f32.mrf.mxu0
      %v3922 = vpop.f32.mrf.mxu0
      %3923 = vdwg.mxu0
      %v3924 = vadd.f32 %v3797, %v3919
      %v3925 = vadd.f32 %v3924, 3.0
      %v3926 = vmax.f32 %v3925, 0.0
      %v3927 = vmin.f32 %v3926, 6.0
      %v3928 = vmul.f32 %v3924, %v3927
      %v3929 = vmul.f32 %v3928, 0.16666667
      %s3930 = scalar_lea.vmem %s165, 40
      %3931 = vst [vmem:[%s3930] sm:$0xff] %v3929
      %s3932 = smul.u32 6, %s18
      %p3933 = scmp.lt.s32.totalorder %s17, 0
      %s3934 = scalar_select %p3933, %s17, 0
      %p3935 = scmp.lt.s32.totalorder %s3932, 11
      %s3936 = scalar_select %p3935, %s3932, 11
      %s3937 = smul.addr %s3934, 12
      %s3938 = sadd.s32 %s3936, %s3937
      %s3939 = smul.addr %s3938, 8
      %s3940 = scalar_lea.vmem %s2, %s3939
      // Predicated region
      $region29: #{model_forward.1} parent=27 // pred_check
        %p3941 = pneg %p92
      $region30: #{model_forward.1} parent=27 // pred_check_branch
        %3943 = sbr.rel (%p3941) target = $region32
      $region31: #{model_forward.1} parent=27 // pred_region
        %s3944 = smul.u32 6, %s18
      $region32: #{model_forward.1} parent=27 // pred_fallthru
        _
    $region28: #{model_forward.1} parent=5 // pred_fallthru
      _
    %p3945 = scmp.le.s32.totalorder 2, %s8
    // Predicated region
    $region33: #{model_forward.1} parent=5 // pred_check
      %p3946 = pneg %p3945
    $region34: #{model_forward.1} parent=5 // pred_check_branch
      %3948 = sbr.rel (%p3946) target = $region36
    $region35: #{model_forward.1} parent=5 // pred_region
      %s3949 = ssub.s32 %s8, 2
      // Predicated region
      $region37: #{model_forward.1} parent=35 // pred_check
        %p3950 = pneg %p98
      $region38: #{model_forward.1} parent=35 // pred_check_branch
        %3952 = sbr.rel (%p3950) target = $region40
      $region39: #{model_forward.1} parent=35 // pred_region
        %s3953 = smul.u32 6, %s20
        %p3954 = scmp.lt.s32.totalorder %s19, 0
        %s3955 = scalar_select %p3954, %s19, 0
        %p3956 = scmp.lt.s32.totalorder %s3953, 11
        %s3957 = scalar_select %p3956, %s3953, 11
        %s3958 = smul.addr %s3955, 12
        %s3959 = sadd.s32 %s3957, %s3958
        %s3960 = smul.addr %s3959, 8
        %s3961 = scalar_lea.vmem %s2, %s3960
      $region40: #{model_forward.1} parent=35 // pred_fallthru
        _
    $region36: #{model_forward.1} parent=5 // pred_fallthru
      _
  $region6: #{model_forward.1} parent=0 // loop_footer
    %s12 = sadd.s32 1, %s8
  $region7: #{model_forward.1} parent=0 // loop_footer_branch
    %7 = sbr.rel target = $region3
  $region8: #{model_forward.1} parent=0 // loop_exit
    _

</llo_original>
